<compile_context>
chip_gen: v5e
topology: v5e:2x2
jax: 0.10.0
libtpu: 0.0.40
codegen_flags: <defaults>
</compile_context>

<pallas_src>
import functools

import jax
import jax.numpy as jnp
from jax import lax
from jax.experimental import pallas as pl
from jax.experimental.pallas import tpu as pltpu


def _bottleneck_kernel(H, W, TR,
                       x_ref, w1_ref, s1_ref, b1_ref,
                       w2_ref, s2_ref, b2_ref,
                       w3_ref, s3_ref, b3_ref,
                       o_w_ref, o_ws_ref, o_c_ref, o_cs_ref,
                       pad_ref):
    f32, bf16 = jnp.float32, jnp.bfloat16
    width = w1_ref.shape[1]
    cout = w3_ref.shape[1]
    hw_t = TR * W                          # interior pixels in this row tile
    t = pl.program_id(1)
    n_tiles = pl.num_programs(1)

    row0 = t * hw_t                        # flat offset of first interior pixel
    if hw_t % 8 == 0:
        row0 = pl.multiple_of(row0, 8)

    def conv1_bn1(xrows):                  # rows of x -> bn1 output (rows, width) f32
        v = jnp.dot(xrows.astype(bf16), w1_ref[...], preferred_element_type=f32)
        return v, v * s1_ref[...] + b1_ref[...]

    # ---- conv1 (1x1, bias=False) -> bn1 -> sn1 on the interior rows --------
    x_int = x_ref[pl.ds(row0, hw_t), :]                 # (hw_t, Cin) f32, identity path
    x01, x02 = conv1_bn1(x_int)
    # TODO(synk): spiking_neuron modeled as a single-step IFNode (v0 = 0,
    # v_threshold = 1.0): spike = Heaviside(v - 1.0); no reset/decay/state.
    x03b = (x02 >= 1.0).astype(bf16)                    # spikes {0,1}: bf16 lossless
    o_w_ref[:, 0:width] = x01
    o_w_ref[:, width:2 * width] = x02
    o_ws_ref[:, 0:width] = x03b

    # ---- conv2 halo spike rows (1 row above / below the tile), recomputed ---
    top_off = jnp.maximum(row0 - W, 0)
    bot_off = jnp.minimum(row0 + hw_t, (H - 1) * W)
    _, v_top = conv1_bn1(x_ref[pl.ds(top_off, W), :])
    _, v_bot = conv1_bn1(x_ref[pl.ds(bot_off, W), :])
    s_top = (v_top >= 1.0).astype(bf16) * (t > 0).astype(bf16)          # zero pad at top edge
    s_bot = (v_bot >= 1.0).astype(bf16) * (t < n_tiles - 1).astype(bf16)  # zero pad at bottom

    # ---- conv2 (3x3, stride=1, pad=1, groups=1) -> bn2 -> sn2 ---------------
    # For each horizontal shift dx the (edge-masked, bf16) spike rows plus the
    # two halo rows are written to a double-buffered padded VMEM scratch; the
    # three vertical taps are then static sublane-offset views (halo-safe).
    w_idx_i = lax.broadcasted_iota(jnp.int32, (hw_t, 1), 0) % W
    w_idx_r = lax.broadcasted_iota(jnp.int32, (W, 1), 0) % W

    def hshift(v, w_idx, dx):              # value of the (w+dx) neighbour, zero off-row
        if dx == 0:
            return v
        if dx < 0:                         # left neighbour (h, w-1)
            return jnp.where(w_idx >= 1, jnp.roll(v, 1, axis=0), 0.0).astype(bf16)
        return jnp.where(w_idx <= W - 2, jnp.roll(v, -1, axis=0), 0.0).astype(bf16)

    fuse_taps = (width % 128 == 0)         # K=3*width lane-concat path (free only then)
    acc = jnp.zeros((hw_t, width), f32)
    for kx in range(3):
        dx = kx - 1
        buf = kx & 1                       # double-buffered scratch: overlap store w/ matmuls
        pad_ref[buf, 0:W, :] = hshift(s_top, w_idx_r, dx)
        pad_ref[buf, W:W + hw_t, :] = hshift(x03b, w_idx_i, dx)
        pad_ref[buf, (TR + 1) * W:(TR + 2) * W, :] = hshift(s_bot, w_idx_r, dx)
        if fuse_taps:
            taps = jnp.concatenate(
                [pad_ref[buf, ky * W:ky * W + hw_t, :] for ky in range(3)], axis=1)
            wk = jnp.concatenate([w2_ref[ky * 3 + kx] for ky in range(3)], axis=0)
            acc = acc + jnp.dot(taps, wk, preferred_element_type=f32)
        else:
            for ky in range(3):
                patch = pad_ref[buf, ky * W:ky * W + hw_t, :]
                acc = acc + jnp.dot(patch, w2_ref[ky * 3 + kx],
                                    preferred_element_type=f32)

    x04 = acc
    x05 = x04 * s2_ref[...] + b2_ref[...]
    x06b = (x05 >= 1.0).astype(bf16)
    o_w_ref[:, 2 * width:3 * width] = x04
    o_w_ref[:, 3 * width:4 * width] = x05
    o_ws_ref[:, width:2 * width] = x06b

    # ---- conv3 (1x1) -> bn3 -> residual add -> sn3 --------------------------
    x07 = jnp.dot(x06b, w3_ref[...], preferred_element_type=f32)
    x08 = x07 * s3_ref[...] + b3_ref[...]
    x09 = x_int + x08                      # downsample is None -> identity
    x10b = (x09 >= 1.0).astype(bf16)
    o_c_ref[:, 0:cout] = x07
    o_c_ref[:, cout:2 * cout] = x08
    o_c_ref[:, 2 * cout:3 * cout] = x09
    o_cs_ref[:, 0:cout] = x10b


def bottleneck_forward(x_nhwc, params, tile_rows=None):
    """Fused Bottleneck forward.  x is channels-last (N,H,W,Cin); returns the
    10 per-stage features [x01..x10], each channels-last (N,H,W,C) f32."""
    (w1, s1, b1, w2, s2, b2, w3, s3, b3) = params   # kernel-layout, bf16 conv weights
    N, H, W, Cin = x_nhwc.shape
    width = int(w1.shape[1])
    cout = int(w3.shape[1])
    if Cin != cout:
        raise ValueError("downsample=None requires inplanes == planes * expansion")
    hw = H * W

    if tile_rows is None:
        # Largest divisor of H with a sublane-aligned tile and <= ~4K pixels:
        # bounds per-step VMEM (v7x) while keeping DMAs large (v5e/v6e).
        tile_rows = H
        for d in range(1, H + 1):
            if H % d == 0 and (d * W) % 8 == 0 and d * W <= 4096:
                tile_rows = d
    if H % tile_rows != 0:
        raise ValueError("tile_rows must divide H")
    if tile_rows != H and (tile_rows * W) % 8 != 0:
        raise ValueError("tile_rows * W must be a multiple of 8")
    T = H // tile_rows
    hw_t = tile_rows * W

    x3 = x_nhwc.reshape(N, hw, Cin)                 # free reshape, no transpose

    out_shape = (
        jax.ShapeDtypeStruct((N, hw, 4 * width), jnp.float32),   # x01|x02|x04|x05
        jax.ShapeDtypeStruct((N, hw, 2 * width), jnp.bfloat16),  # x03|x06 (spikes)
        jax.ShapeDtypeStruct((N, hw, 3 * cout), jnp.float32),    # x07|x08|x09
        jax.ShapeDtypeStruct((N, hw, cout), jnp.bfloat16),       # x10 (spikes)
    )
    out_specs = (
        pl.BlockSpec((None, hw_t, 4 * width), lambda n, t: (n, t, 0)),
        pl.BlockSpec((None, hw_t, 2 * width), lambda n, t: (n, t, 0)),
        pl.BlockSpec((None, hw_t, 3 * cout), lambda n, t: (n, t, 0)),
        pl.BlockSpec((None, hw_t, cout), lambda n, t: (n, t, 0)),
    )
    in_specs = [
        pl.BlockSpec((None, hw, Cin), lambda n, t: (n, 0, 0)),    # x: whole image, resident over t
        pl.BlockSpec((Cin, width), lambda n, t: (0, 0)),          # w1
        pl.BlockSpec((1, width), lambda n, t: (0, 0)),            # bn1 scale
        pl.BlockSpec((1, width), lambda n, t: (0, 0)),            # bn1 shift
        pl.BlockSpec((9, width, width), lambda n, t: (0, 0, 0)),  # w2 (9 taps)
        pl.BlockSpec((1, width), lambda n, t: (0, 0)),            # bn2 scale
        pl.BlockSpec((1, width), lambda n, t: (0, 0)),            # bn2 shift
        pl.BlockSpec((width, cout), lambda n, t: (0, 0)),         # w3
        pl.BlockSpec((1, cout), lambda n, t: (0, 0)),             # bn3 scale
        pl.BlockSpec((1, cout), lambda n, t: (0, 0)),             # bn3 shift
    ]

    # Generation-aware VMEM budget (v7x: 64 MiB physical; v5e/v6e: 128 MiB).
    vmem_cap = 128 * 1024 * 1024
    if hasattr(pltpu, "get_tpu_info"):
        try:
            vmem_cap = int(getattr(pltpu.get_tpu_info(), "vmem_capacity_bytes", vmem_cap))
        except Exception:
            pass
    vmem_limit = (32 if vmem_cap <= 64 * 1024 * 1024 else 100) * 1024 * 1024

    flops = 2 * N * hw * (Cin * width + 9 * width * width + width * cout)
    out_bytes = N * hw * (4 * 4 * width + 2 * 2 * width + 4 * 3 * cout + 2 * cout)
    bytes_acc = (x3.size * x3.dtype.itemsize
                 + sum(int(p.size) * p.dtype.itemsize for p in params)
                 + out_bytes)

    o_w, o_ws, o_c, o_cs = pl.pallas_call(
        functools.partial(_bottleneck_kernel, H, W, tile_rows),
        out_shape=out_shape,
        grid=(N, T),
        in_specs=in_specs,
        out_specs=out_specs,
        scratch_shapes=[pltpu.VMEM((2, (tile_rows + 2) * W, width), jnp.bfloat16)],
        compiler_params=pltpu.CompilerParams(
            dimension_semantics=("parallel", "parallel"),
            vmem_limit_bytes=vmem_limit),
        cost_estimate=pl.CostEstimate(flops=int(flops), transcendentals=0,
                                      bytes_accessed=int(bytes_acc)),
    )(x3, w1, s1, b1, w2, s2, b2, w3, s3, b3)

    f32 = jnp.float32
    feats = [
        o_w[..., 0:width],                        # x01
        o_w[..., width:2 * width],                # x02
        o_ws[..., 0:width].astype(f32),           # x03
        o_w[..., 2 * width:3 * width],            # x04
        o_w[..., 3 * width:4 * width],            # x05
        o_ws[..., width:2 * width].astype(f32),   # x06
        o_c[..., 0:cout],                         # x07
        o_c[..., cout:2 * cout],                  # x08
        o_c[..., 2 * cout:3 * cout],              # x09
        o_cs[..., 0:cout].astype(f32),            # x10
    ]
    return [f.reshape(N, H, W, -1) for f in feats]


if __name__ == "__main__":
    key = jax.random.PRNGKey(0)
    k_x, k_p = jax.random.split(key)

    # Small shapes consistent with the module: inplanes == planes * expansion
    # so downsample=None is valid; groups=1, base_width=64 -> width = planes.
    N, inplanes, planes, H, W = 2, 16, 4, 16, 16
    width = planes
    cout = planes * 4

    def bf16_exact(a):        # values exactly representable in bf16 so the
        return a.astype(jnp.bfloat16).astype(jnp.float32)   # MXU check is tight

    x_nhwc = bf16_exact(jax.random.normal(k_x, (N, H, W, inplanes), jnp.float32))

    ks = jax.random.split(k_p, 15)
    w1_oihw = bf16_exact(0.3 * jax.random.normal(ks[0], (width, inplanes, 1, 1), jnp.float32))
    w2_oihw = bf16_exact(0.3 * jax.random.normal(ks[1], (width, width, 3, 3), jnp.float32))
    w3_oihw = bf16_exact(0.3 * jax.random.normal(ks[2], (cout, width, 1, 1), jnp.float32))

    # TODO(synk): BatchNorm2d is applied in eval mode (affine transform from
    # deterministic running stats); train-mode batch statistics are not modeled.
    def make_bn(kg, kb, km, kv, c, eps=1e-5):
        gamma = 1.0 + 0.1 * jax.random.normal(kg, (c,), jnp.float32)
        beta = 0.1 * jax.random.normal(kb, (c,), jnp.float32)
        r_mean = 0.1 * jax.random.normal(km, (c,), jnp.float32)
        r_var = 0.5 + jnp.abs(jax.random.normal(kv, (c,), jnp.float32))
        scale = gamma / jnp.sqrt(r_var + eps)
        shift = beta - r_mean * scale
        return scale, shift

    s1, b1 = make_bn(ks[3], ks[4], ks[5], ks[6], width)
    s2, b2 = make_bn(ks[7], ks[8], ks[9], ks[10], width)
    s3, b3 = make_bn(ks[11], ks[12], ks[13], ks[14], cout)

    # kernel-layout parameters: channels-last matmul form, bf16 MXU weights
    w1_k = jnp.transpose(w1_oihw[:, :, 0, 0], (1, 0)).astype(jnp.bfloat16)   # (Cin, width)
    w2_k = jnp.transpose(w2_oihw, (2, 3, 1, 0)).reshape(9, width, width).astype(jnp.bfloat16)
    w3_k = jnp.transpose(w3_oihw[:, :, 0, 0], (1, 0)).astype(jnp.bfloat16)   # (width, cout)
    params = (w1_k, s1.reshape(1, -1), b1.reshape(1, -1),
              w2_k, s2.reshape(1, -1), b2.reshape(1, -1),
              w3_k, s3.reshape(1, -1), b3.reshape(1, -1))

    # tile_rows=8 -> 2 row tiles per image: exercises the halo-recompute path.
    feats = jax.block_until_ready(bottleneck_forward(x_nhwc, params, tile_rows=8))
    f01, f02, f03, f04, f05, f06, f07, f08, f09, f10 = feats

    # ---- cross-check against a plain-JAX (lax.conv, NHWC) reference --------
    def conv_nhwc(xx, w_oihw, pad):
        w_hwio = jnp.transpose(w_oihw, (2, 3, 1, 0))
        return lax.conv_general_dilated(
            xx, w_hwio, (1, 1), pad, dimension_numbers=("NHWC", "HWIO", "NHWC"))

    def bn_nhwc(xx, sc, sh):
        return xx * sc[None, None, None, :] + sh[None, None, None, :]

    def chk(name, a, b):
        if not jnp.allclose(a, b, atol=1e-4, rtol=1e-4):
            raise AssertionError(
                f"{name} mismatch, max abs err={float(jnp.max(jnp.abs(a - b)))}")

    r01 = conv_nhwc(x_nhwc, w1_oihw, [(0, 0), (0, 0)])
    chk("x01", f01, r01)
    chk("x02", f02, bn_nhwc(r01, s1, b1))
    chk("x03", f03, (f02 >= 1.0).astype(jnp.float32))
    r04 = conv_nhwc(f03, w2_oihw, [(1, 1), (1, 1)])
    chk("x04", f04, r04)
    chk("x05", f05, bn_nhwc(r04, s2, b2))
    chk("x06", f06, (f05 >= 1.0).astype(jnp.float32))
    r07 = conv_nhwc(f06, w3_oihw, [(0, 0), (0, 0)])
    chk("x07", f07, r07)
    chk("x08", f08, bn_nhwc(r07, s3, b3))
    chk("x09", f09, x_nhwc + f08)
    chk("x10", f10, (f09 >= 1.0).astype(jnp.float32))

    print("KERNEL_OK")
</pallas_src>

<mosaic_0001>
module attributes {stable_mosaic.version = 11 : i64} {
  func.func @_bottleneck_kernel(%arg0: i32, %arg1: i32, %arg2: memref<1x256x16xf32, #tpu.memory_space<vmem>>, %arg3: memref<16x4xbf16, #tpu.memory_space<vmem>>, %arg4: memref<1x4xf32, #tpu.memory_space<vmem>>, %arg5: memref<1x4xf32, #tpu.memory_space<vmem>>, %arg6: memref<9x4x4xbf16, #tpu.memory_space<vmem>>, %arg7: memref<1x4xf32, #tpu.memory_space<vmem>>, %arg8: memref<1x4xf32, #tpu.memory_space<vmem>>, %arg9: memref<4x16xbf16, #tpu.memory_space<vmem>>, %arg10: memref<1x16xf32, #tpu.memory_space<vmem>>, %arg11: memref<1x16xf32, #tpu.memory_space<vmem>>, %arg12: memref<1x128x16xf32, #tpu.memory_space<vmem>>, %arg13: memref<1x128x8xbf16, #tpu.memory_space<vmem>>, %arg14: memref<1x128x48xf32, #tpu.memory_space<vmem>>, %arg15: memref<1x128x16xbf16, #tpu.memory_space<vmem>>, %arg16: memref<2x160x4xbf16, #tpu.memory_space<vmem>>) attributes {dimension_semantics = [#tpu.dimension_semantics<parallel>, #tpu.dimension_semantics<parallel>], iteration_bounds = array<i64: 2, 2>, scalar_prefetch = 0 : i64, scratch_operands = 1 : i64, tpu.core_type = #tpu.core_type<tc>, window_params = [{transform_indices = @transform_0, window_bounds = array<i64: 1, 256, 16>}, {pipeline_mode = #tpu.pipeline_mode<synchronous>, transform_indices = @transform_1, window_bounds = array<i64: 16, 4>}, {pipeline_mode = #tpu.pipeline_mode<synchronous>, transform_indices = @transform_2, window_bounds = array<i64: 1, 4>}, {pipeline_mode = #tpu.pipeline_mode<synchronous>, transform_indices = @transform_3, window_bounds = array<i64: 1, 4>}, {pipeline_mode = #tpu.pipeline_mode<synchronous>, transform_indices = @transform_4, window_bounds = array<i64: 9, 4, 4>}, {pipeline_mode = #tpu.pipeline_mode<synchronous>, transform_indices = @transform_5, window_bounds = array<i64: 1, 4>}, {pipeline_mode = #tpu.pipeline_mode<synchronous>, transform_indices = @transform_6, window_bounds = array<i64: 1, 4>}, {pipeline_mode = #tpu.pipeline_mode<synchronous>, transform_indices = @transform_7, window_bounds = array<i64: 4, 16>}, {pipeline_mode = #tpu.pipeline_mode<synchronous>, transform_indices = @transform_8, window_bounds = array<i64: 1, 16>}, {pipeline_mode = #tpu.pipeline_mode<synchronous>, transform_indices = @transform_9, window_bounds = array<i64: 1, 16>}, {transform_indices = @transform_10, window_bounds = array<i64: 1, 128, 16>}, {transform_indices = @transform_11, window_bounds = array<i64: 1, 128, 8>}, {transform_indices = @transform_12, window_bounds = array<i64: 1, 128, 48>}, {transform_indices = @transform_13, window_bounds = array<i64: 1, 128, 16>}]} {
    %c128_i32 = arith.constant 128 : i32
    %0 = arith.muli %arg1, %c128_i32 : i32
    %1 = tpu.assume_multiple %0, 8 : i32
    %c0 = arith.constant 0 : index
    %2 = arith.index_cast %1 : i32 to index
    %c0_0 = arith.constant 0 : index
    %3 = vector.load %arg2[%c0, %2, %c0_0] : memref<1x256x16xf32, #tpu.memory_space<vmem>>, vector<1x128x16xf32>
    %4 = vector.shape_cast %3 : vector<1x128x16xf32> to vector<128x16xf32>
    %5 = arith.truncf %4 : vector<128x16xf32> to vector<128x16xbf16>
    %c0_1 = arith.constant 0 : index
    %c0_2 = arith.constant 0 : index
    %6 = vector.load %arg3[%c0_1, %c0_2] : memref<16x4xbf16, #tpu.memory_space<vmem>>, vector<16x4xbf16>
    %cst = arith.constant dense<0.000000e+00> : vector<128x4xf32>
    %7 = tpu.matmul %5, %6, %cst {dimension_numbers = #tpu.dot_dimension_numbers<[1], [0], [0], [1], [0, 0, 1, 1], [], []>} : vector<128x16xbf16>, vector<16x4xbf16>, vector<128x4xf32> -> vector<128x4xf32>
    %c0_3 = arith.constant 0 : index
    %c0_4 = arith.constant 0 : index
    %8 = vector.load %arg4[%c0_3, %c0_4] : memref<1x4xf32, #tpu.memory_space<vmem>>, vector<1x4xf32>
    %9 = vector.broadcast %8 : vector<1x4xf32> to vector<128x4xf32>
    %10 = arith.mulf %7, %9 : vector<128x4xf32>
    %c0_5 = arith.constant 0 : index
    %c0_6 = arith.constant 0 : index
    %11 = vector.load %arg5[%c0_5, %c0_6] : memref<1x4xf32, #tpu.memory_space<vmem>>, vector<1x4xf32>
    %12 = vector.broadcast %11 : vector<1x4xf32> to vector<128x4xf32>
    %13 = arith.addf %10, %12 : vector<128x4xf32>
    %cst_7 = arith.constant 1.000000e+00 : f32
    %14 = vector.broadcast %cst_7 : f32 to vector<128x4xf32>
    %15 = arith.cmpf oge, %13, %14 : vector<128x4xf32>
    %16 = arith.extui %15 : vector<128x4xi1> to vector<128x4xi32>
    %17 = arith.sitofp %16 : vector<128x4xi32> to vector<128x4xf32>
    %18 = arith.truncf %17 : vector<128x4xf32> to vector<128x4xbf16>
    %c0_8 = arith.constant 0 : index
    %c0_9 = arith.constant 0 : index
    %c0_10 = arith.constant 0 : index
    %19 = vector.load %arg12[%c0_8, %c0_9, %c0_10] : memref<1x128x16xf32, #tpu.memory_space<vmem>>, vector<1x128x4xf32>
    %20 = vector.shape_cast %19 : vector<1x128x4xf32> to vector<128x4xf32>
    %21 = vector.shape_cast %7 : vector<128x4xf32> to vector<1x128x4xf32>
    tpu.vector_store %arg12[%c0_8, %c0_9, %c0_10], %21 {strides = array<i32>} : memref<1x128x16xf32, #tpu.memory_space<vmem>>, vector<1x128x4xf32>,
    %c0_11 = arith.constant 0 : index
    %c0_12 = arith.constant 0 : index
    %c4 = arith.constant 4 : index
    %22 = vector.load %arg12[%c0_11, %c0_12, %c4] : memref<1x128x16xf32, #tpu.memory_space<vmem>>, vector<1x128x4xf32>
    %23 = vector.shape_cast %22 : vector<1x128x4xf32> to vector<128x4xf32>
    %24 = vector.shape_cast %13 : vector<128x4xf32> to vector<1x128x4xf32>
    tpu.vector_store %arg12[%c0_11, %c0_12, %c4], %24 {strides = array<i32>} : memref<1x128x16xf32, #tpu.memory_space<vmem>>, vector<1x128x4xf32>,
    %c0_13 = arith.constant 0 : index
    %c0_14 = arith.constant 0 : index
    %c0_15 = arith.constant 0 : index
    %25 = vector.load %arg13[%c0_13, %c0_14, %c0_15] : memref<1x128x8xbf16, #tpu.memory_space<vmem>>, vector<1x128x4xbf16>
    %26 = vector.shape_cast %25 : vector<1x128x4xbf16> to vector<128x4xbf16>
    %27 = vector.shape_cast %18 : vector<128x4xbf16> to vector<1x128x4xbf16>
    tpu.vector_store %arg13[%c0_13, %c0_14, %c0_15], %27 {strides = array<i32>} : memref<1x128x8xbf16, #tpu.memory_space<vmem>>, vector<1x128x4xbf16>,
    %c16_i32 = arith.constant 16 : i32
    %28 = arith.subi %1, %c16_i32 : i32
    %c0_i32 = arith.constant 0 : i32
    %29 = arith.maxsi %28, %c0_i32 : i32
    %c128_i32_16 = arith.constant 128 : i32
    %30 = arith.addi %1, %c128_i32_16 : i32
    %c240_i32 = arith.constant 240 : i32
    %31 = arith.minsi %30, %c240_i32 : i32
    %c0_17 = arith.constant 0 : index
    %32 = arith.index_cast %29 : i32 to index
    %c0_18 = arith.constant 0 : index
    %33 = vector.load %arg2[%c0_17, %32, %c0_18] : memref<1x256x16xf32, #tpu.memory_space<vmem>>, vector<1x16x16xf32>
    %34 = vector.shape_cast %33 : vector<1x16x16xf32> to vector<16x16xf32>
    %35 = arith.truncf %34 : vector<16x16xf32> to vector<16x16xbf16>
    %c0_19 = arith.constant 0 : index
    %c0_20 = arith.constant 0 : index
    %36 = vector.load %arg3[%c0_19, %c0_20] : memref<16x4xbf16, #tpu.memory_space<vmem>>, vector<16x4xbf16>
    %cst_21 = arith.constant dense<0.000000e+00> : vector<16x4xf32>
    %37 = tpu.matmul %35, %36, %cst_21 {dimension_numbers = #tpu.dot_dimension_numbers<[1], [0], [0], [1], [0, 0, 1, 1], [], []>} : vector<16x16xbf16>, vector<16x4xbf16>, vector<16x4xf32> -> vector<16x4xf32>
    %c0_22 = arith.constant 0 : index
    %c0_23 = arith.constant 0 : index
    %38 = vector.load %arg4[%c0_22, %c0_23] : memref<1x4xf32, #tpu.memory_space<vmem>>, vector<1x4xf32>
    %39 = vector.broadcast %38 : vector<1x4xf32> to vector<16x4xf32>
    %40 = arith.mulf %37, %39 : vector<16x4xf32>
    %c0_24 = arith.constant 0 : index
    %c0_25 = arith.constant 0 : index
    %41 = vector.load %arg5[%c0_24, %c0_25] : memref<1x4xf32, #tpu.memory_space<vmem>>, vector<1x4xf32>
    %42 = vector.broadcast %41 : vector<1x4xf32> to vector<16x4xf32>
    %43 = arith.addf %40, %42 : vector<16x4xf32>
    %c0_26 = arith.constant 0 : index
    %44 = arith.index_cast %31 : i32 to index
    %c0_27 = arith.constant 0 : index
    %45 = vector.load %arg2[%c0_26, %44, %c0_27] : memref<1x256x16xf32, #tpu.memory_space<vmem>>, vector<1x16x16xf32>
    %46 = vector.shape_cast %45 : vector<1x16x16xf32> to vector<16x16xf32>
    %47 = arith.truncf %46 : vector<16x16xf32> to vector<16x16xbf16>
    %c0_28 = arith.constant 0 : index
    %c0_29 = arith.constant 0 : index
    %48 = vector.load %arg3[%c0_28, %c0_29] : memref<16x4xbf16, #tpu.memory_space<vmem>>, vector<16x4xbf16>
    %cst_30 = arith.constant dense<0.000000e+00> : vector<16x4xf32>
    %49 = tpu.matmul %47, %48, %cst_30 {dimension_numbers = #tpu.dot_dimension_numbers<[1], [0], [0], [1], [0, 0, 1, 1], [], []>} : vector<16x16xbf16>, vector<16x4xbf16>, vector<16x4xf32> -> vector<16x4xf32>
    %c0_31 = arith.constant 0 : index
    %c0_32 = arith.constant 0 : index
    %50 = vector.load %arg4[%c0_31, %c0_32] : memref<1x4xf32, #tpu.memory_space<vmem>>, vector<1x4xf32>
    %51 = vector.broadcast %50 : vector<1x4xf32> to vector<16x4xf32>
    %52 = arith.mulf %49, %51 : vector<16x4xf32>
    %c0_33 = arith.constant 0 : index
    %c0_34 = arith.constant 0 : index
    %53 = vector.load %arg5[%c0_33, %c0_34] : memref<1x4xf32, #tpu.memory_space<vmem>>, vector<1x4xf32>
    %54 = vector.broadcast %53 : vector<1x4xf32> to vector<16x4xf32>
    %55 = arith.addf %52, %54 : vector<16x4xf32>
    %cst_35 = arith.constant 1.000000e+00 : f32
    %56 = vector.broadcast %cst_35 : f32 to vector<16x4xf32>
    %57 = arith.cmpf oge, %43, %56 : vector<16x4xf32>
    %58 = arith.extui %57 : vector<16x4xi1> to vector<16x4xi32>
    %59 = arith.sitofp %58 : vector<16x4xi32> to vector<16x4xf32>
    %60 = arith.truncf %59 : vector<16x4xf32> to vector<16x4xbf16>
    %c0_i32_36 = arith.constant 0 : i32
    %61 = arith.cmpi sgt, %arg1, %c0_i32_36 : i32
    %62 = arith.extui %61 : i1 to i32
    %63 = arith.sitofp %62 : i32 to f32
    %64 = arith.truncf %63 : f32 to bf16
    %65 = vector.broadcast %64 : bf16 to vector<16x4xbf16>
    %66 = arith.mulf %60, %65 : vector<16x4xbf16>
    %cst_37 = arith.constant 1.000000e+00 : f32
    %67 = vector.broadcast %cst_37 : f32 to vector<16x4xf32>
    %68 = arith.cmpf oge, %55, %67 : vector<16x4xf32>
    %69 = arith.extui %68 : vector<16x4xi1> to vector<16x4xi32>
    %70 = arith.sitofp %69 : vector<16x4xi32> to vector<16x4xf32>
    %71 = arith.truncf %70 : vector<16x4xf32> to vector<16x4xbf16>
    %c1_i32 = arith.constant 1 : i32
    %72 = arith.cmpi slt, %arg1, %c1_i32 : i32
    %73 = arith.extui %72 : i1 to i32
    %74 = arith.sitofp %73 : i32 to f32
    %75 = arith.truncf %74 : f32 to bf16
    %76 = vector.broadcast %75 : bf16 to vector<16x4xbf16>
    %77 = arith.mulf %71, %76 : vector<16x4xbf16>
    %78 = tpu.iota {dimensions = array<i32: 0>} : vector<128x1xi32>
    %c16_i32_38 = arith.constant 16 : i32
    %c0_i32_39 = arith.constant 0 : i32
    %79 = arith.cmpi eq, %c16_i32_38, %c0_i32_39 : i32
    %c1_i32_40 = arith.constant 1 : i32
    %80 = arith.select %79, %c1_i32_40, %c16_i32_38 : i32
    %81 = vector.broadcast %80 : i32 to vector<128x1xi32>
    %82 = arith.remsi %78, %81 : vector<128x1xi32>
    %c0_i32_41 = arith.constant 0 : i32
    %83 = vector.broadcast %c0_i32_41 : i32 to vector<128x1xi32>
    %84 = arith.cmpi ne, %82, %83 : vector<128x1xi32>
    %c0_i32_42 = arith.constant 0 : i32
    %85 = vector.broadcast %c0_i32_42 : i32 to vector<128x1xi32>
    %86 = arith.cmpi slt, %82, %85 : vector<128x1xi32>
    %c0_i32_43 = arith.constant 0 : i32
    %87 = arith.cmpi slt, %80, %c0_i32_43 : i32
    %88 = vector.broadcast %87 : i1 to vector<128x1xi1>
    %89 = vector.broadcast %88 : vector<128x1xi1> to vector<128x1xi1>
    %90 = arith.xori %86, %89 : vector<128x1xi1>
    %91 = arith.andi %90, %84 : vector<128x1xi1>
    %92 = vector.broadcast %80 : i32 to vector<128x1xi32>
    %93 = arith.addi %82, %92 : vector<128x1xi32>
    %94 = arith.select %91, %93, %82 : vector<128x1xi1>, vector<128x1xi32>
    %95 = tpu.iota {dimensions = array<i32: 0>} : vector<16x1xi32>
    %c16_i32_44 = arith.constant 16 : i32
    %c0_i32_45 = arith.constant 0 : i32
    %96 = arith.cmpi eq, %c16_i32_44, %c0_i32_45 : i32
    %c1_i32_46 = arith.constant 1 : i32
    %97 = arith.select %96, %c1_i32_46, %c16_i32_44 : i32
    %98 = vector.broadcast %97 : i32 to vector<16x1xi32>
    %99 = arith.remsi %95, %98 : vector<16x1xi32>
    %c0_i32_47 = arith.constant 0 : i32
    %100 = vector.broadcast %c0_i32_47 : i32 to vector<16x1xi32>
    %101 = arith.cmpi ne, %99, %100 : vector<16x1xi32>
    %c0_i32_48 = arith.constant 0 : i32
    %102 = vector.broadcast %c0_i32_48 : i32 to vector<16x1xi32>
    %103 = arith.cmpi slt, %99, %102 : vector<16x1xi32>
    %c0_i32_49 = arith.constant 0 : i32
    %104 = arith.cmpi slt, %97, %c0_i32_49 : i32
    %105 = vector.broadcast %104 : i1 to vector<16x1xi1>
    %106 = vector.broadcast %105 : vector<16x1xi1> to vector<16x1xi1>
    %107 = arith.xori %103, %106 : vector<16x1xi1>
    %108 = arith.andi %107, %101 : vector<16x1xi1>
    %109 = vector.broadcast %97 : i32 to vector<16x1xi32>
    %110 = arith.addi %99, %109 : vector<16x1xi32>
    %111 = arith.select %108, %110, %99 : vector<16x1xi1>, vector<16x1xi32>
    %cst_50 = arith.constant 0.000000e+00 : f32
    %112 = vector.broadcast %cst_50 : f32 to vector<128x4xf32>
    %c1_i32_51 = arith.constant 1 : i32
    %113 = vector.broadcast %c1_i32_51 : i32 to vector<16x1xi32>
    %114 = arith.cmpi sge, %111, %113 : vector<16x1xi32>
    %115 = vector.extract_strided_slice %66 {offsets = [15, 0], sizes = [1, 4], strides = [1, 1]} : vector<16x4xbf16> to vector<1x4xbf16>
    %116 = vector.extract_strided_slice %66 {offsets = [0, 0], sizes = [15, 4], strides = [1, 1]} : vector<16x4xbf16> to vector<15x4xbf16>
    %117 = tpu.concatenate %115, %116 in 0 : vector<1x4xbf16>, vector<15x4xbf16> -> vector<16x4xbf16>
    %cst_52 = arith.constant 0.000000e+00 : f32
    %118 = arith.truncf %cst_52 : f32 to bf16
    %119 = vector.shape_cast %114 : vector<16x1xi1> to vector<16x1xi1>
    %120 = vector.broadcast %119 : vector<16x1xi1> to vector<16x4xi1>
    %121 = vector.broadcast %118 : bf16 to vector<16x4xbf16>
    %122 = arith.select %120, %117, %121 : vector<16x4xi1>, vector<16x4xbf16>
    %c0_53 = arith.constant 0 : index
    %c0_54 = arith.constant 0 : index
    %c0_55 = arith.constant 0 : index
    %123 = vector.load %arg16[%c0_53, %c0_54, %c0_55] : memref<2x160x4xbf16, #tpu.memory_space<vmem>>, vector<1x16x4xbf16>
    %124 = vector.shape_cast %123 : vector<1x16x4xbf16> to vector<16x4xbf16>
    %125 = vector.shape_cast %122 : vector<16x4xbf16> to vector<1x16x4xbf16>
    tpu.vector_store %arg16[%c0_53, %c0_54, %c0_55], %125 {strides = array<i32>} : memref<2x160x4xbf16, #tpu.memory_space<vmem>>, vector<1x16x4xbf16>,
    %c1_i32_56 = arith.constant 1 : i32
    %126 = vector.broadcast %c1_i32_56 : i32 to vector<128x1xi32>
    %127 = arith.cmpi sge, %94, %126 : vector<128x1xi32>
    %128 = vector.extract_strided_slice %18 {offsets = [127, 0], sizes = [1, 4], strides = [1, 1]} : vector<128x4xbf16> to vector<1x4xbf16>
    %129 = vector.extract_strided_slice %18 {offsets = [0, 0], sizes = [127, 4], strides = [1, 1]} : vector<128x4xbf16> to vector<127x4xbf16>
    %130 = tpu.concatenate %128, %129 in 0 : vector<1x4xbf16>, vector<127x4xbf16> -> vector<128x4xbf16>
    %cst_57 = arith.constant 0.000000e+00 : f32
    %131 = arith.truncf %cst_57 : f32 to bf16
    %132 = vector.shape_cast %127 : vector<128x1xi1> to vector<128x1xi1>
    %133 = vector.broadcast %132 : vector<128x1xi1> to vector<128x4xi1>
    %134 = vector.broadcast %131 : bf16 to vector<128x4xbf16>
    %135 = arith.select %133, %130, %134 : vector<128x4xi1>, vector<128x4xbf16>
    %c0_58 = arith.constant 0 : index
    %c16 = arith.constant 16 : index
    %c0_59 = arith.constant 0 : index
    %136 = vector.load %arg16[%c0_58, %c16, %c0_59] : memref<2x160x4xbf16, #tpu.memory_space<vmem>>, vector<1x128x4xbf16>
    %137 = vector.shape_cast %136 : vector<1x128x4xbf16> to vector<128x4xbf16>
    %138 = vector.shape_cast %135 : vector<128x4xbf16> to vector<1x128x4xbf16>
    tpu.vector_store %arg16[%c0_58, %c16, %c0_59], %138 {strides = array<i32>} : memref<2x160x4xbf16, #tpu.memory_space<vmem>>, vector<1x128x4xbf16>,
    %c1_i32_60 = arith.constant 1 : i32
    %139 = vector.broadcast %c1_i32_60 : i32 to vector<16x1xi32>
    %140 = arith.cmpi sge, %111, %139 : vector<16x1xi32>
    %141 = vector.extract_strided_slice %77 {offsets = [15, 0], sizes = [1, 4], strides = [1, 1]} : vector<16x4xbf16> to vector<1x4xbf16>
    %142 = vector.extract_strided_slice %77 {offsets = [0, 0], sizes = [15, 4], strides = [1, 1]} : vector<16x4xbf16> to vector<15x4xbf16>
    %143 = tpu.concatenate %141, %142 in 0 : vector<1x4xbf16>, vector<15x4xbf16> -> vector<16x4xbf16>
    %cst_61 = arith.constant 0.000000e+00 : f32
    %144 = arith.truncf %cst_61 : f32 to bf16
    %145 = vector.shape_cast %140 : vector<16x1xi1> to vector<16x1xi1>
    %146 = vector.broadcast %145 : vector<16x1xi1> to vector<16x4xi1>
    %147 = vector.broadcast %144 : bf16 to vector<16x4xbf16>
    %148 = arith.select %146, %143, %147 : vector<16x4xi1>, vector<16x4xbf16>
    %c0_62 = arith.constant 0 : index
    %c144 = arith.constant 144 : index
    %c0_63 = arith.constant 0 : index
    %149 = vector.load %arg16[%c0_62, %c144, %c0_63] : memref<2x160x4xbf16, #tpu.memory_space<vmem>>, vector<1x16x4xbf16>
    %150 = vector.shape_cast %149 : vector<1x16x4xbf16> to vector<16x4xbf16>
    %151 = vector.shape_cast %148 : vector<16x4xbf16> to vector<1x16x4xbf16>
    tpu.vector_store %arg16[%c0_62, %c144, %c0_63], %151 {strides = array<i32>} : memref<2x160x4xbf16, #tpu.memory_space<vmem>>, vector<1x16x4xbf16>,
    %c0_64 = arith.constant 0 : index
    %c0_65 = arith.constant 0 : index
    %c0_66 = arith.constant 0 : index
    %152 = vector.load %arg16[%c0_64, %c0_65, %c0_66] : memref<2x160x4xbf16, #tpu.memory_space<vmem>>, vector<1x128x4xbf16>
    %153 = vector.shape_cast %152 : vector<1x128x4xbf16> to vector<128x4xbf16>
    %c0_67 = arith.constant 0 : index
    %c0_68 = arith.constant 0 : index
    %c0_69 = arith.constant 0 : index
    %154 = vector.load %arg6[%c0_67, %c0_68, %c0_69] : memref<9x4x4xbf16, #tpu.memory_space<vmem>>, vector<1x4x4xbf16>
    %155 = vector.shape_cast %154 : vector<1x4x4xbf16> to vector<4x4xbf16>
    %cst_70 = arith.constant dense<0.000000e+00> : vector<128x4xf32>
    %156 = tpu.matmul %153, %155, %cst_70 {dimension_numbers = #tpu.dot_dimension_numbers<[1], [0], [0], [1], [0, 0, 1, 1], [], []>} : vector<128x4xbf16>, vector<4x4xbf16>, vector<128x4xf32> -> vector<128x4xf32>
    %157 = arith.addf %112, %156 : vector<128x4xf32>
    %c0_71 = arith.constant 0 : index
    %c16_72 = arith.constant 16 : index
    %c0_73 = arith.constant 0 : index
    %158 = vector.load %arg16[%c0_71, %c16_72, %c0_73] : memref<2x160x4xbf16, #tpu.memory_space<vmem>>, vector<1x128x4xbf16>
    %159 = vector.shape_cast %158 : vector<1x128x4xbf16> to vector<128x4xbf16>
    %c3 = arith.constant 3 : index
    %c0_74 = arith.constant 0 : index
    %c0_75 = arith.constant 0 : index
    %160 = vector.load %arg6[%c3, %c0_74, %c0_75] : memref<9x4x4xbf16, #tpu.memory_space<vmem>>, vector<1x4x4xbf16>
    %161 = vector.shape_cast %160 : vector<1x4x4xbf16> to vector<4x4xbf16>
    %cst_76 = arith.constant dense<0.000000e+00> : vector<128x4xf32>
    %162 = tpu.matmul %159, %161, %cst_76 {dimension_numbers = #tpu.dot_dimension_numbers<[1], [0], [0], [1], [0, 0, 1, 1], [], []>} : vector<128x4xbf16>, vector<4x4xbf16>, vector<128x4xf32> -> vector<128x4xf32>
    %163 = arith.addf %157, %162 : vector<128x4xf32>
    %c0_77 = arith.constant 0 : index
    %c32 = arith.constant 32 : index
    %c0_78 = arith.constant 0 : index
    %164 = vector.load %arg16[%c0_77, %c32, %c0_78] : memref<2x160x4xbf16, #tpu.memory_space<vmem>>, vector<1x128x4xbf16>
    %165 = vector.shape_cast %164 : vector<1x128x4xbf16> to vector<128x4xbf16>
    %c6 = arith.constant 6 : index
    %c0_79 = arith.constant 0 : index
    %c0_80 = arith.constant 0 : index
    %166 = vector.load %arg6[%c6, %c0_79, %c0_80] : memref<9x4x4xbf16, #tpu.memory_space<vmem>>, vector<1x4x4xbf16>
    %167 = vector.shape_cast %166 : vector<1x4x4xbf16> to vector<4x4xbf16>
    %cst_81 = arith.constant dense<0.000000e+00> : vector<128x4xf32>
    %168 = tpu.matmul %165, %167, %cst_81 {dimension_numbers = #tpu.dot_dimension_numbers<[1], [0], [0], [1], [0, 0, 1, 1], [], []>} : vector<128x4xbf16>, vector<4x4xbf16>, vector<128x4xf32> -> vector<128x4xf32>
    %169 = arith.addf %163, %168 : vector<128x4xf32>
    %c1 = arith.constant 1 : index
    %c0_82 = arith.constant 0 : index
    %c0_83 = arith.constant 0 : index
    %170 = vector.load %arg16[%c1, %c0_82, %c0_83] : memref<2x160x4xbf16, #tpu.memory_space<vmem>>, vector<1x16x4xbf16>
    %171 = vector.shape_cast %170 : vector<1x16x4xbf16> to vector<16x4xbf16>
    %172 = vector.shape_cast %66 : vector<16x4xbf16> to vector<1x16x4xbf16>
    tpu.vector_store %arg16[%c1, %c0_82, %c0_83], %172 {strides = array<i32>} : memref<2x160x4xbf16, #tpu.memory_space<vmem>>, vector<1x16x4xbf16>,
    %c1_84 = arith.constant 1 : index
    %c16_85 = arith.constant 16 : index
    %c0_86 = arith.constant 0 : index
    %173 = vector.load %arg16[%c1_84, %c16_85, %c0_86] : memref<2x160x4xbf16, #tpu.memory_space<vmem>>, vector<1x128x4xbf16>
    %174 = vector.shape_cast %173 : vector<1x128x4xbf16> to vector<128x4xbf16>
    %175 = vector.shape_cast %18 : vector<128x4xbf16> to vector<1x128x4xbf16>
    tpu.vector_store %arg16[%c1_84, %c16_85, %c0_86], %175 {strides = array<i32>} : memref<2x160x4xbf16, #tpu.memory_space<vmem>>, vector<1x128x4xbf16>,
    %c1_87 = arith.constant 1 : index
    %c144_88 = arith.constant 144 : index
    %c0_89 = arith.constant 0 : index
    %176 = vector.load %arg16[%c1_87, %c144_88, %c0_89] : memref<2x160x4xbf16, #tpu.memory_space<vmem>>, vector<1x16x4xbf16>
    %177 = vector.shape_cast %176 : vector<1x16x4xbf16> to vector<16x4xbf16>
    %178 = vector.shape_cast %77 : vector<16x4xbf16> to vector<1x16x4xbf16>
    tpu.vector_store %arg16[%c1_87, %c144_88, %c0_89], %178 {strides = array<i32>} : memref<2x160x4xbf16, #tpu.memory_space<vmem>>, vector<1x16x4xbf16>,
    %c1_90 = arith.constant 1 : index
    %c0_91 = arith.constant 0 : index
    %c0_92 = arith.constant 0 : index
    %179 = vector.load %arg16[%c1_90, %c0_91, %c0_92] : memref<2x160x4xbf16, #tpu.memory_space<vmem>>, vector<1x128x4xbf16>
    %180 = vector.shape_cast %179 : vector<1x128x4xbf16> to vector<128x4xbf16>
    %c1_93 = arith.constant 1 : index
    %c0_94 = arith.constant 0 : index
    %c0_95 = arith.constant 0 : index
    %181 = vector.load %arg6[%c1_93, %c0_94, %c0_95] : memref<9x4x4xbf16, #tpu.memory_space<vmem>>, vector<1x4x4xbf16>
    %182 = vector.shape_cast %181 : vector<1x4x4xbf16> to vector<4x4xbf16>
    %cst_96 = arith.constant dense<0.000000e+00> : vector<128x4xf32>
    %183 = tpu.matmul %180, %182, %cst_96 {dimension_numbers = #tpu.dot_dimension_numbers<[1], [0], [0], [1], [0, 0, 1, 1], [], []>} : vector<128x4xbf16>, vector<4x4xbf16>, vector<128x4xf32> -> vector<128x4xf32>
    %184 = arith.addf %169, %183 : vector<128x4xf32>
    %c1_97 = arith.constant 1 : index
    %c16_98 = arith.constant 16 : index
    %c0_99 = arith.constant 0 : index
    %185 = vector.load %arg16[%c1_97, %c16_98, %c0_99] : memref<2x160x4xbf16, #tpu.memory_space<vmem>>, vector<1x128x4xbf16>
    %186 = vector.shape_cast %185 : vector<1x128x4xbf16> to vector<128x4xbf16>
    %c4_100 = arith.constant 4 : index
    %c0_101 = arith.constant 0 : index
    %c0_102 = arith.constant 0 : index
    %187 = vector.load %arg6[%c4_100, %c0_101, %c0_102] : memref<9x4x4xbf16, #tpu.memory_space<vmem>>, vector<1x4x4xbf16>
    %188 = vector.shape_cast %187 : vector<1x4x4xbf16> to vector<4x4xbf16>
    %cst_103 = arith.constant dense<0.000000e+00> : vector<128x4xf32>
    %189 = tpu.matmul %186, %188, %cst_103 {dimension_numbers = #tpu.dot_dimension_numbers<[1], [0], [0], [1], [0, 0, 1, 1], [], []>} : vector<128x4xbf16>, vector<4x4xbf16>, vector<128x4xf32> -> vector<128x4xf32>
    %190 = arith.addf %184, %189 : vector<128x4xf32>
    %c1_104 = arith.constant 1 : index
    %c32_105 = arith.constant 32 : index
    %c0_106 = arith.constant 0 : index
    %191 = vector.load %arg16[%c1_104, %c32_105, %c0_106] : memref<2x160x4xbf16, #tpu.memory_space<vmem>>, vector<1x128x4xbf16>
    %192 = vector.shape_cast %191 : vector<1x128x4xbf16> to vector<128x4xbf16>
    %c7 = arith.constant 7 : index
    %c0_107 = arith.constant 0 : index
    %c0_108 = arith.constant 0 : index
    %193 = vector.load %arg6[%c7, %c0_107, %c0_108] : memref<9x4x4xbf16, #tpu.memory_space<vmem>>, vector<1x4x4xbf16>
    %194 = vector.shape_cast %193 : vector<1x4x4xbf16> to vector<4x4xbf16>
    %cst_109 = arith.constant dense<0.000000e+00> : vector<128x4xf32>
    %195 = tpu.matmul %192, %194, %cst_109 {dimension_numbers = #tpu.dot_dimension_numbers<[1], [0], [0], [1], [0, 0, 1, 1], [], []>} : vector<128x4xbf16>, vector<4x4xbf16>, vector<128x4xf32> -> vector<128x4xf32>
    %196 = arith.addf %190, %195 : vector<128x4xf32>
    %c14_i32 = arith.constant 14 : i32
    %197 = vector.broadcast %c14_i32 : i32 to vector<16x1xi32>
    %198 = arith.cmpi sle, %111, %197 : vector<16x1xi32>
    %199 = vector.extract_strided_slice %66 {offsets = [1, 0], sizes = [15, 4], strides = [1, 1]} : vector<16x4xbf16> to vector<15x4xbf16>
    %200 = vector.extract_strided_slice %66 {offsets = [0, 0], sizes = [1, 4], strides = [1, 1]} : vector<16x4xbf16> to vector<1x4xbf16>
    %201 = tpu.concatenate %199, %200 in 0 : vector<15x4xbf16>, vector<1x4xbf16> -> vector<16x4xbf16>
    %cst_110 = arith.constant 0.000000e+00 : f32
    %202 = arith.truncf %cst_110 : f32 to bf16
    %203 = vector.shape_cast %198 : vector<16x1xi1> to vector<16x1xi1>
    %204 = vector.broadcast %203 : vector<16x1xi1> to vector<16x4xi1>
    %205 = vector.broadcast %202 : bf16 to vector<16x4xbf16>
    %206 = arith.select %204, %201, %205 : vector<16x4xi1>, vector<16x4xbf16>
    %c0_111 = arith.constant 0 : index
    %c0_112 = arith.constant 0 : index
    %c0_113 = arith.constant 0 : index
    %207 = vector.load %arg16[%c0_111, %c0_112, %c0_113] : memref<2x160x4xbf16, #tpu.memory_space<vmem>>, vector<1x16x4xbf16>
    %208 = vector.shape_cast %207 : vector<1x16x4xbf16> to vector<16x4xbf16>
    %209 = vector.shape_cast %206 : vector<16x4xbf16> to vector<1x16x4xbf16>
    tpu.vector_store %arg16[%c0_111, %c0_112, %c0_113], %209 {strides = array<i32>} : memref<2x160x4xbf16, #tpu.memory_space<vmem>>, vector<1x16x4xbf16>,
    %c14_i32_114 = arith.constant 14 : i32
    %210 = vector.broadcast %c14_i32_114 : i32 to vector<128x1xi32>
    %211 = arith.cmpi sle, %94, %210 : vector<128x1xi32>
    %212 = vector.extract_strided_slice %18 {offsets = [1, 0], sizes = [127, 4], strides = [1, 1]} : vector<128x4xbf16> to vector<127x4xbf16>
    %213 = vector.extract_strided_slice %18 {offsets = [0, 0], sizes = [1, 4], strides = [1, 1]} : vector<128x4xbf16> to vector<1x4xbf16>
    %214 = tpu.concatenate %212, %213 in 0 : vector<127x4xbf16>, vector<1x4xbf16> -> vector<128x4xbf16>
    %cst_115 = arith.constant 0.000000e+00 : f32
    %215 = arith.truncf %cst_115 : f32 to bf16
    %216 = vector.shape_cast %211 : vector<128x1xi1> to vector<128x1xi1>
    %217 = vector.broadcast %216 : vector<128x1xi1> to vector<128x4xi1>
    %218 = vector.broadcast %215 : bf16 to vector<128x4xbf16>
    %219 = arith.select %217, %214, %218 : vector<128x4xi1>, vector<128x4xbf16>
    %c0_116 = arith.constant 0 : index
    %c16_117 = arith.constant 16 : index
    %c0_118 = arith.constant 0 : index
    %220 = vector.load %arg16[%c0_116, %c16_117, %c0_118] : memref<2x160x4xbf16, #tpu.memory_space<vmem>>, vector<1x128x4xbf16>
    %221 = vector.shape_cast %220 : vector<1x128x4xbf16> to vector<128x4xbf16>
    %222 = vector.shape_cast %219 : vector<128x4xbf16> to vector<1x128x4xbf16>
    tpu.vector_store %arg16[%c0_116, %c16_117, %c0_118], %222 {strides = array<i32>} : memref<2x160x4xbf16, #tpu.memory_space<vmem>>, vector<1x128x4xbf16>,
    %c14_i32_119 = arith.constant 14 : i32
    %223 = vector.broadcast %c14_i32_119 : i32 to vector<16x1xi32>
    %224 = arith.cmpi sle, %111, %223 : vector<16x1xi32>
    %225 = vector.extract_strided_slice %77 {offsets = [1, 0], sizes = [15, 4], strides = [1, 1]} : vector<16x4xbf16> to vector<15x4xbf16>
    %226 = vector.extract_strided_slice %77 {offsets = [0, 0], sizes = [1, 4], strides = [1, 1]} : vector<16x4xbf16> to vector<1x4xbf16>
    %227 = tpu.concatenate %225, %226 in 0 : vector<15x4xbf16>, vector<1x4xbf16> -> vector<16x4xbf16>
    %cst_120 = arith.constant 0.000000e+00 : f32
    %228 = arith.truncf %cst_120 : f32 to bf16
    %229 = vector.shape_cast %224 : vector<16x1xi1> to vector<16x1xi1>
    %230 = vector.broadcast %229 : vector<16x1xi1> to vector<16x4xi1>
    %231 = vector.broadcast %228 : bf16 to vector<16x4xbf16>
    %232 = arith.select %230, %227, %231 : vector<16x4xi1>, vector<16x4xbf16>
    %c0_121 = arith.constant 0 : index
    %c144_122 = arith.constant 144 : index
    %c0_123 = arith.constant 0 : index
    %233 = vector.load %arg16[%c0_121, %c144_122, %c0_123] : memref<2x160x4xbf16, #tpu.memory_space<vmem>>, vector<1x16x4xbf16>
    %234 = vector.shape_cast %233 : vector<1x16x4xbf16> to vector<16x4xbf16>
    %235 = vector.shape_cast %232 : vector<16x4xbf16> to vector<1x16x4xbf16>
    tpu.vector_store %arg16[%c0_121, %c144_122, %c0_123], %235 {strides = array<i32>} : memref<2x160x4xbf16, #tpu.memory_space<vmem>>, vector<1x16x4xbf16>,
    %c0_124 = arith.constant 0 : index
    %c0_125 = arith.constant 0 : index
    %c0_126 = arith.constant 0 : index
    %236 = vector.load %arg16[%c0_124, %c0_125, %c0_126] : memref<2x160x4xbf16, #tpu.memory_space<vmem>>, vector<1x128x4xbf16>
    %237 = vector.shape_cast %236 : vector<1x128x4xbf16> to vector<128x4xbf16>
    %c2 = arith.constant 2 : index
    %c0_127 = arith.constant 0 : index
    %c0_128 = arith.constant 0 : index
    %238 = vector.load %arg6[%c2, %c0_127, %c0_128] : memref<9x4x4xbf16, #tpu.memory_space<vmem>>, vector<1x4x4xbf16>
    %239 = vector.shape_cast %238 : vector<1x4x4xbf16> to vector<4x4xbf16>
    %cst_129 = arith.constant dense<0.000000e+00> : vector<128x4xf32>
    %240 = tpu.matmul %237, %239, %cst_129 {dimension_numbers = #tpu.dot_dimension_numbers<[1], [0], [0], [1], [0, 0, 1, 1], [], []>} : vector<128x4xbf16>, vector<4x4xbf16>, vector<128x4xf32> -> vector<128x4xf32>
    %241 = arith.addf %196, %240 : vector<128x4xf32>
    %c0_130 = arith.constant 0 : index
    %c16_131 = arith.constant 16 : index
    %c0_132 = arith.constant 0 : index
    %242 = vector.load %arg16[%c0_130, %c16_131, %c0_132] : memref<2x160x4xbf16, #tpu.memory_space<vmem>>, vector<1x128x4xbf16>
    %243 = vector.shape_cast %242 : vector<1x128x4xbf16> to vector<128x4xbf16>
    %c5 = arith.constant 5 : index
    %c0_133 = arith.constant 0 : index
    %c0_134 = arith.constant 0 : index
    %244 = vector.load %arg6[%c5, %c0_133, %c0_134] : memref<9x4x4xbf16, #tpu.memory_space<vmem>>, vector<1x4x4xbf16>
    %245 = vector.shape_cast %244 : vector<1x4x4xbf16> to vector<4x4xbf16>
    %cst_135 = arith.constant dense<0.000000e+00> : vector<128x4xf32>
    %246 = tpu.matmul %243, %245, %cst_135 {dimension_numbers = #tpu.dot_dimension_numbers<[1], [0], [0], [1], [0, 0, 1, 1], [], []>} : vector<128x4xbf16>, vector<4x4xbf16>, vector<128x4xf32> -> vector<128x4xf32>
    %247 = arith.addf %241, %246 : vector<128x4xf32>
    %c0_136 = arith.constant 0 : index
    %c32_137 = arith.constant 32 : index
    %c0_138 = arith.constant 0 : index
    %248 = vector.load %arg16[%c0_136, %c32_137, %c0_138] : memref<2x160x4xbf16, #tpu.memory_space<vmem>>, vector<1x128x4xbf16>
    %249 = vector.shape_cast %248 : vector<1x128x4xbf16> to vector<128x4xbf16>
    %c8 = arith.constant 8 : index
    %c0_139 = arith.constant 0 : index
    %c0_140 = arith.constant 0 : index
    %250 = vector.load %arg6[%c8, %c0_139, %c0_140] : memref<9x4x4xbf16, #tpu.memory_space<vmem>>, vector<1x4x4xbf16>
    %251 = vector.shape_cast %250 : vector<1x4x4xbf16> to vector<4x4xbf16>
    %cst_141 = arith.constant dense<0.000000e+00> : vector<128x4xf32>
    %252 = tpu.matmul %249, %251, %cst_141 {dimension_numbers = #tpu.dot_dimension_numbers<[1], [0], [0], [1], [0, 0, 1, 1], [], []>} : vector<128x4xbf16>, vector<4x4xbf16>, vector<128x4xf32> -> vector<128x4xf32>
    %253 = arith.addf %247, %252 : vector<128x4xf32>
    %c0_142 = arith.constant 0 : index
    %c0_143 = arith.constant 0 : index
    %254 = vector.load %arg7[%c0_142, %c0_143] : memref<1x4xf32, #tpu.memory_space<vmem>>, vector<1x4xf32>
    %255 = vector.broadcast %254 : vector<1x4xf32> to vector<128x4xf32>
    %256 = arith.mulf %253, %255 : vector<128x4xf32>
    %c0_144 = arith.constant 0 : index
    %c0_145 = arith.constant 0 : index
    %257 = vector.load %arg8[%c0_144, %c0_145] : memref<1x4xf32, #tpu.memory_space<vmem>>, vector<1x4xf32>
    %258 = vector.broadcast %257 : vector<1x4xf32> to vector<128x4xf32>
    %259 = arith.addf %256, %258 : vector<128x4xf32>
    %cst_146 = arith.constant 1.000000e+00 : f32
    %260 = vector.broadcast %cst_146 : f32 to vector<128x4xf32>
    %261 = arith.cmpf oge, %259, %260 : vector<128x4xf32>
    %262 = arith.extui %261 : vector<128x4xi1> to vector<128x4xi32>
    %263 = arith.sitofp %262 : vector<128x4xi32> to vector<128x4xf32>
    %264 = arith.truncf %263 : vector<128x4xf32> to vector<128x4xbf16>
    %c0_147 = arith.constant 0 : index
    %c0_148 = arith.constant 0 : index
    %c8_149 = arith.constant 8 : index
    %265 = vector.load %arg12[%c0_147, %c0_148, %c8_149] : memref<1x128x16xf32, #tpu.memory_space<vmem>>, vector<1x128x4xf32>
    %266 = vector.shape_cast %265 : vector<1x128x4xf32> to vector<128x4xf32>
    %267 = vector.shape_cast %253 : vector<128x4xf32> to vector<1x128x4xf32>
    tpu.vector_store %arg12[%c0_147, %c0_148, %c8_149], %267 {strides = array<i32>} : memref<1x128x16xf32, #tpu.memory_space<vmem>>, vector<1x128x4xf32>,
    %c0_150 = arith.constant 0 : index
    %c0_151 = arith.constant 0 : index
    %c12 = arith.constant 12 : index
    %268 = vector.load %arg12[%c0_150, %c0_151, %c12] : memref<1x128x16xf32, #tpu.memory_space<vmem>>, vector<1x128x4xf32>
    %269 = vector.shape_cast %268 : vector<1x128x4xf32> to vector<128x4xf32>
    %270 = vector.shape_cast %259 : vector<128x4xf32> to vector<1x128x4xf32>
    tpu.vector_store %arg12[%c0_150, %c0_151, %c12], %270 {strides = array<i32>} : memref<1x128x16xf32, #tpu.memory_space<vmem>>, vector<1x128x4xf32>,
    %c0_152 = arith.constant 0 : index
    %c0_153 = arith.constant 0 : index
    %c4_154 = arith.constant 4 : index
    %271 = vector.load %arg13[%c0_152, %c0_153, %c4_154] : memref<1x128x8xbf16, #tpu.memory_space<vmem>>, vector<1x128x4xbf16>
    %272 = vector.shape_cast %271 : vector<1x128x4xbf16> to vector<128x4xbf16>
    %273 = vector.shape_cast %264 : vector<128x4xbf16> to vector<1x128x4xbf16>
    tpu.vector_store %arg13[%c0_152, %c0_153, %c4_154], %273 {strides = array<i32>} : memref<1x128x8xbf16, #tpu.memory_space<vmem>>, vector<1x128x4xbf16>,
    %c0_155 = arith.constant 0 : index
    %c0_156 = arith.constant 0 : index
    %274 = vector.load %arg9[%c0_155, %c0_156] : memref<4x16xbf16, #tpu.memory_space<vmem>>, vector<4x16xbf16>
    %cst_157 = arith.constant dense<0.000000e+00> : vector<128x16xf32>
    %275 = tpu.matmul %264, %274, %cst_157 {dimension_numbers = #tpu.dot_dimension_numbers<[1], [0], [0], [1], [0, 0, 1, 1], [], []>} : vector<128x4xbf16>, vector<4x16xbf16>, vector<128x16xf32> -> vector<128x16xf32>
    %c0_158 = arith.constant 0 : index
    %c0_159 = arith.constant 0 : index
    %276 = vector.load %arg10[%c0_158, %c0_159] : memref<1x16xf32, #tpu.memory_space<vmem>>, vector<1x16xf32>
    %277 = vector.broadcast %276 : vector<1x16xf32> to vector<128x16xf32>
    %278 = arith.mulf %275, %277 : vector<128x16xf32>
    %c0_160 = arith.constant 0 : index
    %c0_161 = arith.constant 0 : index
    %279 = vector.load %arg11[%c0_160, %c0_161] : memref<1x16xf32, #tpu.memory_space<vmem>>, vector<1x16xf32>
    %280 = vector.broadcast %279 : vector<1x16xf32> to vector<128x16xf32>
    %281 = arith.addf %278, %280 : vector<128x16xf32>
    %282 = arith.addf %4, %281 : vector<128x16xf32>
    %cst_162 = arith.constant 1.000000e+00 : f32
    %283 = vector.broadcast %cst_162 : f32 to vector<128x16xf32>
    %284 = arith.cmpf oge, %282, %283 : vector<128x16xf32>
    %285 = arith.extui %284 : vector<128x16xi1> to vector<128x16xi32>
    %286 = arith.sitofp %285 : vector<128x16xi32> to vector<128x16xf32>
    %287 = arith.truncf %286 : vector<128x16xf32> to vector<128x16xbf16>
    %c0_163 = arith.constant 0 : index
    %c0_164 = arith.constant 0 : index
    %c0_165 = arith.constant 0 : index
    %288 = vector.load %arg14[%c0_163, %c0_164, %c0_165] : memref<1x128x48xf32, #tpu.memory_space<vmem>>, vector<1x128x16xf32>
    %289 = vector.shape_cast %288 : vector<1x128x16xf32> to vector<128x16xf32>
    %290 = vector.shape_cast %275 : vector<128x16xf32> to vector<1x128x16xf32>
    tpu.vector_store %arg14[%c0_163, %c0_164, %c0_165], %290 {strides = array<i32>} : memref<1x128x48xf32, #tpu.memory_space<vmem>>, vector<1x128x16xf32>,
    %c0_166 = arith.constant 0 : index
    %c0_167 = arith.constant 0 : index
    %c16_168 = arith.constant 16 : index
    %291 = vector.load %arg14[%c0_166, %c0_167, %c16_168] : memref<1x128x48xf32, #tpu.memory_space<vmem>>, vector<1x128x16xf32>
    %292 = vector.shape_cast %291 : vector<1x128x16xf32> to vector<128x16xf32>
    %293 = vector.shape_cast %281 : vector<128x16xf32> to vector<1x128x16xf32>
    tpu.vector_store %arg14[%c0_166, %c0_167, %c16_168], %293 {strides = array<i32>} : memref<1x128x48xf32, #tpu.memory_space<vmem>>, vector<1x128x16xf32>,
    %c0_169 = arith.constant 0 : index
    %c0_170 = arith.constant 0 : index
    %c32_171 = arith.constant 32 : index
    %294 = vector.load %arg14[%c0_169, %c0_170, %c32_171] : memref<1x128x48xf32, #tpu.memory_space<vmem>>, vector<1x128x16xf32>
    %295 = vector.shape_cast %294 : vector<1x128x16xf32> to vector<128x16xf32>
    %296 = vector.shape_cast %282 : vector<128x16xf32> to vector<1x128x16xf32>
    tpu.vector_store %arg14[%c0_169, %c0_170, %c32_171], %296 {strides = array<i32>} : memref<1x128x48xf32, #tpu.memory_space<vmem>>, vector<1x128x16xf32>,
    %c0_172 = arith.constant 0 : index
    %c0_173 = arith.constant 0 : index
    %c0_174 = arith.constant 0 : index
    %297 = vector.load %arg15[%c0_172, %c0_173, %c0_174] : memref<1x128x16xbf16, #tpu.memory_space<vmem>>, vector<1x128x16xbf16>
    %298 = vector.shape_cast %297 : vector<1x128x16xbf16> to vector<128x16xbf16>
    %299 = vector.shape_cast %287 : vector<128x16xbf16> to vector<1x128x16xbf16>
    tpu.vector_store %arg15[%c0_172, %c0_173, %c0_174], %299 {strides = array<i32>} : memref<1x128x16xbf16, #tpu.memory_space<vmem>>, vector<1x128x16xbf16>,
    return
  }
  func.func @transform_0(%arg0: i32, %arg1: i32) -> (i32, i32, i32) {
    %c0_i32 = arith.constant 0 : i32
    %c0_i32_0 = arith.constant 0 : i32
    %c0_i32_1 = arith.constant 0 : i32
    return %arg0, %c0_i32, %c0_i32_0 : i32, i32, i32
  }
  func.func @transform_1(%arg0: i32, %arg1: i32) -> (i32, i32) {
    %c0_i32 = arith.constant 0 : i32
    %c0_i32_0 = arith.constant 0 : i32
    %c0_i32_1 = arith.constant 0 : i32
    return %c0_i32, %c0_i32_0 : i32, i32
  }
  func.func @transform_2(%arg0: i32, %arg1: i32) -> (i32, i32) {
    %c0_i32 = arith.constant 0 : i32
    %c0_i32_0 = arith.constant 0 : i32
    %c0_i32_1 = arith.constant 0 : i32
    return %c0_i32, %c0_i32_0 : i32, i32
  }
  func.func @transform_3(%arg0: i32, %arg1: i32) -> (i32, i32) {
    %c0_i32 = arith.constant 0 : i32
    %c0_i32_0 = arith.constant 0 : i32
    %c0_i32_1 = arith.constant 0 : i32
    return %c0_i32, %c0_i32_0 : i32, i32
  }
  func.func @transform_4(%arg0: i32, %arg1: i32) -> (i32, i32, i32) {
    %c0_i32 = arith.constant 0 : i32
    %c0_i32_0 = arith.constant 0 : i32
    %c0_i32_1 = arith.constant 0 : i32
    %c0_i32_2 = arith.constant 0 : i32
    return %c0_i32, %c0_i32_0, %c0_i32_1 : i32, i32, i32
  }
  func.func @transform_5(%arg0: i32, %arg1: i32) -> (i32, i32) {
    %c0_i32 = arith.constant 0 : i32
    %c0_i32_0 = arith.constant 0 : i32
    %c0_i32_1 = arith.constant 0 : i32
    return %c0_i32, %c0_i32_0 : i32, i32
  }
  func.func @transform_6(%arg0: i32, %arg1: i32) -> (i32, i32) {
    %c0_i32 = arith.constant 0 : i32
    %c0_i32_0 = arith.constant 0 : i32
    %c0_i32_1 = arith.constant 0 : i32
    return %c0_i32, %c0_i32_0 : i32, i32
  }
  func.func @transform_7(%arg0: i32, %arg1: i32) -> (i32, i32) {
    %c0_i32 = arith.constant 0 : i32
    %c0_i32_0 = arith.constant 0 : i32
    %c0_i32_1 = arith.constant 0 : i32
    return %c0_i32, %c0_i32_0 : i32, i32
  }
  func.func @transform_8(%arg0: i32, %arg1: i32) -> (i32, i32) {
    %c0_i32 = arith.constant 0 : i32
    %c0_i32_0 = arith.constant 0 : i32
    %c0_i32_1 = arith.constant 0 : i32
    return %c0_i32, %c0_i32_0 : i32, i32
  }
  func.func @transform_9(%arg0: i32, %arg1: i32) -> (i32, i32) {
    %c0_i32 = arith.constant 0 : i32
    %c0_i32_0 = arith.constant 0 : i32
    %c0_i32_1 = arith.constant 0 : i32
    return %c0_i32, %c0_i32_0 : i32, i32
  }
  func.func @transform_10(%arg0: i32, %arg1: i32) -> (i32, i32, i32) {
    %c0_i32 = arith.constant 0 : i32
    %c0_i32_0 = arith.constant 0 : i32
    return %arg0, %arg1, %c0_i32 : i32, i32, i32
  }
  func.func @transform_11(%arg0: i32, %arg1: i32) -> (i32, i32, i32) {
    %c0_i32 = arith.constant 0 : i32
    %c0_i32_0 = arith.constant 0 : i32
    return %arg0, %arg1, %c0_i32 : i32, i32, i32
  }
  func.func @transform_12(%arg0: i32, %arg1: i32) -> (i32, i32, i32) {
    %c0_i32 = arith.constant 0 : i32
    %c0_i32_0 = arith.constant 0 : i32
    return %arg0, %arg1, %c0_i32 : i32, i32, i32
  }
  func.func @transform_13(%arg0: i32, %arg1: i32) -> (i32, i32, i32) {
    %c0_i32 = arith.constant 0 : i32
    %c0_i32_0 = arith.constant 0 : i32
    return %arg0, %arg1, %c0_i32 : i32, i32, i32
  }
}

</mosaic_0001>

<llo_original>
// kernel: tpu_custom_call.1
$region0: #{tpu_custom_call.1}
  #allocation0 [shape = 'u32[]', space=smem, size = 0x4, offset = 0x4, fixed_abs, tag = 'smem constant byte address 0x4 - core index']
  #allocation1 [shape = 'u32[72,128]{1,0:T(1,128)}', space=vmem, size = 0x9000, scoped, tag = 'internal scratch']
  #allocation2 [shape = 'bf16[2,160,4]{2,1,0:T(8,128)(2,1)}', space=vmem, size = 0x14000, scoped, tag = 'scratch operand']
  %s0 = inlined_call_operand.vmem [shape: f32[2,256,16], index: 0, kind: input, shape index: {}]
  %s1 = inlined_call_operand.vmem [shape: bf16[16,4], index: 1, kind: input, shape index: {}]
  %s2 = inlined_call_operand.vmem [shape: f32[1,4], index: 2, kind: input, shape index: {}]
  %s3 = inlined_call_operand.vmem [shape: f32[1,4], index: 3, kind: input, shape index: {}]
  %s4 = inlined_call_operand.vmem [shape: bf16[9,4,4], index: 4, kind: input, shape index: {}]
  %s5 = inlined_call_operand.vmem [shape: f32[1,4], index: 5, kind: input, shape index: {}]
  %s6 = inlined_call_operand.vmem [shape: f32[1,4], index: 6, kind: input, shape index: {}]
  %s7 = inlined_call_operand.vmem [shape: bf16[4,16], index: 7, kind: input, shape index: {}]
  %s8 = inlined_call_operand.vmem [shape: f32[1,16], index: 8, kind: input, shape index: {}]
  %s9 = inlined_call_operand.vmem [shape: f32[1,16], index: 9, kind: input, shape index: {}]
  %s10 = inlined_call_operand.vmem [shape: f32[2,256,16], index: 10, kind: output, shape index: {0}]
  %s11 = inlined_call_operand.vmem [shape: bf16[2,256,8], index: 11, kind: output, shape index: {1}]
  %s12 = inlined_call_operand.vmem [shape: f32[2,256,48], index: 12, kind: output, shape index: {2}]
  %s13 = inlined_call_operand.vmem [shape: bf16[2,256,16], index: 13, kind: output, shape index: {3}]
  %14 = xla_tuple %s10, %s11, %s12, %s13
  %s15 = sld [smem:[#allocation0]]
  $region97: #{tpu_custom_call.1} parent=0
    _
  %s17 = ssub.s32 1, %s15
  %s18 = scalar_select 0, %s17, %s15
  loop: start=0, step=1, limit=6
  $region2: #{tpu_custom_call.1} parent=0 // loop_pre_header
    _
  $region3: #{tpu_custom_call.1} parent=0 // loop_header
    %s20 = sphi 0, %s24
    %p21 = scmp.ge.s32.totalorder %s20, 6
    %s27 = sphi 0, %s39
    %s28 = sphi 0, %s35
    %s29 = sphi 0, %s27
    %s30 = sphi 0, %s28
    %s31 = sphi 0, %s29
    %s32 = sphi 0, %s30
    %s42 = sphi 0, %s44
    %s45 = sphi 0, %s42
    %s46 = sphi 0, %s45
    %s62 = sphi 0, %s46
    %s66 = sphi 0, %s66
    %s68 = sphi 0, %s66
    %s69 = sphi 0, %s68
    %s83 = sphi 0, %s69
    %s87 = sphi 0, %s87
    %s89 = sphi 0, %s87
    %s90 = sphi 0, %s89
    %s104 = sphi 0, %s90
    %s108 = sphi 0, %s108
    %s110 = sphi 0, %s108
    %s111 = sphi 0, %s110
    %s125 = sphi 0, %s111
    %s129 = sphi 0, %s129
    %s131 = sphi 0, %s129
    %s132 = sphi 0, %s131
    %s146 = sphi 0, %s132
    %s150 = sphi 0, %s150
    %s152 = sphi 0, %s150
    %s153 = sphi 0, %s152
    %s167 = sphi 0, %s153
    %s171 = sphi 0, %s171
    %s173 = sphi 0, %s171
    %s174 = sphi 0, %s173
    %s188 = sphi 0, %s174
    %s192 = sphi 0, %s192
    %s194 = sphi 0, %s192
    %s195 = sphi 0, %s194
    %s209 = sphi 0, %s195
    %s213 = sphi 0, %s213
    %s215 = sphi 0, %s213
    %s216 = sphi 0, %s215
    %s230 = sphi 0, %s216
    %s234 = sphi 0, %s234
    %s236 = sphi 0, %s234
    %s237 = sphi 0, %s236
    %s251 = sphi 0, %s237
    %s259 = sphi 0, %s261
    %s262 = sphi 0, %s259
    %s263 = sphi 0, %s262
    %s279 = sphi 0, %s263
    %s287 = sphi 0, %s289
    %s290 = sphi 0, %s287
    %s291 = sphi 0, %s290
    %s307 = sphi 0, %s291
    %s315 = sphi 0, %s317
    %s318 = sphi 0, %s315
    %s319 = sphi 0, %s318
    %s335 = sphi 0, %s319
    %s343 = sphi 0, %s345
    %s346 = sphi 0, %s343
    %s347 = sphi 0, %s346
    %s363 = sphi 0, %s347
  $region4: #{tpu_custom_call.1} parent=0 // loop_header_branch
    %23 = sbr.rel (%p21) target = $region8
  $region5: #{tpu_custom_call.1} parent=0 // loop_body
    %s25 = ssub.s32 %s20, 1
    %s26 = ssub.s32 %s20, 2
    %s33 = sadd.s32 1, %s28
    %p34 = scmp.ge.s32.totalorder %s33, 2
    %s35 = scalar_select %p34, 0, %s33
    %s36 = sadd.s32 1, %s27
    %s37 = scalar_select %p34, %s36, %s27
    %p38 = scmp.ge.s32.totalorder %s37, 2
    %s39 = scalar_select %p38, 0, %s37
    %s40 = ssub.s32 %s27, %s39
    %p41 = scmp.eq.s32.totalorder %s40, 0
    %s43 = sadd.s32 %s42, 1
    %s44 = scalar_select %p41, %s42, %s43
    %p47 = pneg %p41
    %p48 = scmp.eq.s32.totalorder %s20, 3
    %p49 = por %p47, %p48
    %p50 = scmp.ne.s32.totalorder %s42, %s45
    %p51 = scmp.eq.s32.totalorder %s20, 0
    %p52 = por %p50, %p51
    %p53 = scmp.ne.s32.totalorder %s42, %s45
    %p54 = scmp.eq.s32.totalorder %s25, 3
    %p55 = por %p53, %p54
    %p56 = scmp.ne.s32.totalorder %s45, %s46
    %p57 = scmp.eq.s32.totalorder %s25, 0
    %p58 = por %p56, %p57
    %p59 = scmp.ne.s32.totalorder %s45, %s46
    %p60 = scmp.eq.s32.totalorder %s26, 3
    %p61 = por %p59, %p60
    %p63 = scmp.ne.s32.totalorder %s46, %s62
    %p64 = scmp.eq.s32.totalorder %s26, 0
    %p65 = por %p63, %p64
    %s67 = sadd.s32 %s66, 1
    %p70 = scmp.eq.s32.totalorder %s20, 3
    %p71 = scmp.ne.s32.totalorder %s66, %s68
    %p72 = scmp.eq.s32.totalorder %s20, 0
    %p73 = por %p71, %p72
    %p74 = scmp.ne.s32.totalorder %s66, %s68
    %p75 = scmp.eq.s32.totalorder %s25, 3
    %p76 = por %p74, %p75
    %p77 = scmp.ne.s32.totalorder %s68, %s69
    %p78 = scmp.eq.s32.totalorder %s25, 0
    %p79 = por %p77, %p78
    %p80 = scmp.ne.s32.totalorder %s68, %s69
    %p81 = scmp.eq.s32.totalorder %s26, 3
    %p82 = por %p80, %p81
    %p84 = scmp.ne.s32.totalorder %s69, %s83
    %p85 = scmp.eq.s32.totalorder %s26, 0
    %p86 = por %p84, %p85
    %s88 = sadd.s32 %s87, 1
    %p91 = scmp.eq.s32.totalorder %s20, 3
    %p92 = scmp.ne.s32.totalorder %s87, %s89
    %p93 = scmp.eq.s32.totalorder %s20, 0
    %p94 = por %p92, %p93
    %p95 = scmp.ne.s32.totalorder %s87, %s89
    %p96 = scmp.eq.s32.totalorder %s25, 3
    %p97 = por %p95, %p96
    %p98 = scmp.ne.s32.totalorder %s89, %s90
    %p99 = scmp.eq.s32.totalorder %s25, 0
    %p100 = por %p98, %p99
    %p101 = scmp.ne.s32.totalorder %s89, %s90
    %p102 = scmp.eq.s32.totalorder %s26, 3
    %p103 = por %p101, %p102
    %p105 = scmp.ne.s32.totalorder %s90, %s104
    %p106 = scmp.eq.s32.totalorder %s26, 0
    %p107 = por %p105, %p106
    %s109 = sadd.s32 %s108, 1
    %p112 = scmp.eq.s32.totalorder %s20, 3
    %p113 = scmp.ne.s32.totalorder %s108, %s110
    %p114 = scmp.eq.s32.totalorder %s20, 0
    %p115 = por %p113, %p114
    %p116 = scmp.ne.s32.totalorder %s108, %s110
    %p117 = scmp.eq.s32.totalorder %s25, 3
    %p118 = por %p116, %p117
    %p119 = scmp.ne.s32.totalorder %s110, %s111
    %p120 = scmp.eq.s32.totalorder %s25, 0
    %p121 = por %p119, %p120
    %p122 = scmp.ne.s32.totalorder %s110, %s111
    %p123 = scmp.eq.s32.totalorder %s26, 3
    %p124 = por %p122, %p123
    %p126 = scmp.ne.s32.totalorder %s111, %s125
    %p127 = scmp.eq.s32.totalorder %s26, 0
    %p128 = por %p126, %p127
    %s130 = sadd.s32 %s129, 1
    %p133 = scmp.eq.s32.totalorder %s20, 3
    %p134 = scmp.ne.s32.totalorder %s129, %s131
    %p135 = scmp.eq.s32.totalorder %s20, 0
    %p136 = por %p134, %p135
    %p137 = scmp.ne.s32.totalorder %s129, %s131
    %p138 = scmp.eq.s32.totalorder %s25, 3
    %p139 = por %p137, %p138
    %p140 = scmp.ne.s32.totalorder %s131, %s132
    %p141 = scmp.eq.s32.totalorder %s25, 0
    %p142 = por %p140, %p141
    %p143 = scmp.ne.s32.totalorder %s131, %s132
    %p144 = scmp.eq.s32.totalorder %s26, 3
    %p145 = por %p143, %p144
    %p147 = scmp.ne.s32.totalorder %s132, %s146
    %p148 = scmp.eq.s32.totalorder %s26, 0
    %p149 = por %p147, %p148
    %s151 = sadd.s32 %s150, 1
    %p154 = scmp.eq.s32.totalorder %s20, 3
    %p155 = scmp.ne.s32.totalorder %s150, %s152
    %p156 = scmp.eq.s32.totalorder %s20, 0
    %p157 = por %p155, %p156
    %p158 = scmp.ne.s32.totalorder %s150, %s152
    %p159 = scmp.eq.s32.totalorder %s25, 3
    %p160 = por %p158, %p159
    %p161 = scmp.ne.s32.totalorder %s152, %s153
    %p162 = scmp.eq.s32.totalorder %s25, 0
    %p163 = por %p161, %p162
    %p164 = scmp.ne.s32.totalorder %s152, %s153
    %p165 = scmp.eq.s32.totalorder %s26, 3
    %p166 = por %p164, %p165
    %p168 = scmp.ne.s32.totalorder %s153, %s167
    %p169 = scmp.eq.s32.totalorder %s26, 0
    %p170 = por %p168, %p169
    %s172 = sadd.s32 %s171, 1
    %p175 = scmp.eq.s32.totalorder %s20, 3
    %p176 = scmp.ne.s32.totalorder %s171, %s173
    %p177 = scmp.eq.s32.totalorder %s20, 0
    %p178 = por %p176, %p177
    %p179 = scmp.ne.s32.totalorder %s171, %s173
    %p180 = scmp.eq.s32.totalorder %s25, 3
    %p181 = por %p179, %p180
    %p182 = scmp.ne.s32.totalorder %s173, %s174
    %p183 = scmp.eq.s32.totalorder %s25, 0
    %p184 = por %p182, %p183
    %p185 = scmp.ne.s32.totalorder %s173, %s174
    %p186 = scmp.eq.s32.totalorder %s26, 3
    %p187 = por %p185, %p186
    %p189 = scmp.ne.s32.totalorder %s174, %s188
    %p190 = scmp.eq.s32.totalorder %s26, 0
    %p191 = por %p189, %p190
    %s193 = sadd.s32 %s192, 1
    %p196 = scmp.eq.s32.totalorder %s20, 3
    %p197 = scmp.ne.s32.totalorder %s192, %s194
    %p198 = scmp.eq.s32.totalorder %s20, 0
    %p199 = por %p197, %p198
    %p200 = scmp.ne.s32.totalorder %s192, %s194
    %p201 = scmp.eq.s32.totalorder %s25, 3
    %p202 = por %p200, %p201
    %p203 = scmp.ne.s32.totalorder %s194, %s195
    %p204 = scmp.eq.s32.totalorder %s25, 0
    %p205 = por %p203, %p204
    %p206 = scmp.ne.s32.totalorder %s194, %s195
    %p207 = scmp.eq.s32.totalorder %s26, 3
    %p208 = por %p206, %p207
    %p210 = scmp.ne.s32.totalorder %s195, %s209
    %p211 = scmp.eq.s32.totalorder %s26, 0
    %p212 = por %p210, %p211
    %s214 = sadd.s32 %s213, 1
    %p217 = scmp.eq.s32.totalorder %s20, 3
    %p218 = scmp.ne.s32.totalorder %s213, %s215
    %p219 = scmp.eq.s32.totalorder %s20, 0
    %p220 = por %p218, %p219
    %p221 = scmp.ne.s32.totalorder %s213, %s215
    %p222 = scmp.eq.s32.totalorder %s25, 3
    %p223 = por %p221, %p222
    %p224 = scmp.ne.s32.totalorder %s215, %s216
    %p225 = scmp.eq.s32.totalorder %s25, 0
    %p226 = por %p224, %p225
    %p227 = scmp.ne.s32.totalorder %s215, %s216
    %p228 = scmp.eq.s32.totalorder %s26, 3
    %p229 = por %p227, %p228
    %p231 = scmp.ne.s32.totalorder %s216, %s230
    %p232 = scmp.eq.s32.totalorder %s26, 0
    %p233 = por %p231, %p232
    %s235 = sadd.s32 %s234, 1
    %p238 = scmp.eq.s32.totalorder %s20, 3
    %p239 = scmp.ne.s32.totalorder %s234, %s236
    %p240 = scmp.eq.s32.totalorder %s20, 0
    %p241 = por %p239, %p240
    %p242 = scmp.ne.s32.totalorder %s234, %s236
    %p243 = scmp.eq.s32.totalorder %s25, 3
    %p244 = por %p242, %p243
    %p245 = scmp.ne.s32.totalorder %s236, %s237
    %p246 = scmp.eq.s32.totalorder %s25, 0
    %p247 = por %p245, %p246
    %p248 = scmp.ne.s32.totalorder %s236, %s237
    %p249 = scmp.eq.s32.totalorder %s26, 3
    %p250 = por %p248, %p249
    %p252 = scmp.ne.s32.totalorder %s237, %s251
    %p253 = scmp.eq.s32.totalorder %s26, 0
    %p254 = por %p252, %p253
    %s255 = ssub.s32 %s27, %s39
    %s256 = ssub.s32 %s28, %s35
    %s257 = sor.u32 %s255, %s256
    %p258 = scmp.eq.s32.totalorder %s257, 0
    %s260 = sadd.s32 %s259, 1
    %s261 = scalar_select %p258, %s259, %s260
    %p264 = pneg %p258
    %p265 = scmp.eq.s32.totalorder %s20, 3
    %p266 = por %p264, %p265
    %p267 = scmp.ne.s32.totalorder %s259, %s262
    %p268 = scmp.eq.s32.totalorder %s20, 0
    %p269 = por %p267, %p268
    %p270 = scmp.ne.s32.totalorder %s259, %s262
    %p271 = scmp.eq.s32.totalorder %s25, 3
    %p272 = por %p270, %p271
    %p273 = scmp.ne.s32.totalorder %s262, %s263
    %p274 = scmp.eq.s32.totalorder %s25, 0
    %p275 = por %p273, %p274
    %p276 = scmp.ne.s32.totalorder %s262, %s263
    %p277 = scmp.eq.s32.totalorder %s26, 3
    %p278 = por %p276, %p277
    %p280 = scmp.ne.s32.totalorder %s263, %s279
    %p281 = scmp.eq.s32.totalorder %s26, 0
    %p282 = por %p280, %p281
    %s283 = ssub.s32 %s27, %s39
    %s284 = ssub.s32 %s28, %s35
    %s285 = sor.u32 %s283, %s284
    %p286 = scmp.eq.s32.totalorder %s285, 0
    %s288 = sadd.s32 %s287, 1
    %s289 = scalar_select %p286, %s287, %s288
    %p292 = pneg %p286
    %p293 = scmp.eq.s32.totalorder %s20, 3
    %p294 = por %p292, %p293
    %p295 = scmp.ne.s32.totalorder %s287, %s290
    %p296 = scmp.eq.s32.totalorder %s20, 0
    %p297 = por %p295, %p296
    %p298 = scmp.ne.s32.totalorder %s287, %s290
    %p299 = scmp.eq.s32.totalorder %s25, 3
    %p300 = por %p298, %p299
    %p301 = scmp.ne.s32.totalorder %s290, %s291
    %p302 = scmp.eq.s32.totalorder %s25, 0
    %p303 = por %p301, %p302
    %p304 = scmp.ne.s32.totalorder %s290, %s291
    %p305 = scmp.eq.s32.totalorder %s26, 3
    %p306 = por %p304, %p305
    %p308 = scmp.ne.s32.totalorder %s291, %s307
    %p309 = scmp.eq.s32.totalorder %s26, 0
    %p310 = por %p308, %p309
    %s311 = ssub.s32 %s27, %s39
    %s312 = ssub.s32 %s28, %s35
    %s313 = sor.u32 %s311, %s312
    %p314 = scmp.eq.s32.totalorder %s313, 0
    %s316 = sadd.s32 %s315, 1
    %s317 = scalar_select %p314, %s315, %s316
    %p320 = pneg %p314
    %p321 = scmp.eq.s32.totalorder %s20, 3
    %p322 = por %p320, %p321
    %p323 = scmp.ne.s32.totalorder %s315, %s318
    %p324 = scmp.eq.s32.totalorder %s20, 0
    %p325 = por %p323, %p324
    %p326 = scmp.ne.s32.totalorder %s315, %s318
    %p327 = scmp.eq.s32.totalorder %s25, 3
    %p328 = por %p326, %p327
    %p329 = scmp.ne.s32.totalorder %s318, %s319
    %p330 = scmp.eq.s32.totalorder %s25, 0
    %p331 = por %p329, %p330
    %p332 = scmp.ne.s32.totalorder %s318, %s319
    %p333 = scmp.eq.s32.totalorder %s26, 3
    %p334 = por %p332, %p333
    %p336 = scmp.ne.s32.totalorder %s319, %s335
    %p337 = scmp.eq.s32.totalorder %s26, 0
    %p338 = por %p336, %p337
    %s339 = ssub.s32 %s27, %s39
    %s340 = ssub.s32 %s28, %s35
    %s341 = sor.u32 %s339, %s340
    %p342 = scmp.eq.s32.totalorder %s341, 0
    %s344 = sadd.s32 %s343, 1
    %s345 = scalar_select %p342, %s343, %s344
    %p348 = pneg %p342
    %p349 = scmp.eq.s32.totalorder %s20, 3
    %p350 = por %p348, %p349
    %p351 = scmp.ne.s32.totalorder %s343, %s346
    %p352 = scmp.eq.s32.totalorder %s20, 0
    %p353 = por %p351, %p352
    %p354 = scmp.ne.s32.totalorder %s343, %s346
    %p355 = scmp.eq.s32.totalorder %s25, 3
    %p356 = por %p354, %p355
    %p357 = scmp.ne.s32.totalorder %s346, %s347
    %p358 = scmp.eq.s32.totalorder %s25, 0
    %p359 = por %p357, %p358
    %p360 = scmp.ne.s32.totalorder %s346, %s347
    %p361 = scmp.eq.s32.totalorder %s26, 3
    %p362 = por %p360, %p361
    %p364 = scmp.ne.s32.totalorder %s347, %s363
    %p365 = scmp.eq.s32.totalorder %s26, 0
    %p366 = por %p364, %p365
    %p367 = scmp.le.s32.totalorder 1, %s20
    %p368 = scmp.lt.s32.totalorder %s20, 5
    %p369 = pnand %p367, %p368
    %p370 = pneg %p369
    // Predicated region
    $region9: #{tpu_custom_call.1} parent=5 // pred_check
      _
    $region10: #{tpu_custom_call.1} parent=5 // pred_check_branch
      %372 = sbr.rel (%p369) target = $region12
    $region11: #{tpu_custom_call.1} parent=5 // pred_region
      %s373 = ssub.s32 %s20, 1
      // Predicated region
      $region13: #{tpu_custom_call.1} parent=11 // pred_check
        %p374 = pneg %p79
      $region14: #{tpu_custom_call.1} parent=11 // pred_check_branch
        %376 = sbr.rel (%p374) target = $region16
      $region15: #{tpu_custom_call.1} parent=11 // pred_region
        _
      $region16: #{tpu_custom_call.1} parent=11 // pred_fallthru
        _
      // Predicated region
      $region17: #{tpu_custom_call.1} parent=11 // pred_check
        %p377 = pneg %p100
      $region18: #{tpu_custom_call.1} parent=11 // pred_check_branch
        %379 = sbr.rel (%p377) target = $region20
      $region19: #{tpu_custom_call.1} parent=11 // pred_region
        _
      $region20: #{tpu_custom_call.1} parent=11 // pred_fallthru
        _
      // Predicated region
      $region21: #{tpu_custom_call.1} parent=11 // pred_check
        %p380 = pneg %p121
      $region22: #{tpu_custom_call.1} parent=11 // pred_check_branch
        %382 = sbr.rel (%p380) target = $region24
      $region23: #{tpu_custom_call.1} parent=11 // pred_region
        _
      $region24: #{tpu_custom_call.1} parent=11 // pred_fallthru
        _
      // Predicated region
      $region25: #{tpu_custom_call.1} parent=11 // pred_check
        %p383 = pneg %p142
      $region26: #{tpu_custom_call.1} parent=11 // pred_check_branch
        %385 = sbr.rel (%p383) target = $region28
      $region27: #{tpu_custom_call.1} parent=11 // pred_region
        _
      $region28: #{tpu_custom_call.1} parent=11 // pred_fallthru
        _
      // Predicated region
      $region29: #{tpu_custom_call.1} parent=11 // pred_check
        %p386 = pneg %p163
      $region30: #{tpu_custom_call.1} parent=11 // pred_check_branch
        %388 = sbr.rel (%p386) target = $region32
      $region31: #{tpu_custom_call.1} parent=11 // pred_region
        _
      $region32: #{tpu_custom_call.1} parent=11 // pred_fallthru
        _
      // Predicated region
      $region33: #{tpu_custom_call.1} parent=11 // pred_check
        %p389 = pneg %p184
      $region34: #{tpu_custom_call.1} parent=11 // pred_check_branch
        %391 = sbr.rel (%p389) target = $region36
      $region35: #{tpu_custom_call.1} parent=11 // pred_region
        _
      $region36: #{tpu_custom_call.1} parent=11 // pred_fallthru
        _
      // Predicated region
      $region37: #{tpu_custom_call.1} parent=11 // pred_check
        %p392 = pneg %p205
      $region38: #{tpu_custom_call.1} parent=11 // pred_check_branch
        %394 = sbr.rel (%p392) target = $region40
      $region39: #{tpu_custom_call.1} parent=11 // pred_region
        _
      $region40: #{tpu_custom_call.1} parent=11 // pred_fallthru
        _
      // Predicated region
      $region41: #{tpu_custom_call.1} parent=11 // pred_check
        %p395 = pneg %p226
      $region42: #{tpu_custom_call.1} parent=11 // pred_check_branch
        %397 = sbr.rel (%p395) target = $region44
      $region43: #{tpu_custom_call.1} parent=11 // pred_region
        _
      $region44: #{tpu_custom_call.1} parent=11 // pred_fallthru
        _
      // Predicated region
      $region45: #{tpu_custom_call.1} parent=11 // pred_check
        %p398 = pneg %p247
      $region46: #{tpu_custom_call.1} parent=11 // pred_check_branch
        %400 = sbr.rel (%p398) target = $region48
      $region47: #{tpu_custom_call.1} parent=11 // pred_region
        _
      $region48: #{tpu_custom_call.1} parent=11 // pred_fallthru
        _
    $region12: #{tpu_custom_call.1} parent=5 // pred_fallthru
      _
    %p401 = scmp.lt.s32.totalorder %s20, 4
    // Predicated region
    $region49: #{tpu_custom_call.1} parent=5 // pred_check
      %p402 = pneg %p401
    $region50: #{tpu_custom_call.1} parent=5 // pred_check_branch
      %404 = sbr.rel (%p402) target = $region52
    $region51: #{tpu_custom_call.1} parent=5 // pred_region
      // Predicated region
      $region53: #{tpu_custom_call.1} parent=51 // pred_check
        %p405 = pneg %p52
      $region54: #{tpu_custom_call.1} parent=51 // pred_check_branch
        %407 = sbr.rel (%p405) target = $region56
      $region55: #{tpu_custom_call.1} parent=51 // pred_region
        %p408 = scmp.lt.s32.totalorder %s27, 1
        %s409 = scalar_select %p408, %s27, 1
        %s410 = smul.addr %s409, 32
        %s411 = smul.addr %s410, 8
        %s412 = scalar_lea.vmem %s0, %s411
      $region56: #{tpu_custom_call.1} parent=51 // pred_fallthru
        _
    $region52: #{tpu_custom_call.1} parent=5 // pred_fallthru
      _
    %p413 = scmp.le.s32.totalorder 1, %s20
    %p414 = scmp.lt.s32.totalorder %s20, 5
    %p415 = pnand %p413, %p414
    %p416 = pneg %p415
    // Predicated region
    $region57: #{tpu_custom_call.1} parent=5 // pred_check
      _
    $region58: #{tpu_custom_call.1} parent=5 // pred_check_branch
      %418 = sbr.rel (%p415) target = $region60
    $region59: #{tpu_custom_call.1} parent=5 // pred_region
      %s419 = ssub.s32 %s20, 1
      %p420 = scmp.lt.s32.totalorder %s29, 1
      %s421 = scalar_select %p420, %s29, 1
      %s422 = smul.addr %s421, 32
      %s423 = smul.addr %s422, 8
      %s424 = scalar_lea.vmem %s0, %s423
      %p425 = pneg %p58
      %p426 = pneg %p55
      %p427 = pneg %p79
      %p428 = pneg %p76
      %p429 = pneg %p100
      %p430 = pneg %p97
      %p431 = pneg %p121
      %p432 = pneg %p118
      %p433 = pneg %p142
      %p434 = pneg %p139
      %p435 = pneg %p163
      %p436 = pneg %p160
      %p437 = pneg %p184
      %p438 = pneg %p181
      %p439 = pneg %p205
      %p440 = pneg %p202
      %p441 = pneg %p226
      %p442 = pneg %p223
      %p443 = pneg %p247
      %p444 = pneg %p244
      %p445 = pneg %p275
      %p446 = pneg %p272
      %s447 = smul.u32 16, %s30
      %p448 = scmp.lt.s32.totalorder %s29, 1
      %s449 = scalar_select %p448, %s29, 1
      %p450 = scmp.lt.s32.totalorder %s447, 31
      %s451 = scalar_select %p450, %s447, 31
      %s452 = smul.addr %s449, 32
      %s453 = sadd.s32 %s451, %s452
      %s454 = smul.addr %s453, 8
      %s455 = scalar_lea.vmem %s10, %s454
      %p456 = pneg %p303
      %p457 = pneg %p300
      %s458 = smul.u32 16, %s30
      %p459 = scmp.lt.s32.totalorder %s29, 1
      %s460 = scalar_select %p459, %s29, 1
      %p461 = scmp.lt.s32.totalorder %s458, 31
      %s462 = scalar_select %p461, %s458, 31
      %s463 = smul.addr %s460, 32
      %s464 = sadd.s32 %s462, %s463
      %s465 = smul.addr %s464, 4
      %s466 = scalar_lea.vmem %s11, %s465
      %p467 = pneg %p331
      %p468 = pneg %p328
      %s469 = smul.u32 16, %s30
      %p470 = scmp.lt.s32.totalorder %s29, 1
      %s471 = scalar_select %p470, %s29, 1
      %p472 = scmp.lt.s32.totalorder %s469, 31
      %s473 = scalar_select %p472, %s469, 31
      %s474 = smul.addr %s471, 32
      %s475 = sadd.s32 %s473, %s474
      %s476 = smul.addr %s475, 8
      %s477 = scalar_lea.vmem %s12, %s476
      %p478 = pneg %p359
      %p479 = pneg %p356
      %s480 = smul.u32 16, %s30
      %p481 = scmp.lt.s32.totalorder %s29, 1
      %s482 = scalar_select %p481, %s29, 1
      %p483 = scmp.lt.s32.totalorder %s480, 31
      %s484 = scalar_select %p483, %s480, 31
      %s485 = smul.addr %s482, 32
      %s486 = sadd.s32 %s484, %s485
      %s487 = smul.addr %s486, 4
      %s488 = scalar_lea.vmem %s13, %s487
      %p489 = scmp.lt.s32.totalorder %s29, 1
      %s490 = scalar_select %p489, %s29, 1
      %s491 = smul.addr %s490, 32
      %s492 = smul.addr %s491, 8
      %s493 = scalar_lea.vmem %s0, %s492
      %s494 = smul.u32 16, %s30
      %p495 = scmp.lt.s32.totalorder %s29, 1
      %s496 = scalar_select %p495, %s29, 1
      %p497 = scmp.lt.s32.totalorder %s494, 31
      %s498 = scalar_select %p497, %s494, 31
      %s499 = smul.addr %s496, 32
      %s500 = sadd.s32 %s498, %s499
      %s501 = smul.addr %s500, 8
      %s502 = scalar_lea.vmem %s10, %s501
      %s503 = smul.u32 16, %s30
      %s504 = smul.u32 16, %s30
      %p505 = scmp.lt.s32.totalorder %s29, 1
      %s506 = scalar_select %p505, %s29, 1
      %p507 = scmp.lt.s32.totalorder %s504, 31
      %s508 = scalar_select %p507, %s504, 31
      %s509 = smul.addr %s506, 32
      %s510 = sadd.s32 %s508, %s509
      %s511 = smul.addr %s510, 4
      %s512 = scalar_lea.vmem %s11, %s511
      %s513 = smul.u32 16, %s30
      %s514 = smul.u32 16, %s30
      %p515 = scmp.lt.s32.totalorder %s29, 1
      %s516 = scalar_select %p515, %s29, 1
      %p517 = scmp.lt.s32.totalorder %s514, 31
      %s518 = scalar_select %p517, %s514, 31
      %s519 = smul.addr %s516, 32
      %s520 = sadd.s32 %s518, %s519
      %s521 = smul.addr %s520, 8
      %s522 = scalar_lea.vmem %s12, %s521
      %s523 = smul.u32 16, %s30
      %s524 = smul.u32 16, %s30
      %p525 = scmp.lt.s32.totalorder %s29, 1
      %s526 = scalar_select %p525, %s29, 1
      %p527 = scmp.lt.s32.totalorder %s524, 31
      %s528 = scalar_select %p527, %s524, 31
      %s529 = smul.addr %s526, 32
      %s530 = sadd.s32 %s528, %s529
      %s531 = smul.addr %s530, 4
      %s532 = scalar_lea.vmem %s13, %s531
      %s533 = smul.u32 16, %s30
      %s537 = smul.u32 %s30, 128
      %s538 = scalar_lea.vmem %s493, %s537
      %v539 = vld [vmem:[%s538] sm:$0xff]
      %v540 = vld [vmem:[%s538 + $0x8] sm:$0xff]
      %v541 = vld [vmem:[%s538 + $0x10] sm:$0xff]
      %v542 = vld [vmem:[%s538 + $0x18] sm:$0xff]
      %v543 = vld [vmem:[%s538 + $0x20] sm:$0xff]
      %v544 = vld [vmem:[%s538 + $0x28] sm:$0xff]
      %v545 = vld [vmem:[%s538 + $0x30] sm:$0xff]
      %v546 = vld [vmem:[%s538 + $0x38] sm:$0xff]
      %v547 = vld [vmem:[%s538 + $0x40] sm:$0xff]
      %v548 = vld [vmem:[%s538 + $0x48] sm:$0xff]
      %v549 = vld [vmem:[%s538 + $0x50] sm:$0xff]
      %v550 = vld [vmem:[%s538 + $0x58] sm:$0xff]
      %v551 = vld [vmem:[%s538 + $0x60] sm:$0xff]
      %v552 = vld [vmem:[%s538 + $0x68] sm:$0xff]
      %v553 = vld [vmem:[%s538 + $0x70] sm:$0xff]
      %v554 = vld [vmem:[%s538 + $0x78] sm:$0xff]
      %v555 = vpack.c.bf16 %v540, %v539
      %v556 = vpack.c.bf16 %v542, %v541
      %v557 = vpack.c.bf16 %v544, %v543
      %v558 = vpack.c.bf16 %v546, %v545
      %v559 = vpack.c.bf16 %v548, %v547
      %v560 = vpack.c.bf16 %v550, %v549
      %v561 = vpack.c.bf16 %v552, %v551
      %v562 = vpack.c.bf16 %v554, %v553
      %v563 = vld [vmem:[%s1] sm:$0xf]
      %v564 = vld [vmem:[%s1 + $0x4] sm:$0xf]
      %v567 = vunpack.c.l.b16 %v563
      %v568 = vunpack.c.l.b16 %v564
      %v569 = vpack.c.b16 %v568, %v567
      %vm571 = vcmask 130048
      %v573 = vsel %vm571, %v555, 0
      %v576 = vsel %vm571, %v556, 0
      %v579 = vsel %vm571, %v557, 0
      %v582 = vsel %vm571, %v558, 0
      %v585 = vsel %vm571, %v559, 0
      %v588 = vsel %vm571, %v560, 0
      %v591 = vsel %vm571, %v561, 0
      %v594 = vsel %vm571, %v562, 0
      %596 = vmatpush.bf16.msra.mxu0 0
      %597 = vmatpush.bf16.msra.mxu0 0
      %598 = vmatpush.bf16.msra.mxu0 0
      %599 = vmatpush.bf16.msra.mxu0 0
      %600 = vmatpush.bf16.msra.mxu0 0
      %601 = vmatpush.bf16.msra.mxu0 0
      %602 = vmatpush.bf16.msra.mxu0 0
      %603 = vmatpush.bf16.msra.mxu0 %v569
      %604 = vmatmul.bf16.gmra.mxu0 %v573
      %v605 = vpop.f32.mrf.mxu0
      %v606 = vadd.f32 0.0, %v605
      %v607 = vpop.f32.mrf.mxu0
      %v608 = vadd.f32 0.0, %v607
      %609 = vmatmul.bf16.gmra.mxu0 %v576
      %v610 = vpop.f32.mrf.mxu0
      %v611 = vadd.f32 0.0, %v610
      %v612 = vpop.f32.mrf.mxu0
      %v613 = vadd.f32 0.0, %v612
      %614 = vmatmul.bf16.gmra.mxu0 %v579
      %v615 = vpop.f32.mrf.mxu0
      %v616 = vadd.f32 0.0, %v615
      %v617 = vpop.f32.mrf.mxu0
      %v618 = vadd.f32 0.0, %v617
      %619 = vmatmul.bf16.gmra.mxu0 %v582
      %v620 = vpop.f32.mrf.mxu0
      %v621 = vadd.f32 0.0, %v620
      %v622 = vpop.f32.mrf.mxu0
      %v623 = vadd.f32 0.0, %v622
      %624 = vmatmul.bf16.gmra.mxu0 %v585
      %v625 = vpop.f32.mrf.mxu0
      %v626 = vadd.f32 0.0, %v625
      %v627 = vpop.f32.mrf.mxu0
      %v628 = vadd.f32 0.0, %v627
      %629 = vmatmul.bf16.gmra.mxu0 %v588
      %v630 = vpop.f32.mrf.mxu0
      %v631 = vadd.f32 0.0, %v630
      %v632 = vpop.f32.mrf.mxu0
      %v633 = vadd.f32 0.0, %v632
      %634 = vmatmul.bf16.gmra.mxu0 %v591
      %v635 = vpop.f32.mrf.mxu0
      %v636 = vadd.f32 0.0, %v635
      %v637 = vpop.f32.mrf.mxu0
      %v638 = vadd.f32 0.0, %v637
      %639 = vmatmul.bf16.gmra.mxu0 %v594
      %v640 = vpop.f32.mrf.mxu0
      %v641 = vadd.f32 0.0, %v640
      %v642 = vpop.f32.mrf.mxu0
      %v643 = vadd.f32 0.0, %v642
      %644 = vdwg.mxu0
      %v645 = vld [vmem:[%s2] sm:$0x1]
      %v647 = vperm.slane %v645, 0
      %v649 = vmul.f32 %v606, %v647
      %v650 = vmul.f32 %v608, %v647
      %v651 = vmul.f32 %v611, %v647
      %v652 = vmul.f32 %v613, %v647
      %v653 = vmul.f32 %v616, %v647
      %v654 = vmul.f32 %v618, %v647
      %v655 = vmul.f32 %v621, %v647
      %v656 = vmul.f32 %v623, %v647
      %v657 = vmul.f32 %v626, %v647
      %v658 = vmul.f32 %v628, %v647
      %v659 = vmul.f32 %v631, %v647
      %v660 = vmul.f32 %v633, %v647
      %v661 = vmul.f32 %v636, %v647
      %v662 = vmul.f32 %v638, %v647
      %v663 = vmul.f32 %v641, %v647
      %v664 = vmul.f32 %v643, %v647
      %v665 = vld [vmem:[%s3] sm:$0x1]
      %v667 = vperm.slane %v665, 0
      %v669 = vadd.f32 %v649, %v667
      %v670 = vadd.f32 %v650, %v667
      %v671 = vadd.f32 %v651, %v667
      %v672 = vadd.f32 %v652, %v667
      %v673 = vadd.f32 %v653, %v667
      %v674 = vadd.f32 %v654, %v667
      %v675 = vadd.f32 %v655, %v667
      %v676 = vadd.f32 %v656, %v667
      %v677 = vadd.f32 %v657, %v667
      %v678 = vadd.f32 %v658, %v667
      %v679 = vadd.f32 %v659, %v667
      %v680 = vadd.f32 %v660, %v667
      %v681 = vadd.f32 %v661, %v667
      %v682 = vadd.f32 %v662, %v667
      %v683 = vadd.f32 %v663, %v667
      %v684 = vadd.f32 %v664, %v667
      %vm685 = vcmp.ge.f32.partialorder %v669, 1.0
      %vm686 = vcmp.ge.f32.partialorder %v670, 1.0
      %vm687 = vcmp.ge.f32.partialorder %v671, 1.0
      %vm688 = vcmp.ge.f32.partialorder %v672, 1.0
      %vm689 = vcmp.ge.f32.partialorder %v673, 1.0
      %vm690 = vcmp.ge.f32.partialorder %v674, 1.0
      %vm691 = vcmp.ge.f32.partialorder %v675, 1.0
      %vm692 = vcmp.ge.f32.partialorder %v676, 1.0
      %vm693 = vcmp.ge.f32.partialorder %v677, 1.0
      %vm694 = vcmp.ge.f32.partialorder %v678, 1.0
      %vm695 = vcmp.ge.f32.partialorder %v679, 1.0
      %vm696 = vcmp.ge.f32.partialorder %v680, 1.0
      %vm697 = vcmp.ge.f32.partialorder %v681, 1.0
      %vm698 = vcmp.ge.f32.partialorder %v682, 1.0
      %vm699 = vcmp.ge.f32.partialorder %v683, 1.0
      %vm700 = vcmp.ge.f32.partialorder %v684, 1.0
      %v701 = vsel %vm685, 1, 0
      %v702 = vsel %vm686, 1, 0
      %v703 = vsel %vm687, 1, 0
      %v704 = vsel %vm688, 1, 0
      %v705 = vsel %vm689, 1, 0
      %v706 = vsel %vm690, 1, 0
      %v707 = vsel %vm691, 1, 0
      %v708 = vsel %vm692, 1, 0
      %v709 = vsel %vm693, 1, 0
      %v710 = vsel %vm694, 1, 0
      %v711 = vsel %vm695, 1, 0
      %v712 = vsel %vm696, 1, 0
      %v713 = vsel %vm697, 1, 0
      %v714 = vsel %vm698, 1, 0
      %v715 = vsel %vm699, 1, 0
      %v716 = vsel %vm700, 1, 0
      %v717 = vcvt.s32.f32 %v701
      %v718 = vcvt.s32.f32 %v702
      %v719 = vcvt.s32.f32 %v703
      %v720 = vcvt.s32.f32 %v704
      %v721 = vcvt.s32.f32 %v705
      %v722 = vcvt.s32.f32 %v706
      %v723 = vcvt.s32.f32 %v707
      %v724 = vcvt.s32.f32 %v708
      %v725 = vcvt.s32.f32 %v709
      %v726 = vcvt.s32.f32 %v710
      %v727 = vcvt.s32.f32 %v711
      %v728 = vcvt.s32.f32 %v712
      %v729 = vcvt.s32.f32 %v713
      %v730 = vcvt.s32.f32 %v714
      %v731 = vcvt.s32.f32 %v715
      %v732 = vcvt.s32.f32 %v716
      %v733 = vpack.c.bf16 %v717, %v717
      %v734 = vpack.c.bf16 %v718, %v718
      %v735 = vpack.c.bf16 %v719, %v719
      %v736 = vpack.c.bf16 %v720, %v720
      %v737 = vpack.c.bf16 %v721, %v721
      %v738 = vpack.c.bf16 %v722, %v722
      %v739 = vpack.c.bf16 %v723, %v723
      %v740 = vpack.c.bf16 %v724, %v724
      %v741 = vpack.c.bf16 %v725, %v725
      %v742 = vpack.c.bf16 %v726, %v726
      %v743 = vpack.c.bf16 %v727, %v727
      %v744 = vpack.c.bf16 %v728, %v728
      %v745 = vpack.c.bf16 %v729, %v729
      %v746 = vpack.c.bf16 %v730, %v730
      %v747 = vpack.c.bf16 %v731, %v731
      %v748 = vpack.c.bf16 %v732, %v732
      %vm749 = vcmask 31744
      %750 = vst.msk [vmem:[%s502] sm:$0xff] %vm749, %v606
      %751 = vst.msk [vmem:[%s502 + $0x8] sm:$0xff] %vm749, %v608
      %752 = vst.msk [vmem:[%s502 + $0x10] sm:$0xff] %vm749, %v611
      %753 = vst.msk [vmem:[%s502 + $0x18] sm:$0xff] %vm749, %v613
      %754 = vst.msk [vmem:[%s502 + $0x20] sm:$0xff] %vm749, %v616
      %755 = vst.msk [vmem:[%s502 + $0x28] sm:$0xff] %vm749, %v618
      %756 = vst.msk [vmem:[%s502 + $0x30] sm:$0xff] %vm749, %v621
      %757 = vst.msk [vmem:[%s502 + $0x38] sm:$0xff] %vm749, %v623
      %758 = vst.msk [vmem:[%s502 + $0x40] sm:$0xff] %vm749, %v626
      %759 = vst.msk [vmem:[%s502 + $0x48] sm:$0xff] %vm749, %v628
      %760 = vst.msk [vmem:[%s502 + $0x50] sm:$0xff] %vm749, %v631
      %761 = vst.msk [vmem:[%s502 + $0x58] sm:$0xff] %vm749, %v633
      %762 = vst.msk [vmem:[%s502 + $0x60] sm:$0xff] %vm749, %v636
      %763 = vst.msk [vmem:[%s502 + $0x68] sm:$0xff] %vm749, %v638
      %764 = vst.msk [vmem:[%s502 + $0x70] sm:$0xff] %vm749, %v641
      %765 = vst.msk [vmem:[%s502 + $0x78] sm:$0xff] %vm749, %v643
      %782 = vrot.lane.b32.xlu0 %v669, 4
      %v783 = vpop.permute.xlu0 %782
      %784 = vrot.lane.b32.xlu0 %v670, 4
      %v785 = vpop.permute.xlu0 %784
      %786 = vrot.lane.b32.xlu0 %v671, 4
      %v787 = vpop.permute.xlu0 %786
      %788 = vrot.lane.b32.xlu0 %v672, 4
      %v789 = vpop.permute.xlu0 %788
      %790 = vrot.lane.b32.xlu0 %v673, 4
      %v791 = vpop.permute.xlu0 %790
      %792 = vrot.lane.b32.xlu0 %v674, 4
      %v793 = vpop.permute.xlu0 %792
      %794 = vrot.lane.b32.xlu0 %v675, 4
      %v795 = vpop.permute.xlu0 %794
      %796 = vrot.lane.b32.xlu0 %v676, 4
      %v797 = vpop.permute.xlu0 %796
      %798 = vrot.lane.b32.xlu0 %v677, 4
      %v799 = vpop.permute.xlu0 %798
      %800 = vrot.lane.b32.xlu0 %v678, 4
      %v801 = vpop.permute.xlu0 %800
      %802 = vrot.lane.b32.xlu0 %v679, 4
      %v803 = vpop.permute.xlu0 %802
      %804 = vrot.lane.b32.xlu0 %v680, 4
      %v805 = vpop.permute.xlu0 %804
      %806 = vrot.lane.b32.xlu0 %v681, 4
      %v807 = vpop.permute.xlu0 %806
      %808 = vrot.lane.b32.xlu0 %v682, 4
      %v809 = vpop.permute.xlu0 %808
      %810 = vrot.lane.b32.xlu0 %v683, 4
      %v811 = vpop.permute.xlu0 %810
      %812 = vrot.lane.b32.xlu0 %v684, 4
      %v813 = vpop.permute.xlu0 %812
      %vm830 = vcmask 64544
      %831 = vst.msk [vmem:[%s502] sm:$0xff] %vm830, %v783
      %832 = vst.msk [vmem:[%s502 + $0x8] sm:$0xff] %vm830, %v785
      %833 = vst.msk [vmem:[%s502 + $0x10] sm:$0xff] %vm830, %v787
      %834 = vst.msk [vmem:[%s502 + $0x18] sm:$0xff] %vm830, %v789
      %835 = vst.msk [vmem:[%s502 + $0x20] sm:$0xff] %vm830, %v791
      %836 = vst.msk [vmem:[%s502 + $0x28] sm:$0xff] %vm830, %v793
      %837 = vst.msk [vmem:[%s502 + $0x30] sm:$0xff] %vm830, %v795
      %838 = vst.msk [vmem:[%s502 + $0x38] sm:$0xff] %vm830, %v797
      %839 = vst.msk [vmem:[%s502 + $0x40] sm:$0xff] %vm830, %v799
      %840 = vst.msk [vmem:[%s502 + $0x48] sm:$0xff] %vm830, %v801
      %841 = vst.msk [vmem:[%s502 + $0x50] sm:$0xff] %vm830, %v803
      %842 = vst.msk [vmem:[%s502 + $0x58] sm:$0xff] %vm830, %v805
      %843 = vst.msk [vmem:[%s502 + $0x60] sm:$0xff] %vm830, %v807
      %844 = vst.msk [vmem:[%s502 + $0x68] sm:$0xff] %vm830, %v809
      %845 = vst.msk [vmem:[%s502 + $0x70] sm:$0xff] %vm830, %v811
      %846 = vst.msk [vmem:[%s502 + $0x78] sm:$0xff] %vm830, %v813
      %vm847 = vcmask 27648
      %848 = vst.msk [vmem:[%s512] sm:$0xf] %vm847, %v733
      %849 = vst.msk [vmem:[%s512 + $0x4] sm:$0xf] %vm847, %v734
      %850 = vst.msk [vmem:[%s512 + $0x8] sm:$0xf] %vm847, %v735
      %851 = vst.msk [vmem:[%s512 + $0xc] sm:$0xf] %vm847, %v736
      %852 = vst.msk [vmem:[%s512 + $0x10] sm:$0xf] %vm847, %v737
      %853 = vst.msk [vmem:[%s512 + $0x14] sm:$0xf] %vm847, %v738
      %854 = vst.msk [vmem:[%s512 + $0x18] sm:$0xf] %vm847, %v739
      %855 = vst.msk [vmem:[%s512 + $0x1c] sm:$0xf] %vm847, %v740
      %856 = vst.msk [vmem:[%s512 + $0x20] sm:$0xf] %vm847, %v741
      %857 = vst.msk [vmem:[%s512 + $0x24] sm:$0xf] %vm847, %v742
      %858 = vst.msk [vmem:[%s512 + $0x28] sm:$0xf] %vm847, %v743
      %859 = vst.msk [vmem:[%s512 + $0x2c] sm:$0xf] %vm847, %v744
      %860 = vst.msk [vmem:[%s512 + $0x30] sm:$0xf] %vm847, %v745
      %861 = vst.msk [vmem:[%s512 + $0x34] sm:$0xf] %vm847, %v746
      %862 = vst.msk [vmem:[%s512 + $0x38] sm:$0xf] %vm847, %v747
      %863 = vst.msk [vmem:[%s512 + $0x3c] sm:$0xf] %vm847, %v748
      %s864 = ssub.s32 %s537, 16
      %p865 = scmp.gt.s32.totalorder %s864, 0
      %s866 = scalar_select %p865, %s864, 0
      %s867 = sadd.s32 %s537, 128
      %p868 = scmp.lt.s32.totalorder %s867, 240
      %s869 = scalar_select %p868, %s867, 240
      %s870 = scalar_lea.vmem %s493, %s866
      %v871 = vld [vmem:[%s870] sm:$0xff]
      %v872 = vld [vmem:[%s870 + $0x8] sm:$0xff]
      %v873 = vpack.c.bf16 %v872, %v871
      %v874 = vld [vmem:[%s1] sm:$0xf]
      %v875 = vld [vmem:[%s1 + $0x4] sm:$0xf]
      %v878 = vunpack.c.l.b16 %v874
      %v879 = vunpack.c.l.b16 %v875
      %v880 = vpack.c.b16 %v879, %v878
      %v883 = vsel %vm571, %v873, 0
      %885 = vmatpush.bf16.msra.mxu0 0
      %886 = vmatpush.bf16.msra.mxu0 0
      %887 = vmatpush.bf16.msra.mxu0 0
      %888 = vmatpush.bf16.msra.mxu0 0
      %889 = vmatpush.bf16.msra.mxu0 0
      %890 = vmatpush.bf16.msra.mxu0 0
      %891 = vmatpush.bf16.msra.mxu0 0
      %892 = vmatpush.bf16.msra.mxu0 %v880
      %893 = vmatmul.bf16.gmra.mxu0 %v883
      %v894 = vpop.f32.mrf.mxu0
      %v895 = vadd.f32 0.0, %v894
      %v896 = vpop.f32.mrf.mxu0
      %v897 = vadd.f32 0.0, %v896
      %898 = vdwg.mxu0
      %v899 = vld [vmem:[%s2] sm:$0x1]
      %v901 = vperm.slane %v899, 0
      %v903 = vmul.f32 %v895, %v901
      %v904 = vmul.f32 %v897, %v901
      %v905 = vld [vmem:[%s3] sm:$0x1]
      %v907 = vperm.slane %v905, 0
      %v909 = vadd.f32 %v903, %v907
      %v910 = vadd.f32 %v904, %v907
      %s911 = scalar_lea.vmem %s493, %s869
      %v912 = vld [vmem:[%s911] sm:$0xff]
      %v913 = vld [vmem:[%s911 + $0x8] sm:$0xff]
      %v914 = vpack.c.bf16 %v913, %v912
      %v916 = vsel %vm571, %v914, 0
      %918 = vmatpush.bf16.msra.mxu0 0
      %919 = vmatpush.bf16.msra.mxu0 0
      %920 = vmatpush.bf16.msra.mxu0 0
      %921 = vmatpush.bf16.msra.mxu0 0
      %922 = vmatpush.bf16.msra.mxu0 0
      %923 = vmatpush.bf16.msra.mxu0 0
      %924 = vmatpush.bf16.msra.mxu0 0
      %925 = vmatpush.bf16.msra.mxu0 %v880
      %926 = vmatmul.bf16.gmra.mxu0 %v916
      %v927 = vpop.f32.mrf.mxu0
      %v928 = vadd.f32 0.0, %v927
      %v929 = vpop.f32.mrf.mxu0
      %v930 = vadd.f32 0.0, %v929
      %931 = vdwg.mxu0
      %v932 = vmul.f32 %v928, %v901
      %v933 = vmul.f32 %v930, %v901
      %v934 = vadd.f32 %v932, %v907
      %v935 = vadd.f32 %v933, %v907
      %vm936 = vcmp.ge.f32.partialorder %v909, 1.0
      %vm937 = vcmp.ge.f32.partialorder %v910, 1.0
      %v938 = vsel %vm936, 1, 0
      %v939 = vsel %vm937, 1, 0
      %v940 = vcvt.s32.f32 %v938
      %v941 = vcvt.s32.f32 %v939
      %v942 = vpack.c.bf16 %v940, %v940
      %v943 = vpack.c.bf16 %v941, %v941
      %p944 = scmp.gt.s32.totalorder %s30, 0
      %s945 = scalar_select %p944, 1, 0
      %s946 = scvt.s32.f32 %s945
      %p948 = scmp.ne.f32.partialorder %s946, %s946
      %s949 = sshrl.u32 %s946, 16
      %s950 = sand.u32 %s949, 1
      %s951 = sadd.s32 32767, %s950
      %s952 = sadd.s32 %s946, %s951
      %s953 = sand.u32 %s952, 4294901760
      %s954 = scalar_select %p948, 2143289344, %s953
      %s956 = sshrl.u32 %s954, 16
      %s957 = sshll.u32 %s956, 16
      %s958 = sor.u32 %s956, %s957
      %v959 = vstv %s958
      %v961 = vunpack.c.l.bf16 %v942
      %v962 = vunpack.c.l.bf16 %v943
      %v963 = vunpack.c.l.bf16 %v959
      %v964 = vmul.f32 %v961, %v963
      %v965 = vmul.f32 %v962, %v963
      %v966 = vpack.c.bf16 %v964, %v964
      %v967 = vpack.c.bf16 %v965, %v965
      %vm968 = vcmp.ge.f32.partialorder %v934, 1.0
      %vm969 = vcmp.ge.f32.partialorder %v935, 1.0
      %v970 = vsel %vm968, 1, 0
      %v971 = vsel %vm969, 1, 0
      %v972 = vcvt.s32.f32 %v970
      %v973 = vcvt.s32.f32 %v971
      %v974 = vpack.c.bf16 %v972, %v972
      %v975 = vpack.c.bf16 %v973, %v973
      %p976 = scmp.lt.s32.totalorder %s30, 1
      %s977 = scalar_select %p976, 1, 0
      %s978 = scvt.s32.f32 %s977
      %p980 = scmp.ne.f32.partialorder %s978, %s978
      %s981 = sshrl.u32 %s978, 16
      %s982 = sand.u32 %s981, 1
      %s983 = sadd.s32 32767, %s982
      %s984 = sadd.s32 %s978, %s983
      %s985 = sand.u32 %s984, 4294901760
      %s986 = scalar_select %p980, 2143289344, %s985
      %s988 = sshrl.u32 %s986, 16
      %s989 = sshll.u32 %s988, 16
      %s990 = sor.u32 %s988, %s989
      %v991 = vstv %s990
      %v993 = vunpack.c.l.bf16 %v974
      %v994 = vunpack.c.l.bf16 %v975
      %v995 = vunpack.c.l.bf16 %v991
      %v996 = vmul.f32 %v993, %v995
      %v997 = vmul.f32 %v994, %v995
      %v998 = vpack.c.bf16 %v996, %v996
      %v999 = vpack.c.bf16 %v997, %v997
      %v1000 = vlaneseq
      %v1001 = vshrl.u32 %v1000, 7
      %v1002 = vadd.s32 %v1001, 8
      %v1003 = vadd.s32 %v1001, 16
      %v1004 = vadd.s32 %v1001, 24
      %v1005 = vadd.s32 %v1001, 32
      %v1006 = vadd.s32 %v1001, 40
      %v1007 = vadd.s32 %v1001, 48
      %v1008 = vadd.s32 %v1001, 56
      %v1009 = vadd.s32 %v1001, 64
      %v1010 = vadd.s32 %v1001, 72
      %v1011 = vadd.s32 %v1001, 80
      %v1012 = vadd.s32 %v1001, 88
      %v1013 = vadd.s32 %v1001, 96
      %v1014 = vadd.s32 %v1001, 104
      %v1015 = vadd.s32 %v1001, 112
      %v1016 = vadd.s32 %v1001, 120
      %vm1017 = vcmp.lt.s32.totalorder %v1001, 0
      %v1018 = vsub.s32 0, %v1001
      %v1019 = vsel %vm1017, %v1018, %v1001
      %v1020 = vshrl.u32 %v1019, 4
      %v1021 = vand.u32 %v1019, 15
      %v1022 = vsub.s32 0, %v1021
      %v1023 = vsel %vm1017, %v1022, %v1021
      %vm1024 = vcmp.lt.s32.totalorder %v1002, 0
      %v1025 = vsub.s32 0, %v1002
      %v1026 = vsel %vm1024, %v1025, %v1002
      %v1027 = vshrl.u32 %v1026, 4
      %v1028 = vand.u32 %v1026, 15
      %v1029 = vsub.s32 0, %v1028
      %v1030 = vsel %vm1024, %v1029, %v1028
      %vm1031 = vcmp.lt.s32.totalorder %v1003, 0
      %v1032 = vsub.s32 0, %v1003
      %v1033 = vsel %vm1031, %v1032, %v1003
      %v1034 = vshrl.u32 %v1033, 4
      %v1035 = vand.u32 %v1033, 15
      %v1036 = vsub.s32 0, %v1035
      %v1037 = vsel %vm1031, %v1036, %v1035
      %vm1038 = vcmp.lt.s32.totalorder %v1004, 0
      %v1039 = vsub.s32 0, %v1004
      %v1040 = vsel %vm1038, %v1039, %v1004
      %v1041 = vshrl.u32 %v1040, 4
      %v1042 = vand.u32 %v1040, 15
      %v1043 = vsub.s32 0, %v1042
      %v1044 = vsel %vm1038, %v1043, %v1042
      %vm1045 = vcmp.lt.s32.totalorder %v1005, 0
      %v1046 = vsub.s32 0, %v1005
      %v1047 = vsel %vm1045, %v1046, %v1005
      %v1048 = vshrl.u32 %v1047, 4
      %v1049 = vand.u32 %v1047, 15
      %v1050 = vsub.s32 0, %v1049
      %v1051 = vsel %vm1045, %v1050, %v1049
      %vm1052 = vcmp.lt.s32.totalorder %v1006, 0
      %v1053 = vsub.s32 0, %v1006
      %v1054 = vsel %vm1052, %v1053, %v1006
      %v1055 = vshrl.u32 %v1054, 4
      %v1056 = vand.u32 %v1054, 15
      %v1057 = vsub.s32 0, %v1056
      %v1058 = vsel %vm1052, %v1057, %v1056
      %vm1059 = vcmp.lt.s32.totalorder %v1007, 0
      %v1060 = vsub.s32 0, %v1007
      %v1061 = vsel %vm1059, %v1060, %v1007
      %v1062 = vshrl.u32 %v1061, 4
      %v1063 = vand.u32 %v1061, 15
      %v1064 = vsub.s32 0, %v1063
      %v1065 = vsel %vm1059, %v1064, %v1063
      %vm1066 = vcmp.lt.s32.totalorder %v1008, 0
      %v1067 = vsub.s32 0, %v1008
      %v1068 = vsel %vm1066, %v1067, %v1008
      %v1069 = vshrl.u32 %v1068, 4
      %v1070 = vand.u32 %v1068, 15
      %v1071 = vsub.s32 0, %v1070
      %v1072 = vsel %vm1066, %v1071, %v1070
      %vm1073 = vcmp.lt.s32.totalorder %v1009, 0
      %v1074 = vsub.s32 0, %v1009
      %v1075 = vsel %vm1073, %v1074, %v1009
      %v1076 = vshrl.u32 %v1075, 4
      %v1077 = vand.u32 %v1075, 15
      %v1078 = vsub.s32 0, %v1077
      %v1079 = vsel %vm1073, %v1078, %v1077
      %vm1080 = vcmp.lt.s32.totalorder %v1010, 0
      %v1081 = vsub.s32 0, %v1010
      %v1082 = vsel %vm1080, %v1081, %v1010
      %v1083 = vshrl.u32 %v1082, 4
      %v1084 = vand.u32 %v1082, 15
      %v1085 = vsub.s32 0, %v1084
      %v1086 = vsel %vm1080, %v1085, %v1084
      %vm1087 = vcmp.lt.s32.totalorder %v1011, 0
      %v1088 = vsub.s32 0, %v1011
      %v1089 = vsel %vm1087, %v1088, %v1011
      %v1090 = vshrl.u32 %v1089, 4
      %v1091 = vand.u32 %v1089, 15
      %v1092 = vsub.s32 0, %v1091
      %v1093 = vsel %vm1087, %v1092, %v1091
      %vm1094 = vcmp.lt.s32.totalorder %v1012, 0
      %v1095 = vsub.s32 0, %v1012
      %v1096 = vsel %vm1094, %v1095, %v1012
      %v1097 = vshrl.u32 %v1096, 4
      %v1098 = vand.u32 %v1096, 15
      %v1099 = vsub.s32 0, %v1098
      %v1100 = vsel %vm1094, %v1099, %v1098
      %vm1101 = vcmp.lt.s32.totalorder %v1013, 0
      %v1102 = vsub.s32 0, %v1013
      %v1103 = vsel %vm1101, %v1102, %v1013
      %v1104 = vshrl.u32 %v1103, 4
      %v1105 = vand.u32 %v1103, 15
      %v1106 = vsub.s32 0, %v1105
      %v1107 = vsel %vm1101, %v1106, %v1105
      %vm1108 = vcmp.lt.s32.totalorder %v1014, 0
      %v1109 = vsub.s32 0, %v1014
      %v1110 = vsel %vm1108, %v1109, %v1014
      %v1111 = vshrl.u32 %v1110, 4
      %v1112 = vand.u32 %v1110, 15
      %v1113 = vsub.s32 0, %v1112
      %v1114 = vsel %vm1108, %v1113, %v1112
      %vm1115 = vcmp.lt.s32.totalorder %v1015, 0
      %v1116 = vsub.s32 0, %v1015
      %v1117 = vsel %vm1115, %v1116, %v1015
      %v1118 = vshrl.u32 %v1117, 4
      %v1119 = vand.u32 %v1117, 15
      %v1120 = vsub.s32 0, %v1119
      %v1121 = vsel %vm1115, %v1120, %v1119
      %vm1122 = vcmp.lt.s32.totalorder %v1016, 0
      %v1123 = vsub.s32 0, %v1016
      %v1124 = vsel %vm1122, %v1123, %v1016
      %v1125 = vshrl.u32 %v1124, 4
      %v1126 = vand.u32 %v1124, 15
      %v1127 = vsub.s32 0, %v1126
      %v1128 = vsel %vm1122, %v1127, %v1126
      %vm1129 = vcmp.ne.s32.totalorder %v1023, 0
      %vm1130 = vcmp.ne.s32.totalorder %v1030, 0
      %vm1131 = vcmp.ne.s32.totalorder %v1037, 0
      %vm1132 = vcmp.ne.s32.totalorder %v1044, 0
      %vm1133 = vcmp.ne.s32.totalorder %v1051, 0
      %vm1134 = vcmp.ne.s32.totalorder %v1058, 0
      %vm1135 = vcmp.ne.s32.totalorder %v1065, 0
      %vm1136 = vcmp.ne.s32.totalorder %v1072, 0
      %vm1137 = vcmp.ne.s32.totalorder %v1079, 0
      %vm1138 = vcmp.ne.s32.totalorder %v1086, 0
      %vm1139 = vcmp.ne.s32.totalorder %v1093, 0
      %vm1140 = vcmp.ne.s32.totalorder %v1100, 0
      %vm1141 = vcmp.ne.s32.totalorder %v1107, 0
      %vm1142 = vcmp.ne.s32.totalorder %v1114, 0
      %vm1143 = vcmp.ne.s32.totalorder %v1121, 0
      %vm1144 = vcmp.ne.s32.totalorder %v1128, 0
      %vm1145 = vcmp.lt.s32.totalorder %v1023, 0
      %vm1146 = vcmp.lt.s32.totalorder %v1030, 0
      %vm1147 = vcmp.lt.s32.totalorder %v1037, 0
      %vm1148 = vcmp.lt.s32.totalorder %v1044, 0
      %vm1149 = vcmp.lt.s32.totalorder %v1051, 0
      %vm1150 = vcmp.lt.s32.totalorder %v1058, 0
      %vm1151 = vcmp.lt.s32.totalorder %v1065, 0
      %vm1152 = vcmp.lt.s32.totalorder %v1072, 0
      %vm1153 = vcmp.lt.s32.totalorder %v1079, 0
      %vm1154 = vcmp.lt.s32.totalorder %v1086, 0
      %vm1155 = vcmp.lt.s32.totalorder %v1093, 0
      %vm1156 = vcmp.lt.s32.totalorder %v1100, 0
      %vm1157 = vcmp.lt.s32.totalorder %v1107, 0
      %vm1158 = vcmp.lt.s32.totalorder %v1114, 0
      %vm1159 = vcmp.lt.s32.totalorder %v1121, 0
      %vm1160 = vcmp.lt.s32.totalorder %v1128, 0
      %vm1161 = vmand %vm1145, %vm1129
      %vm1162 = vmand %vm1146, %vm1130
      %vm1163 = vmand %vm1147, %vm1131
      %vm1164 = vmand %vm1148, %vm1132
      %vm1165 = vmand %vm1149, %vm1133
      %vm1166 = vmand %vm1150, %vm1134
      %vm1167 = vmand %vm1151, %vm1135
      %vm1168 = vmand %vm1152, %vm1136
      %vm1169 = vmand %vm1153, %vm1137
      %vm1170 = vmand %vm1154, %vm1138
      %vm1171 = vmand %vm1155, %vm1139
      %vm1172 = vmand %vm1156, %vm1140
      %vm1173 = vmand %vm1157, %vm1141
      %vm1174 = vmand %vm1158, %vm1142
      %vm1175 = vmand %vm1159, %vm1143
      %vm1176 = vmand %vm1160, %vm1144
      %v1177 = vadd.s32 %v1023, 16
      %v1178 = vadd.s32 %v1030, 16
      %v1179 = vadd.s32 %v1037, 16
      %v1180 = vadd.s32 %v1044, 16
      %v1181 = vadd.s32 %v1051, 16
      %v1182 = vadd.s32 %v1058, 16
      %v1183 = vadd.s32 %v1065, 16
      %v1184 = vadd.s32 %v1072, 16
      %v1185 = vadd.s32 %v1079, 16
      %v1186 = vadd.s32 %v1086, 16
      %v1187 = vadd.s32 %v1093, 16
      %v1188 = vadd.s32 %v1100, 16
      %v1189 = vadd.s32 %v1107, 16
      %v1190 = vadd.s32 %v1114, 16
      %v1191 = vadd.s32 %v1121, 16
      %v1192 = vadd.s32 %v1128, 16
      %v1193 = vsel %vm1161, %v1177, %v1023
      %v1194 = vsel %vm1162, %v1178, %v1030
      %v1195 = vsel %vm1163, %v1179, %v1037
      %v1196 = vsel %vm1164, %v1180, %v1044
      %v1197 = vsel %vm1165, %v1181, %v1051
      %v1198 = vsel %vm1166, %v1182, %v1058
      %v1199 = vsel %vm1167, %v1183, %v1065
      %v1200 = vsel %vm1168, %v1184, %v1072
      %v1201 = vsel %vm1169, %v1185, %v1079
      %v1202 = vsel %vm1170, %v1186, %v1086
      %v1203 = vsel %vm1171, %v1187, %v1093
      %v1204 = vsel %vm1172, %v1188, %v1100
      %v1205 = vsel %vm1173, %v1189, %v1107
      %v1206 = vsel %vm1174, %v1190, %v1114
      %v1207 = vsel %vm1175, %v1191, %v1121
      %v1208 = vsel %vm1176, %v1192, %v1128
      %vm1209 = vcmp.ge.s32.totalorder %v1193, 1
      %vm1210 = vcmp.ge.s32.totalorder %v1194, 1
      %v1212 = vunpack.c.l.b16 %v967
      %v1213 = vpack.c.b16 %v1212, %v1212
      %v1215 = vshrl.u32 %v1213, 16
      %v1217 = vrot.slane %v1215, 3
      %v1220 = vunpack.c.l.b16 %v966
      %v1221 = vpack.c.b16 %v1212, %v1220
      %v1223 = vshrl.u32 %v1221, 16
      %v1225 = vrot.slane %v1223, 7
      %v1226 = vshll.u32 %v1221, 16
      %v1228 = vor.u32 %v1225, %v1226
      %vm1230 = vcmask 1040384
      %vm1231 = vsmask.f32 256
      %vm1232 = vmand %vm1230, %vm1231
      %v1233 = vsel %vm1232, %v1217, %v1228
      %v1234 = vsel %vm1209, 1, 0
      %v1235 = vsel %vm1210, 1, 0
      %vm1236 = vcmp.eq.s32.totalorder %v1234, 1
      %vm1237 = vcmp.eq.s32.totalorder %v1235, 1
      %vm1238 = vmpackc.low %vm1236, %vm1236
      %vm1239 = vmpackc.low %vm1237, %vm1237
      %v1240 = vsel %vm1238, 65537, 0
      %v1241 = vsel %vm1239, 65537, 0
      %v1242 = vunpack.c.l.b16 %v1240
      %v1243 = vunpack.c.l.b16 %v1241
      %v1244 = vpack.c.b16 %v1243, %v1242
      %v1245 = vunpack.c.l.b16 %v1244
      %v1246 = vunpack.c.h.b16 %v1244
      %v1247 = vunpack.c.l.b16 0
      %v1248 = vunpack.c.h.b16 0
      %vm1249 = vcmp.ne.s32.totalorder %v1245, %v1247
      %vm1250 = vcmp.ne.s32.totalorder %v1246, %v1248
      %vm1251 = vmpackc.low %vm1250, %vm1249
      %v1252 = vsel %vm1251, %v1233, 0
      %v1254 = vunpack.c.l.b16 %v1252
      %v1255 = vunpack.c.h.b16 %v1252
      %v1256 = vpack.c.b16 %v1254, %v1254
      %v1257 = vpack.c.b16 %v1255, %v1255
      %1260 = vst.msk [vmem:[#allocation2] sm:$0xf] %vm847, %v1256
      %1261 = vst.msk [vmem:[#allocation2 + $0x4] sm:$0xf] %vm847, %v1257
      %vm1262 = vcmp.ge.s32.totalorder %v1195, 1
      %vm1263 = vcmp.ge.s32.totalorder %v1196, 1
      %vm1264 = vcmp.ge.s32.totalorder %v1197, 1
      %vm1265 = vcmp.ge.s32.totalorder %v1198, 1
      %vm1266 = vcmp.ge.s32.totalorder %v1199, 1
      %vm1267 = vcmp.ge.s32.totalorder %v1200, 1
      %vm1268 = vcmp.ge.s32.totalorder %v1201, 1
      %vm1269 = vcmp.ge.s32.totalorder %v1202, 1
      %vm1270 = vcmp.ge.s32.totalorder %v1203, 1
      %vm1271 = vcmp.ge.s32.totalorder %v1204, 1
      %vm1272 = vcmp.ge.s32.totalorder %v1205, 1
      %vm1273 = vcmp.ge.s32.totalorder %v1206, 1
      %vm1274 = vcmp.ge.s32.totalorder %v1207, 1
      %vm1275 = vcmp.ge.s32.totalorder %v1208, 1
      %v1277 = vunpack.c.l.b16 %v748
      %v1278 = vpack.c.b16 %v1277, %v1277
      %v1280 = vshrl.u32 %v1278, 16
      %v1282 = vrot.slane %v1280, 3
      %v1299 = vunpack.c.l.b16 %v733
      %v1300 = vunpack.c.l.b16 %v734
      %v1301 = vunpack.c.l.b16 %v735
      %v1302 = vunpack.c.l.b16 %v736
      %v1303 = vunpack.c.l.b16 %v737
      %v1304 = vunpack.c.l.b16 %v738
      %v1305 = vunpack.c.l.b16 %v739
      %v1306 = vunpack.c.l.b16 %v740
      %v1307 = vunpack.c.l.b16 %v741
      %v1308 = vunpack.c.l.b16 %v742
      %v1309 = vunpack.c.l.b16 %v743
      %v1310 = vunpack.c.l.b16 %v744
      %v1311 = vunpack.c.l.b16 %v745
      %v1312 = vunpack.c.l.b16 %v746
      %v1313 = vunpack.c.l.b16 %v747
      %v1314 = vpack.c.b16 %v1300, %v1299
      %v1315 = vpack.c.b16 %v1302, %v1301
      %v1316 = vpack.c.b16 %v1304, %v1303
      %v1317 = vpack.c.b16 %v1306, %v1305
      %v1318 = vpack.c.b16 %v1308, %v1307
      %v1319 = vpack.c.b16 %v1310, %v1309
      %v1320 = vpack.c.b16 %v1312, %v1311
      %v1321 = vpack.c.b16 %v1277, %v1313
      %v1323 = vshrl.u32 %v1314, 16
      %v1325 = vrot.slane %v1323, 7
      %v1326 = vshll.u32 %v1314, 16
      %v1328 = vor.u32 %v1325, %v1326
      %v1330 = vshrl.u32 %v1315, 16
      %v1332 = vrot.slane %v1330, 7
      %v1333 = vshll.u32 %v1315, 16
      %v1335 = vor.u32 %v1332, %v1333
      %v1336 = vsel %vm1231, %v1325, %v1335
      %v1338 = vshrl.u32 %v1316, 16
      %v1340 = vrot.slane %v1338, 7
      %v1341 = vshll.u32 %v1316, 16
      %v1343 = vor.u32 %v1340, %v1341
      %v1344 = vsel %vm1231, %v1332, %v1343
      %v1346 = vshrl.u32 %v1317, 16
      %v1348 = vrot.slane %v1346, 7
      %v1349 = vshll.u32 %v1317, 16
      %v1351 = vor.u32 %v1348, %v1349
      %v1352 = vsel %vm1231, %v1340, %v1351
      %v1354 = vshrl.u32 %v1318, 16
      %v1356 = vrot.slane %v1354, 7
      %v1357 = vshll.u32 %v1318, 16
      %v1359 = vor.u32 %v1356, %v1357
      %v1360 = vsel %vm1231, %v1348, %v1359
      %v1362 = vshrl.u32 %v1319, 16
      %v1364 = vrot.slane %v1362, 7
      %v1365 = vshll.u32 %v1319, 16
      %v1367 = vor.u32 %v1364, %v1365
      %v1368 = vsel %vm1231, %v1356, %v1367
      %v1370 = vshrl.u32 %v1320, 16
      %v1372 = vrot.slane %v1370, 7
      %v1373 = vshll.u32 %v1320, 16
      %v1375 = vor.u32 %v1372, %v1373
      %v1376 = vsel %vm1231, %v1364, %v1375
      %v1378 = vshrl.u32 %v1321, 16
      %v1380 = vrot.slane %v1378, 7
      %v1381 = vshll.u32 %v1321, 16
      %v1383 = vor.u32 %v1380, %v1381
      %v1384 = vsel %vm1231, %v1372, %v1383
      %v1393 = vsel %vm1232, %v1282, %v1328
      %v1394 = vsel %vm1262, 1, 0
      %v1395 = vsel %vm1263, 1, 0
      %v1396 = vsel %vm1264, 1, 0
      %v1397 = vsel %vm1265, 1, 0
      %v1398 = vsel %vm1266, 1, 0
      %v1399 = vsel %vm1267, 1, 0
      %v1400 = vsel %vm1268, 1, 0
      %v1401 = vsel %vm1269, 1, 0
      %v1402 = vsel %vm1270, 1, 0
      %v1403 = vsel %vm1271, 1, 0
      %v1404 = vsel %vm1272, 1, 0
      %v1405 = vsel %vm1273, 1, 0
      %v1406 = vsel %vm1274, 1, 0
      %v1407 = vsel %vm1275, 1, 0
      %vm1408 = vcmp.eq.s32.totalorder %v1394, 1
      %vm1409 = vcmp.eq.s32.totalorder %v1395, 1
      %vm1410 = vcmp.eq.s32.totalorder %v1396, 1
      %vm1411 = vcmp.eq.s32.totalorder %v1397, 1
      %vm1412 = vcmp.eq.s32.totalorder %v1398, 1
      %vm1413 = vcmp.eq.s32.totalorder %v1399, 1
      %vm1414 = vcmp.eq.s32.totalorder %v1400, 1
      %vm1415 = vcmp.eq.s32.totalorder %v1401, 1
      %vm1416 = vcmp.eq.s32.totalorder %v1402, 1
      %vm1417 = vcmp.eq.s32.totalorder %v1403, 1
      %vm1418 = vcmp.eq.s32.totalorder %v1404, 1
      %vm1419 = vcmp.eq.s32.totalorder %v1405, 1
      %vm1420 = vcmp.eq.s32.totalorder %v1406, 1
      %vm1421 = vcmp.eq.s32.totalorder %v1407, 1
      %vm1422 = vmpackc.low %vm1408, %vm1408
      %vm1423 = vmpackc.low %vm1409, %vm1409
      %vm1424 = vmpackc.low %vm1410, %vm1410
      %vm1425 = vmpackc.low %vm1411, %vm1411
      %vm1426 = vmpackc.low %vm1412, %vm1412
      %vm1427 = vmpackc.low %vm1413, %vm1413
      %vm1428 = vmpackc.low %vm1414, %vm1414
      %vm1429 = vmpackc.low %vm1415, %vm1415
      %vm1430 = vmpackc.low %vm1416, %vm1416
      %vm1431 = vmpackc.low %vm1417, %vm1417
      %vm1432 = vmpackc.low %vm1418, %vm1418
      %vm1433 = vmpackc.low %vm1419, %vm1419
      %vm1434 = vmpackc.low %vm1420, %vm1420
      %vm1435 = vmpackc.low %vm1421, %vm1421
      %v1436 = vsel %vm1422, 65537, 0
      %v1437 = vsel %vm1423, 65537, 0
      %v1438 = vsel %vm1424, 65537, 0
      %v1439 = vsel %vm1425, 65537, 0
      %v1440 = vsel %vm1426, 65537, 0
      %v1441 = vsel %vm1427, 65537, 0
      %v1442 = vsel %vm1428, 65537, 0
      %v1443 = vsel %vm1429, 65537, 0
      %v1444 = vsel %vm1430, 65537, 0
      %v1445 = vsel %vm1431, 65537, 0
      %v1446 = vsel %vm1432, 65537, 0
      %v1447 = vsel %vm1433, 65537, 0
      %v1448 = vsel %vm1434, 65537, 0
      %v1449 = vsel %vm1435, 65537, 0
      %v1450 = vunpack.c.l.b16 %v1436
      %v1451 = vunpack.c.l.b16 %v1437
      %v1452 = vunpack.c.l.b16 %v1438
      %v1453 = vunpack.c.l.b16 %v1439
      %v1454 = vunpack.c.l.b16 %v1440
      %v1455 = vunpack.c.l.b16 %v1441
      %v1456 = vunpack.c.l.b16 %v1442
      %v1457 = vunpack.c.l.b16 %v1443
      %v1458 = vunpack.c.l.b16 %v1444
      %v1459 = vunpack.c.l.b16 %v1445
      %v1460 = vunpack.c.l.b16 %v1446
      %v1461 = vunpack.c.l.b16 %v1447
      %v1462 = vunpack.c.l.b16 %v1448
      %v1463 = vunpack.c.l.b16 %v1449
      %v1464 = vpack.c.b16 %v1451, %v1450
      %v1465 = vpack.c.b16 %v1453, %v1452
      %v1466 = vpack.c.b16 %v1455, %v1454
      %v1467 = vpack.c.b16 %v1457, %v1456
      %v1468 = vpack.c.b16 %v1459, %v1458
      %v1469 = vpack.c.b16 %v1461, %v1460
      %v1470 = vpack.c.b16 %v1463, %v1462
      %v1471 = vunpack.c.l.b16 %v1464
      %v1472 = vunpack.c.h.b16 %v1464
      %v1473 = vunpack.c.l.b16 0
      %v1474 = vunpack.c.h.b16 0
      %vm1475 = vcmp.ne.s32.totalorder %v1471, %v1473
      %vm1476 = vcmp.ne.s32.totalorder %v1472, %v1474
      %vm1477 = vmpackc.low %vm1476, %vm1475
      %v1478 = vunpack.c.l.b16 %v1465
      %v1479 = vunpack.c.h.b16 %v1465
      %v1480 = vunpack.c.l.b16 0
      %v1481 = vunpack.c.h.b16 0
      %vm1482 = vcmp.ne.s32.totalorder %v1478, %v1480
      %vm1483 = vcmp.ne.s32.totalorder %v1479, %v1481
      %vm1484 = vmpackc.low %vm1483, %vm1482
      %v1485 = vunpack.c.l.b16 %v1466
      %v1486 = vunpack.c.h.b16 %v1466
      %v1487 = vunpack.c.l.b16 0
      %v1488 = vunpack.c.h.b16 0
      %vm1489 = vcmp.ne.s32.totalorder %v1485, %v1487
      %vm1490 = vcmp.ne.s32.totalorder %v1486, %v1488
      %vm1491 = vmpackc.low %vm1490, %vm1489
      %v1492 = vunpack.c.l.b16 %v1467
      %v1493 = vunpack.c.h.b16 %v1467
      %v1494 = vunpack.c.l.b16 0
      %v1495 = vunpack.c.h.b16 0
      %vm1496 = vcmp.ne.s32.totalorder %v1492, %v1494
      %vm1497 = vcmp.ne.s32.totalorder %v1493, %v1495
      %vm1498 = vmpackc.low %vm1497, %vm1496
      %v1499 = vunpack.c.l.b16 %v1468
      %v1500 = vunpack.c.h.b16 %v1468
      %v1501 = vunpack.c.l.b16 0
      %v1502 = vunpack.c.h.b16 0
      %vm1503 = vcmp.ne.s32.totalorder %v1499, %v1501
      %vm1504 = vcmp.ne.s32.totalorder %v1500, %v1502
      %vm1505 = vmpackc.low %vm1504, %vm1503
      %v1506 = vunpack.c.l.b16 %v1469
      %v1507 = vunpack.c.h.b16 %v1469
      %v1508 = vunpack.c.l.b16 0
      %v1509 = vunpack.c.h.b16 0
      %vm1510 = vcmp.ne.s32.totalorder %v1506, %v1508
      %vm1511 = vcmp.ne.s32.totalorder %v1507, %v1509
      %vm1512 = vmpackc.low %vm1511, %vm1510
      %v1513 = vunpack.c.l.b16 %v1470
      %v1514 = vunpack.c.h.b16 %v1470
      %v1515 = vunpack.c.l.b16 0
      %v1516 = vunpack.c.h.b16 0
      %vm1517 = vcmp.ne.s32.totalorder %v1513, %v1515
      %vm1518 = vcmp.ne.s32.totalorder %v1514, %v1516
      %vm1519 = vmpackc.low %vm1518, %vm1517
      %v1520 = vsel %vm1251, %v1393, 0
      %v1521 = vsel %vm1477, %v1336, 0
      %v1522 = vsel %vm1484, %v1344, 0
      %v1523 = vsel %vm1491, %v1352, 0
      %v1524 = vsel %vm1498, %v1360, 0
      %v1525 = vsel %vm1505, %v1368, 0
      %v1526 = vsel %vm1512, %v1376, 0
      %v1527 = vsel %vm1519, %v1384, 0
      %v1536 = vunpack.c.l.b16 %v1520
      %v1537 = vunpack.c.h.b16 %v1520
      %v1538 = vunpack.c.l.b16 %v1521
      %v1539 = vunpack.c.h.b16 %v1521
      %v1540 = vunpack.c.l.b16 %v1522
      %v1541 = vunpack.c.h.b16 %v1522
      %v1542 = vunpack.c.l.b16 %v1523
      %v1543 = vunpack.c.h.b16 %v1523
      %v1544 = vunpack.c.l.b16 %v1524
      %v1545 = vunpack.c.h.b16 %v1524
      %v1546 = vunpack.c.l.b16 %v1525
      %v1547 = vunpack.c.h.b16 %v1525
      %v1548 = vunpack.c.l.b16 %v1526
      %v1549 = vunpack.c.h.b16 %v1526
      %v1550 = vunpack.c.l.b16 %v1527
      %v1551 = vunpack.c.h.b16 %v1527
      %v1552 = vpack.c.b16 %v1536, %v1536
      %v1553 = vpack.c.b16 %v1537, %v1537
      %v1554 = vpack.c.b16 %v1538, %v1538
      %v1555 = vpack.c.b16 %v1539, %v1539
      %v1556 = vpack.c.b16 %v1540, %v1540
      %v1557 = vpack.c.b16 %v1541, %v1541
      %v1558 = vpack.c.b16 %v1542, %v1542
      %v1559 = vpack.c.b16 %v1543, %v1543
      %v1560 = vpack.c.b16 %v1544, %v1544
      %v1561 = vpack.c.b16 %v1545, %v1545
      %v1562 = vpack.c.b16 %v1546, %v1546
      %v1563 = vpack.c.b16 %v1547, %v1547
      %v1564 = vpack.c.b16 %v1548, %v1548
      %v1565 = vpack.c.b16 %v1549, %v1549
      %v1566 = vpack.c.b16 %v1550, %v1550
      %v1567 = vpack.c.b16 %v1551, %v1551
      %1584 = vst.msk [vmem:[#allocation2 + $0x8] sm:$0xf] %vm847, %v1552
      %1585 = vst.msk [vmem:[#allocation2 + $0xc] sm:$0xf] %vm847, %v1553
      %1586 = vst.msk [vmem:[#allocation2 + $0x10] sm:$0xf] %vm847, %v1554
      %1587 = vst.msk [vmem:[#allocation2 + $0x14] sm:$0xf] %vm847, %v1555
      %1588 = vst.msk [vmem:[#allocation2 + $0x18] sm:$0xf] %vm847, %v1556
      %1589 = vst.msk [vmem:[#allocation2 + $0x1c] sm:$0xf] %vm847, %v1557
      %1590 = vst.msk [vmem:[#allocation2 + $0x20] sm:$0xf] %vm847, %v1558
      %1591 = vst.msk [vmem:[#allocation2 + $0x24] sm:$0xf] %vm847, %v1559
      %1592 = vst.msk [vmem:[#allocation2 + $0x28] sm:$0xf] %vm847, %v1560
      %1593 = vst.msk [vmem:[#allocation2 + $0x2c] sm:$0xf] %vm847, %v1561
      %1594 = vst.msk [vmem:[#allocation2 + $0x30] sm:$0xf] %vm847, %v1562
      %1595 = vst.msk [vmem:[#allocation2 + $0x34] sm:$0xf] %vm847, %v1563
      %1596 = vst.msk [vmem:[#allocation2 + $0x38] sm:$0xf] %vm847, %v1564
      %1597 = vst.msk [vmem:[#allocation2 + $0x3c] sm:$0xf] %vm847, %v1565
      %1598 = vst.msk [vmem:[#allocation2 + $0x40] sm:$0xf] %vm847, %v1566
      %1599 = vst.msk [vmem:[#allocation2 + $0x44] sm:$0xf] %vm847, %v1567
      %v1601 = vunpack.c.l.b16 %v999
      %v1602 = vpack.c.b16 %v1601, %v1601
      %v1604 = vshrl.u32 %v1602, 16
      %v1606 = vrot.slane %v1604, 3
      %v1609 = vunpack.c.l.b16 %v998
      %v1610 = vpack.c.b16 %v1601, %v1609
      %v1612 = vshrl.u32 %v1610, 16
      %v1614 = vrot.slane %v1612, 7
      %v1615 = vshll.u32 %v1610, 16
      %v1617 = vor.u32 %v1614, %v1615
      %v1619 = vsel %vm1232, %v1606, %v1617
      %v1620 = vsel %vm1251, %v1619, 0
      %v1622 = vunpack.c.l.b16 %v1620
      %v1623 = vunpack.c.h.b16 %v1620
      %v1624 = vpack.c.b16 %v1622, %v1622
      %v1625 = vpack.c.b16 %v1623, %v1623
      %1628 = vst.msk [vmem:[#allocation2 + $0x48] sm:$0xf] %vm847, %v1624
      %1629 = vst.msk [vmem:[#allocation2 + $0x4c] sm:$0xf] %vm847, %v1625
      %v1630 = vld [vmem:[#allocation2] sm:$0xf]
      %v1631 = vld [vmem:[#allocation2 + $0x4] sm:$0xf]
      %v1632 = vld [vmem:[#allocation2 + $0x8] sm:$0xf]
      %v1633 = vld [vmem:[#allocation2 + $0xc] sm:$0xf]
      %v1634 = vld [vmem:[#allocation2 + $0x10] sm:$0xf]
      %v1635 = vld [vmem:[#allocation2 + $0x14] sm:$0xf]
      %v1636 = vld [vmem:[#allocation2 + $0x18] sm:$0xf]
      %v1637 = vld [vmem:[#allocation2 + $0x1c] sm:$0xf]
      %v1638 = vld [vmem:[#allocation2 + $0x20] sm:$0xf]
      %v1639 = vld [vmem:[#allocation2 + $0x24] sm:$0xf]
      %v1640 = vld [vmem:[#allocation2 + $0x28] sm:$0xf]
      %v1641 = vld [vmem:[#allocation2 + $0x2c] sm:$0xf]
      %v1642 = vld [vmem:[#allocation2 + $0x30] sm:$0xf]
      %v1643 = vld [vmem:[#allocation2 + $0x34] sm:$0xf]
      %v1644 = vld [vmem:[#allocation2 + $0x38] sm:$0xf]
      %v1645 = vld [vmem:[#allocation2 + $0x3c] sm:$0xf]
      %v1646 = vld [vmem:[%s4] sm:$0x3]
      %v1647 = vld [vmem:[#allocation2 + $0x40] sm:$0xf]
      %v1648 = vld [vmem:[#allocation2 + $0x44] sm:$0xf]
      %s1649 = scalar_lea.vmem %s4, 6
      %v1650 = vld [vmem:[%s1649] sm:$0x3]
      %v1667 = vunpack.c.l.b16 %v1632
      %v1668 = vunpack.c.l.b16 %v1633
      %v1669 = vunpack.c.l.b16 %v1634
      %v1670 = vunpack.c.l.b16 %v1635
      %v1671 = vunpack.c.l.b16 %v1636
      %v1672 = vunpack.c.l.b16 %v1637
      %v1673 = vunpack.c.l.b16 %v1638
      %v1674 = vunpack.c.l.b16 %v1639
      %v1675 = vunpack.c.l.b16 %v1640
      %v1676 = vunpack.c.l.b16 %v1641
      %v1677 = vunpack.c.l.b16 %v1642
      %v1678 = vunpack.c.l.b16 %v1643
      %v1679 = vunpack.c.l.b16 %v1644
      %v1680 = vunpack.c.l.b16 %v1645
      %v1681 = vunpack.c.l.b16 %v1647
      %v1682 = vunpack.c.l.b16 %v1648
      %v1683 = vpack.c.b16 %v1668, %v1667
      %v1684 = vpack.c.b16 %v1670, %v1669
      %v1685 = vpack.c.b16 %v1672, %v1671
      %v1686 = vpack.c.b16 %v1674, %v1673
      %v1687 = vpack.c.b16 %v1676, %v1675
      %v1688 = vpack.c.b16 %v1678, %v1677
      %v1689 = vpack.c.b16 %v1680, %v1679
      %v1690 = vpack.c.b16 %v1682, %v1681
      %v1692 = vsel %vm749, %v1683, 0
      %v1695 = vsel %vm749, %v1684, 0
      %v1698 = vsel %vm749, %v1685, 0
      %v1701 = vsel %vm749, %v1686, 0
      %v1704 = vsel %vm749, %v1687, 0
      %v1707 = vsel %vm749, %v1688, 0
      %v1710 = vsel %vm749, %v1689, 0
      %v1713 = vsel %vm749, %v1690, 0
      %vm1715 = vcmask 1041408
      %v1717 = vsel %vm1715, %v1650, 0
      %1719 = vmatpush.bf16.msra.mxu0 0
      %1720 = vmatpush.bf16.msra.mxu0 0
      %1721 = vmatpush.bf16.msra.mxu0 0
      %1722 = vmatpush.bf16.msra.mxu0 0
      %1723 = vmatpush.bf16.msra.mxu0 0
      %1724 = vmatpush.bf16.msra.mxu0 0
      %1725 = vmatpush.bf16.msra.mxu0 0
      %1726 = vmatpush.bf16.msra.mxu0 %v1717
      %1727 = vmatmul.bf16.gmra.mxu0 %v1692
      %v1728 = vpop.f32.mrf.mxu0
      %v1729 = vadd.f32 0.0, %v1728
      %v1730 = vpop.f32.mrf.mxu0
      %v1731 = vadd.f32 0.0, %v1730
      %1732 = vmatmul.bf16.gmra.mxu0 %v1695
      %v1733 = vpop.f32.mrf.mxu0
      %v1734 = vadd.f32 0.0, %v1733
      %v1735 = vpop.f32.mrf.mxu0
      %v1736 = vadd.f32 0.0, %v1735
      %1737 = vmatmul.bf16.gmra.mxu0 %v1698
      %v1738 = vpop.f32.mrf.mxu0
      %v1739 = vadd.f32 0.0, %v1738
      %v1740 = vpop.f32.mrf.mxu0
      %v1741 = vadd.f32 0.0, %v1740
      %1742 = vmatmul.bf16.gmra.mxu0 %v1701
      %v1743 = vpop.f32.mrf.mxu0
      %v1744 = vadd.f32 0.0, %v1743
      %v1745 = vpop.f32.mrf.mxu0
      %v1746 = vadd.f32 0.0, %v1745
      %1747 = vmatmul.bf16.gmra.mxu0 %v1704
      %v1748 = vpop.f32.mrf.mxu0
      %v1749 = vadd.f32 0.0, %v1748
      %v1750 = vpop.f32.mrf.mxu0
      %v1751 = vadd.f32 0.0, %v1750
      %1752 = vmatmul.bf16.gmra.mxu0 %v1707
      %v1753 = vpop.f32.mrf.mxu0
      %v1754 = vadd.f32 0.0, %v1753
      %v1755 = vpop.f32.mrf.mxu0
      %v1756 = vadd.f32 0.0, %v1755
      %1757 = vmatmul.bf16.gmra.mxu0 %v1710
      %v1758 = vpop.f32.mrf.mxu0
      %v1759 = vadd.f32 0.0, %v1758
      %v1760 = vpop.f32.mrf.mxu0
      %v1761 = vadd.f32 0.0, %v1760
      %1762 = vmatmul.bf16.gmra.mxu0 %v1713
      %v1763 = vpop.f32.mrf.mxu0
      %v1764 = vadd.f32 0.0, %v1763
      %v1765 = vpop.f32.mrf.mxu0
      %v1766 = vadd.f32 0.0, %v1765
      %1767 = vdwg.mxu0
      %v1770 = vunpack.c.l.b16 %v1630
      %v1771 = vunpack.c.l.b16 %v1631
      %v1772 = vpack.c.b16 %v1771, %v1770
      %v1774 = vsel %vm749, %v1772, 0
      %v1777 = vsel %vm1715, %v1646, 0
      %1779 = vmatpush.bf16.msra.mxu0 0
      %1780 = vmatpush.bf16.msra.mxu0 0
      %1781 = vmatpush.bf16.msra.mxu0 0
      %1782 = vmatpush.bf16.msra.mxu0 0
      %1783 = vmatpush.bf16.msra.mxu0 0
      %1784 = vmatpush.bf16.msra.mxu0 0
      %1785 = vmatpush.bf16.msra.mxu0 0
      %1786 = vmatpush.bf16.msra.mxu0 %v1777
      %1787 = vmatmul.bf16.gmra.mxu0 %v1774
      %v1788 = vpop.f32.mrf.mxu0
      %v1789 = vadd.f32 %v1729, %v1788
      %v1790 = vpop.f32.mrf.mxu0
      %v1791 = vadd.f32 %v1731, %v1790
      %1792 = vmatmul.bf16.gmra.mxu0 %v1692
      %v1793 = vpop.f32.mrf.mxu0
      %v1794 = vadd.f32 %v1734, %v1793
      %v1795 = vpop.f32.mrf.mxu0
      %v1796 = vadd.f32 %v1736, %v1795
      %1797 = vmatmul.bf16.gmra.mxu0 %v1695
      %v1798 = vpop.f32.mrf.mxu0
      %v1799 = vadd.f32 %v1739, %v1798
      %v1800 = vpop.f32.mrf.mxu0
      %v1801 = vadd.f32 %v1741, %v1800
      %1802 = vmatmul.bf16.gmra.mxu0 %v1698
      %v1803 = vpop.f32.mrf.mxu0
      %v1804 = vadd.f32 %v1744, %v1803
      %v1805 = vpop.f32.mrf.mxu0
      %v1806 = vadd.f32 %v1746, %v1805
      %1807 = vmatmul.bf16.gmra.mxu0 %v1701
      %v1808 = vpop.f32.mrf.mxu0
      %v1809 = vadd.f32 %v1749, %v1808
      %v1810 = vpop.f32.mrf.mxu0
      %v1811 = vadd.f32 %v1751, %v1810
      %1812 = vmatmul.bf16.gmra.mxu0 %v1704
      %v1813 = vpop.f32.mrf.mxu0
      %v1814 = vadd.f32 %v1754, %v1813
      %v1815 = vpop.f32.mrf.mxu0
      %v1816 = vadd.f32 %v1756, %v1815
      %1817 = vmatmul.bf16.gmra.mxu0 %v1707
      %v1818 = vpop.f32.mrf.mxu0
      %v1819 = vadd.f32 %v1759, %v1818
      %v1820 = vpop.f32.mrf.mxu0
      %v1821 = vadd.f32 %v1761, %v1820
      %1822 = vmatmul.bf16.gmra.mxu0 %v1710
      %v1823 = vpop.f32.mrf.mxu0
      %v1824 = vadd.f32 %v1764, %v1823
      %v1825 = vpop.f32.mrf.mxu0
      %v1826 = vadd.f32 %v1766, %v1825
      %1827 = vdwg.mxu0
      %v1828 = vld [vmem:[#allocation2 + $0x10] sm:$0xf]
      %v1829 = vld [vmem:[#allocation2 + $0x14] sm:$0xf]
      %v1830 = vld [vmem:[#allocation2 + $0x18] sm:$0xf]
      %v1831 = vld [vmem:[#allocation2 + $0x1c] sm:$0xf]
      %v1832 = vld [vmem:[#allocation2 + $0x20] sm:$0xf]
      %v1833 = vld [vmem:[#allocation2 + $0x24] sm:$0xf]
      %v1834 = vld [vmem:[#allocation2 + $0x28] sm:$0xf]
      %v1835 = vld [vmem:[#allocation2 + $0x2c] sm:$0xf]
      %v1836 = vld [vmem:[#allocation2 + $0x30] sm:$0xf]
      %v1837 = vld [vmem:[#allocation2 + $0x34] sm:$0xf]
      %v1838 = vld [vmem:[#allocation2 + $0x38] sm:$0xf]
      %v1839 = vld [vmem:[#allocation2 + $0x3c] sm:$0xf]
      %v1840 = vld [vmem:[#allocation2 + $0x40] sm:$0xf]
      %v1841 = vld [vmem:[#allocation2 + $0x44] sm:$0xf]
      %v1842 = vld [vmem:[#allocation2 + $0x48] sm:$0xf]
      %v1843 = vld [vmem:[#allocation2 + $0x4c] sm:$0xf]
      %s1844 = scalar_lea.vmem %s4, 12
      %v1845 = vld [vmem:[%s1844] sm:$0x3]
      %v1862 = vunpack.c.l.b16 %v1828
      %v1863 = vunpack.c.l.b16 %v1829
      %v1864 = vunpack.c.l.b16 %v1830
      %v1865 = vunpack.c.l.b16 %v1831
      %v1866 = vunpack.c.l.b16 %v1832
      %v1867 = vunpack.c.l.b16 %v1833
      %v1868 = vunpack.c.l.b16 %v1834
      %v1869 = vunpack.c.l.b16 %v1835
      %v1870 = vunpack.c.l.b16 %v1836
      %v1871 = vunpack.c.l.b16 %v1837
      %v1872 = vunpack.c.l.b16 %v1838
      %v1873 = vunpack.c.l.b16 %v1839
      %v1874 = vunpack.c.l.b16 %v1840
      %v1875 = vunpack.c.l.b16 %v1841
      %v1876 = vunpack.c.l.b16 %v1842
      %v1877 = vunpack.c.l.b16 %v1843
      %v1878 = vpack.c.b16 %v1863, %v1862
      %v1879 = vpack.c.b16 %v1865, %v1864
      %v1880 = vpack.c.b16 %v1867, %v1866
      %v1881 = vpack.c.b16 %v1869, %v1868
      %v1882 = vpack.c.b16 %v1871, %v1870
      %v1883 = vpack.c.b16 %v1873, %v1872
      %v1884 = vpack.c.b16 %v1875, %v1874
      %v1885 = vpack.c.b16 %v1877, %v1876
      %v1887 = vsel %vm749, %v1878, 0
      %v1890 = vsel %vm749, %v1879, 0
      %v1893 = vsel %vm749, %v1880, 0
      %v1896 = vsel %vm749, %v1881, 0
      %v1899 = vsel %vm749, %v1882, 0
      %v1902 = vsel %vm749, %v1883, 0
      %v1905 = vsel %vm749, %v1884, 0
      %v1908 = vsel %vm749, %v1885, 0
      %v1911 = vsel %vm1715, %v1845, 0
      %1913 = vmatpush.bf16.msra.mxu0 0
      %1914 = vmatpush.bf16.msra.mxu0 0
      %1915 = vmatpush.bf16.msra.mxu0 0
      %1916 = vmatpush.bf16.msra.mxu0 0
      %1917 = vmatpush.bf16.msra.mxu0 0
      %1918 = vmatpush.bf16.msra.mxu0 0
      %1919 = vmatpush.bf16.msra.mxu0 0
      %1920 = vmatpush.bf16.msra.mxu0 %v1911
      %1921 = vmatmul.bf16.gmra.mxu0 %v1887
      %v1922 = vpop.f32.mrf.mxu0
      %v1923 = vadd.f32 0.0, %v1922
      %v1924 = vpop.f32.mrf.mxu0
      %v1925 = vadd.f32 0.0, %v1924
      %1926 = vmatmul.bf16.gmra.mxu0 %v1890
      %v1927 = vpop.f32.mrf.mxu0
      %v1928 = vadd.f32 0.0, %v1927
      %v1929 = vpop.f32.mrf.mxu0
      %v1930 = vadd.f32 0.0, %v1929
      %1931 = vmatmul.bf16.gmra.mxu0 %v1893
      %v1932 = vpop.f32.mrf.mxu0
      %v1933 = vadd.f32 0.0, %v1932
      %v1934 = vpop.f32.mrf.mxu0
      %v1935 = vadd.f32 0.0, %v1934
      %1936 = vmatmul.bf16.gmra.mxu0 %v1896
      %v1937 = vpop.f32.mrf.mxu0
      %v1938 = vadd.f32 0.0, %v1937
      %v1939 = vpop.f32.mrf.mxu0
      %v1940 = vadd.f32 0.0, %v1939
      %1941 = vmatmul.bf16.gmra.mxu0 %v1899
      %v1942 = vpop.f32.mrf.mxu0
      %v1943 = vadd.f32 0.0, %v1942
      %v1944 = vpop.f32.mrf.mxu0
      %v1945 = vadd.f32 0.0, %v1944
      %1946 = vmatmul.bf16.gmra.mxu0 %v1902
      %v1947 = vpop.f32.mrf.mxu0
      %v1948 = vadd.f32 0.0, %v1947
      %v1949 = vpop.f32.mrf.mxu0
      %v1950 = vadd.f32 0.0, %v1949
      %1951 = vmatmul.bf16.gmra.mxu0 %v1905
      %v1952 = vpop.f32.mrf.mxu0
      %v1953 = vadd.f32 0.0, %v1952
      %v1954 = vpop.f32.mrf.mxu0
      %v1955 = vadd.f32 0.0, %v1954
      %1956 = vmatmul.bf16.gmra.mxu0 %v1908
      %v1957 = vpop.f32.mrf.mxu0
      %v1958 = vadd.f32 0.0, %v1957
      %v1959 = vpop.f32.mrf.mxu0
      %v1960 = vadd.f32 0.0, %v1959
      %1961 = vdwg.mxu0
      %v1962 = vadd.f32 %v1789, %v1923
      %v1963 = vadd.f32 %v1791, %v1925
      %v1964 = vadd.f32 %v1794, %v1928
      %v1965 = vadd.f32 %v1796, %v1930
      %v1966 = vadd.f32 %v1799, %v1933
      %v1967 = vadd.f32 %v1801, %v1935
      %v1968 = vadd.f32 %v1804, %v1938
      %v1969 = vadd.f32 %v1806, %v1940
      %v1970 = vadd.f32 %v1809, %v1943
      %v1971 = vadd.f32 %v1811, %v1945
      %v1972 = vadd.f32 %v1814, %v1948
      %v1973 = vadd.f32 %v1816, %v1950
      %v1974 = vadd.f32 %v1819, %v1953
      %v1975 = vadd.f32 %v1821, %v1955
      %v1976 = vadd.f32 %v1824, %v1958
      %v1977 = vadd.f32 %v1826, %v1960
      %s1978 = scalar_lea.vmem [#allocation2], 80
      %1979 = vst.msk [vmem:[%s1978] sm:$0xf] %vm847, %v966
      %1980 = vst.msk [vmem:[%s1978 + $0x4] sm:$0xf] %vm847, %v967
      %1981 = vst.msk [vmem:[%s1978 + $0x8] sm:$0xf] %vm847, %v733
      %1982 = vst.msk [vmem:[%s1978 + $0xc] sm:$0xf] %vm847, %v734
      %1983 = vst.msk [vmem:[%s1978 + $0x10] sm:$0xf] %vm847, %v735
      %1984 = vst.msk [vmem:[%s1978 + $0x14] sm:$0xf] %vm847, %v736
      %1985 = vst.msk [vmem:[%s1978 + $0x18] sm:$0xf] %vm847, %v737
      %1986 = vst.msk [vmem:[%s1978 + $0x1c] sm:$0xf] %vm847, %v738
      %1987 = vst.msk [vmem:[%s1978 + $0x20] sm:$0xf] %vm847, %v739
      %1988 = vst.msk [vmem:[%s1978 + $0x24] sm:$0xf] %vm847, %v740
      %1989 = vst.msk [vmem:[%s1978 + $0x28] sm:$0xf] %vm847, %v741
      %1990 = vst.msk [vmem:[%s1978 + $0x2c] sm:$0xf] %vm847, %v742
      %1991 = vst.msk [vmem:[%s1978 + $0x30] sm:$0xf] %vm847, %v743
      %1992 = vst.msk [vmem:[%s1978 + $0x34] sm:$0xf] %vm847, %v744
      %1993 = vst.msk [vmem:[%s1978 + $0x38] sm:$0xf] %vm847, %v745
      %1994 = vst.msk [vmem:[%s1978 + $0x3c] sm:$0xf] %vm847, %v746
      %1995 = vst.msk [vmem:[%s1978 + $0x40] sm:$0xf] %vm847, %v747
      %1996 = vst.msk [vmem:[%s1978 + $0x44] sm:$0xf] %vm847, %v748
      %1997 = vst.msk [vmem:[%s1978 + $0x48] sm:$0xf] %vm847, %v998
      %1998 = vst.msk [vmem:[%s1978 + $0x4c] sm:$0xf] %vm847, %v999
      %v1999 = vld [vmem:[%s1978] sm:$0xf]
      %v2000 = vld [vmem:[%s1978 + $0x4] sm:$0xf]
      %v2001 = vld [vmem:[%s1978 + $0x8] sm:$0xf]
      %v2002 = vld [vmem:[%s1978 + $0xc] sm:$0xf]
      %v2003 = vld [vmem:[%s1978 + $0x10] sm:$0xf]
      %v2004 = vld [vmem:[%s1978 + $0x14] sm:$0xf]
      %v2005 = vld [vmem:[%s1978 + $0x18] sm:$0xf]
      %v2006 = vld [vmem:[%s1978 + $0x1c] sm:$0xf]
      %v2007 = vld [vmem:[%s1978 + $0x20] sm:$0xf]
      %v2008 = vld [vmem:[%s1978 + $0x24] sm:$0xf]
      %v2009 = vld [vmem:[%s1978 + $0x28] sm:$0xf]
      %v2010 = vld [vmem:[%s1978 + $0x2c] sm:$0xf]
      %v2011 = vld [vmem:[%s1978 + $0x30] sm:$0xf]
      %v2012 = vld [vmem:[%s1978 + $0x34] sm:$0xf]
      %v2013 = vld [vmem:[%s1978 + $0x38] sm:$0xf]
      %v2014 = vld [vmem:[%s1978 + $0x3c] sm:$0xf]
      %s2015 = scalar_lea.vmem %s4, 2
      %v2016 = vld [vmem:[%s2015] sm:$0x3]
      %v2033 = vunpack.c.l.b16 %v1999
      %v2034 = vunpack.c.l.b16 %v2000
      %v2035 = vunpack.c.l.b16 %v2001
      %v2036 = vunpack.c.l.b16 %v2002
      %v2037 = vunpack.c.l.b16 %v2003
      %v2038 = vunpack.c.l.b16 %v2004
      %v2039 = vunpack.c.l.b16 %v2005
      %v2040 = vunpack.c.l.b16 %v2006
      %v2041 = vunpack.c.l.b16 %v2007
      %v2042 = vunpack.c.l.b16 %v2008
      %v2043 = vunpack.c.l.b16 %v2009
      %v2044 = vunpack.c.l.b16 %v2010
      %v2045 = vunpack.c.l.b16 %v2011
      %v2046 = vunpack.c.l.b16 %v2012
      %v2047 = vunpack.c.l.b16 %v2013
      %v2048 = vunpack.c.l.b16 %v2014
      %v2049 = vpack.c.b16 %v2034, %v2033
      %v2050 = vpack.c.b16 %v2036, %v2035
      %v2051 = vpack.c.b16 %v2038, %v2037
      %v2052 = vpack.c.b16 %v2040, %v2039
      %v2053 = vpack.c.b16 %v2042, %v2041
      %v2054 = vpack.c.b16 %v2044, %v2043
      %v2055 = vpack.c.b16 %v2046, %v2045
      %v2056 = vpack.c.b16 %v2048, %v2047
      %v2058 = vsel %vm749, %v2049, 0
      %v2061 = vsel %vm749, %v2050, 0
      %v2064 = vsel %vm749, %v2051, 0
      %v2067 = vsel %vm749, %v2052, 0
      %v2070 = vsel %vm749, %v2053, 0
      %v2073 = vsel %vm749, %v2054, 0
      %v2076 = vsel %vm749, %v2055, 0
      %v2079 = vsel %vm749, %v2056, 0
      %v2082 = vsel %vm1715, %v2016, 0
      %2084 = vmatpush.bf16.msra.mxu0 0
      %2085 = vmatpush.bf16.msra.mxu0 0
      %2086 = vmatpush.bf16.msra.mxu0 0
      %2087 = vmatpush.bf16.msra.mxu0 0
      %2088 = vmatpush.bf16.msra.mxu0 0
      %2089 = vmatpush.bf16.msra.mxu0 0
      %2090 = vmatpush.bf16.msra.mxu0 0
      %2091 = vmatpush.bf16.msra.mxu0 %v2082
      %2092 = vmatmul.bf16.gmra.mxu0 %v2058
      %v2093 = vpop.f32.mrf.mxu0
      %v2094 = vadd.f32 0.0, %v2093
      %v2095 = vpop.f32.mrf.mxu0
      %v2096 = vadd.f32 0.0, %v2095
      %2097 = vmatmul.bf16.gmra.mxu0 %v2061
      %v2098 = vpop.f32.mrf.mxu0
      %v2099 = vadd.f32 0.0, %v2098
      %v2100 = vpop.f32.mrf.mxu0
      %v2101 = vadd.f32 0.0, %v2100
      %2102 = vmatmul.bf16.gmra.mxu0 %v2064
      %v2103 = vpop.f32.mrf.mxu0
      %v2104 = vadd.f32 0.0, %v2103
      %v2105 = vpop.f32.mrf.mxu0
      %v2106 = vadd.f32 0.0, %v2105
      %2107 = vmatmul.bf16.gmra.mxu0 %v2067
      %v2108 = vpop.f32.mrf.mxu0
      %v2109 = vadd.f32 0.0, %v2108
      %v2110 = vpop.f32.mrf.mxu0
      %v2111 = vadd.f32 0.0, %v2110
      %2112 = vmatmul.bf16.gmra.mxu0 %v2070
      %v2113 = vpop.f32.mrf.mxu0
      %v2114 = vadd.f32 0.0, %v2113
      %v2115 = vpop.f32.mrf.mxu0
      %v2116 = vadd.f32 0.0, %v2115
      %2117 = vmatmul.bf16.gmra.mxu0 %v2073
      %v2118 = vpop.f32.mrf.mxu0
      %v2119 = vadd.f32 0.0, %v2118
      %v2120 = vpop.f32.mrf.mxu0
      %v2121 = vadd.f32 0.0, %v2120
      %2122 = vmatmul.bf16.gmra.mxu0 %v2076
      %v2123 = vpop.f32.mrf.mxu0
      %v2124 = vadd.f32 0.0, %v2123
      %v2125 = vpop.f32.mrf.mxu0
      %v2126 = vadd.f32 0.0, %v2125
      %2127 = vmatmul.bf16.gmra.mxu0 %v2079
      %v2128 = vpop.f32.mrf.mxu0
      %v2129 = vadd.f32 0.0, %v2128
      %v2130 = vpop.f32.mrf.mxu0
      %v2131 = vadd.f32 0.0, %v2130
      %2132 = vdwg.mxu0
      %v2133 = vadd.f32 %v1962, %v2094
      %v2134 = vadd.f32 %v1963, %v2096
      %v2135 = vadd.f32 %v1964, %v2099
      %v2136 = vadd.f32 %v1965, %v2101
      %v2137 = vadd.f32 %v1966, %v2104
      %v2138 = vadd.f32 %v1967, %v2106
      %v2139 = vadd.f32 %v1968, %v2109
      %v2140 = vadd.f32 %v1969, %v2111
      %v2141 = vadd.f32 %v1970, %v2114
      %v2142 = vadd.f32 %v1971, %v2116
      %v2143 = vadd.f32 %v1972, %v2119
      %v2144 = vadd.f32 %v1973, %v2121
      %v2145 = vadd.f32 %v1974, %v2124
      %v2146 = vadd.f32 %v1975, %v2126
      %v2147 = vadd.f32 %v1976, %v2129
      %v2148 = vadd.f32 %v1977, %v2131
      %v2149 = vld [vmem:[%s1978 + $0x8] sm:$0xf]
      %v2150 = vld [vmem:[%s1978 + $0xc] sm:$0xf]
      %v2151 = vld [vmem:[%s1978 + $0x10] sm:$0xf]
      %v2152 = vld [vmem:[%s1978 + $0x14] sm:$0xf]
      %v2153 = vld [vmem:[%s1978 + $0x18] sm:$0xf]
      %v2154 = vld [vmem:[%s1978 + $0x1c] sm:$0xf]
      %v2155 = vld [vmem:[%s1978 + $0x20] sm:$0xf]
      %v2156 = vld [vmem:[%s1978 + $0x24] sm:$0xf]
      %v2157 = vld [vmem:[%s1978 + $0x28] sm:$0xf]
      %v2158 = vld [vmem:[%s1978 + $0x2c] sm:$0xf]
      %v2159 = vld [vmem:[%s1978 + $0x30] sm:$0xf]
      %v2160 = vld [vmem:[%s1978 + $0x34] sm:$0xf]
      %v2161 = vld [vmem:[%s1978 + $0x38] sm:$0xf]
      %v2162 = vld [vmem:[%s1978 + $0x3c] sm:$0xf]
      %v2163 = vld [vmem:[%s1978 + $0x40] sm:$0xf]
      %v2164 = vld [vmem:[%s1978 + $0x44] sm:$0xf]
      %s2165 = scalar_lea.vmem %s4, 8
      %v2166 = vld [vmem:[%s2165] sm:$0x3]
      %v2183 = vunpack.c.l.b16 %v2149
      %v2184 = vunpack.c.l.b16 %v2150
      %v2185 = vunpack.c.l.b16 %v2151
      %v2186 = vunpack.c.l.b16 %v2152
      %v2187 = vunpack.c.l.b16 %v2153
      %v2188 = vunpack.c.l.b16 %v2154
      %v2189 = vunpack.c.l.b16 %v2155
      %v2190 = vunpack.c.l.b16 %v2156
      %v2191 = vunpack.c.l.b16 %v2157
      %v2192 = vunpack.c.l.b16 %v2158
      %v2193 = vunpack.c.l.b16 %v2159
      %v2194 = vunpack.c.l.b16 %v2160
      %v2195 = vunpack.c.l.b16 %v2161
      %v2196 = vunpack.c.l.b16 %v2162
      %v2197 = vunpack.c.l.b16 %v2163
      %v2198 = vunpack.c.l.b16 %v2164
      %v2199 = vpack.c.b16 %v2184, %v2183
      %v2200 = vpack.c.b16 %v2186, %v2185
      %v2201 = vpack.c.b16 %v2188, %v2187
      %v2202 = vpack.c.b16 %v2190, %v2189
      %v2203 = vpack.c.b16 %v2192, %v2191
      %v2204 = vpack.c.b16 %v2194, %v2193
      %v2205 = vpack.c.b16 %v2196, %v2195
      %v2206 = vpack.c.b16 %v2198, %v2197
      %v2208 = vsel %vm749, %v2199, 0
      %v2211 = vsel %vm749, %v2200, 0
      %v2214 = vsel %vm749, %v2201, 0
      %v2217 = vsel %vm749, %v2202, 0
      %v2220 = vsel %vm749, %v2203, 0
      %v2223 = vsel %vm749, %v2204, 0
      %v2226 = vsel %vm749, %v2205, 0
      %v2229 = vsel %vm749, %v2206, 0
      %v2232 = vsel %vm1715, %v2166, 0
      %2234 = vmatpush.bf16.msra.mxu0 0
      %2235 = vmatpush.bf16.msra.mxu0 0
      %2236 = vmatpush.bf16.msra.mxu0 0
      %2237 = vmatpush.bf16.msra.mxu0 0
      %2238 = vmatpush.bf16.msra.mxu0 0
      %2239 = vmatpush.bf16.msra.mxu0 0
      %2240 = vmatpush.bf16.msra.mxu0 0
      %2241 = vmatpush.bf16.msra.mxu0 %v2232
      %2242 = vmatmul.bf16.gmra.mxu0 %v2208
      %v2243 = vpop.f32.mrf.mxu0
      %v2244 = vadd.f32 0.0, %v2243
      %v2245 = vpop.f32.mrf.mxu0
      %v2246 = vadd.f32 0.0, %v2245
      %2247 = vmatmul.bf16.gmra.mxu0 %v2211
      %v2248 = vpop.f32.mrf.mxu0
      %v2249 = vadd.f32 0.0, %v2248
      %v2250 = vpop.f32.mrf.mxu0
      %v2251 = vadd.f32 0.0, %v2250
      %2252 = vmatmul.bf16.gmra.mxu0 %v2214
      %v2253 = vpop.f32.mrf.mxu0
      %v2254 = vadd.f32 0.0, %v2253
      %v2255 = vpop.f32.mrf.mxu0
      %v2256 = vadd.f32 0.0, %v2255
      %2257 = vmatmul.bf16.gmra.mxu0 %v2217
      %v2258 = vpop.f32.mrf.mxu0
      %v2259 = vadd.f32 0.0, %v2258
      %v2260 = vpop.f32.mrf.mxu0
      %v2261 = vadd.f32 0.0, %v2260
      %2262 = vmatmul.bf16.gmra.mxu0 %v2220
      %v2263 = vpop.f32.mrf.mxu0
      %v2264 = vadd.f32 0.0, %v2263
      %v2265 = vpop.f32.mrf.mxu0
      %v2266 = vadd.f32 0.0, %v2265
      %2267 = vmatmul.bf16.gmra.mxu0 %v2223
      %v2268 = vpop.f32.mrf.mxu0
      %v2269 = vadd.f32 0.0, %v2268
      %v2270 = vpop.f32.mrf.mxu0
      %v2271 = vadd.f32 0.0, %v2270
      %2272 = vmatmul.bf16.gmra.mxu0 %v2226
      %v2273 = vpop.f32.mrf.mxu0
      %v2274 = vadd.f32 0.0, %v2273
      %v2275 = vpop.f32.mrf.mxu0
      %v2276 = vadd.f32 0.0, %v2275
      %2277 = vmatmul.bf16.gmra.mxu0 %v2229
      %v2278 = vpop.f32.mrf.mxu0
      %v2279 = vadd.f32 0.0, %v2278
      %v2280 = vpop.f32.mrf.mxu0
      %v2281 = vadd.f32 0.0, %v2280
      %2282 = vdwg.mxu0
      %v2283 = vadd.f32 %v2133, %v2244
      %v2284 = vadd.f32 %v2134, %v2246
      %v2285 = vadd.f32 %v2135, %v2249
      %v2286 = vadd.f32 %v2136, %v2251
      %v2287 = vadd.f32 %v2137, %v2254
      %v2288 = vadd.f32 %v2138, %v2256
      %v2289 = vadd.f32 %v2139, %v2259
      %v2290 = vadd.f32 %v2140, %v2261
      %v2291 = vadd.f32 %v2141, %v2264
      %v2292 = vadd.f32 %v2142, %v2266
      %v2293 = vadd.f32 %v2143, %v2269
      %v2294 = vadd.f32 %v2144, %v2271
      %v2295 = vadd.f32 %v2145, %v2274
      %v2296 = vadd.f32 %v2146, %v2276
      %v2297 = vadd.f32 %v2147, %v2279
      %v2298 = vadd.f32 %v2148, %v2281
      %v2299 = vld [vmem:[%s1978 + $0x10] sm:$0xf]
      %v2300 = vld [vmem:[%s1978 + $0x14] sm:$0xf]
      %v2301 = vld [vmem:[%s1978 + $0x18] sm:$0xf]
      %v2302 = vld [vmem:[%s1978 + $0x1c] sm:$0xf]
      %v2303 = vld [vmem:[%s1978 + $0x20] sm:$0xf]
      %v2304 = vld [vmem:[%s1978 + $0x24] sm:$0xf]
      %v2305 = vld [vmem:[%s1978 + $0x28] sm:$0xf]
      %v2306 = vld [vmem:[%s1978 + $0x2c] sm:$0xf]
      %v2307 = vld [vmem:[%s1978 + $0x30] sm:$0xf]
      %v2308 = vld [vmem:[%s1978 + $0x34] sm:$0xf]
      %v2309 = vld [vmem:[%s1978 + $0x38] sm:$0xf]
      %v2310 = vld [vmem:[%s1978 + $0x3c] sm:$0xf]
      %v2311 = vld [vmem:[%s1978 + $0x40] sm:$0xf]
      %v2312 = vld [vmem:[%s1978 + $0x44] sm:$0xf]
      %v2313 = vld [vmem:[%s1978 + $0x48] sm:$0xf]
      %v2314 = vld [vmem:[%s1978 + $0x4c] sm:$0xf]
      %s2315 = scalar_lea.vmem %s4, 14
      %v2316 = vld [vmem:[%s2315] sm:$0x3]
      %v2333 = vunpack.c.l.b16 %v2299
      %v2334 = vunpack.c.l.b16 %v2300
      %v2335 = vunpack.c.l.b16 %v2301
      %v2336 = vunpack.c.l.b16 %v2302
      %v2337 = vunpack.c.l.b16 %v2303
      %v2338 = vunpack.c.l.b16 %v2304
      %v2339 = vunpack.c.l.b16 %v2305
      %v2340 = vunpack.c.l.b16 %v2306
      %v2341 = vunpack.c.l.b16 %v2307
      %v2342 = vunpack.c.l.b16 %v2308
      %v2343 = vunpack.c.l.b16 %v2309
      %v2344 = vunpack.c.l.b16 %v2310
      %v2345 = vunpack.c.l.b16 %v2311
      %v2346 = vunpack.c.l.b16 %v2312
      %v2347 = vunpack.c.l.b16 %v2313
      %v2348 = vunpack.c.l.b16 %v2314
      %v2349 = vpack.c.b16 %v2334, %v2333
      %v2350 = vpack.c.b16 %v2336, %v2335
      %v2351 = vpack.c.b16 %v2338, %v2337
      %v2352 = vpack.c.b16 %v2340, %v2339
      %v2353 = vpack.c.b16 %v2342, %v2341
      %v2354 = vpack.c.b16 %v2344, %v2343
      %v2355 = vpack.c.b16 %v2346, %v2345
      %v2356 = vpack.c.b16 %v2348, %v2347
      %v2358 = vsel %vm749, %v2349, 0
      %v2361 = vsel %vm749, %v2350, 0
      %v2364 = vsel %vm749, %v2351, 0
      %v2367 = vsel %vm749, %v2352, 0
      %v2370 = vsel %vm749, %v2353, 0
      %v2373 = vsel %vm749, %v2354, 0
      %v2376 = vsel %vm749, %v2355, 0
      %v2379 = vsel %vm749, %v2356, 0
      %v2382 = vsel %vm1715, %v2316, 0
      %2384 = vmatpush.bf16.msra.mxu0 0
      %2385 = vmatpush.bf16.msra.mxu0 0
      %2386 = vmatpush.bf16.msra.mxu0 0
      %2387 = vmatpush.bf16.msra.mxu0 0
      %2388 = vmatpush.bf16.msra.mxu0 0
      %2389 = vmatpush.bf16.msra.mxu0 0
      %2390 = vmatpush.bf16.msra.mxu0 0
      %2391 = vmatpush.bf16.msra.mxu0 %v2382
      %2392 = vmatmul.bf16.gmra.mxu0 %v2358
      %v2393 = vpop.f32.mrf.mxu0
      %v2394 = vadd.f32 0.0, %v2393
      %v2395 = vpop.f32.mrf.mxu0
      %v2396 = vadd.f32 0.0, %v2395
      %2397 = vmatmul.bf16.gmra.mxu0 %v2361
      %v2398 = vpop.f32.mrf.mxu0
      %v2399 = vadd.f32 0.0, %v2398
      %v2400 = vpop.f32.mrf.mxu0
      %v2401 = vadd.f32 0.0, %v2400
      %2402 = vmatmul.bf16.gmra.mxu0 %v2364
      %v2403 = vpop.f32.mrf.mxu0
      %v2404 = vadd.f32 0.0, %v2403
      %v2405 = vpop.f32.mrf.mxu0
      %v2406 = vadd.f32 0.0, %v2405
      %2407 = vmatmul.bf16.gmra.mxu0 %v2367
      %v2408 = vpop.f32.mrf.mxu0
      %v2409 = vadd.f32 0.0, %v2408
      %v2410 = vpop.f32.mrf.mxu0
      %v2411 = vadd.f32 0.0, %v2410
      %2412 = vmatmul.bf16.gmra.mxu0 %v2370
      %v2413 = vpop.f32.mrf.mxu0
      %v2414 = vadd.f32 0.0, %v2413
      %v2415 = vpop.f32.mrf.mxu0
      %v2416 = vadd.f32 0.0, %v2415
      %2417 = vmatmul.bf16.gmra.mxu0 %v2373
      %v2418 = vpop.f32.mrf.mxu0
      %v2419 = vadd.f32 0.0, %v2418
      %v2420 = vpop.f32.mrf.mxu0
      %v2421 = vadd.f32 0.0, %v2420
      %2422 = vmatmul.bf16.gmra.mxu0 %v2376
      %v2423 = vpop.f32.mrf.mxu0
      %v2424 = vadd.f32 0.0, %v2423
      %v2425 = vpop.f32.mrf.mxu0
      %v2426 = vadd.f32 0.0, %v2425
      %2427 = vmatmul.bf16.gmra.mxu0 %v2379
      %v2428 = vpop.f32.mrf.mxu0
      %v2429 = vadd.f32 0.0, %v2428
      %v2430 = vpop.f32.mrf.mxu0
      %v2431 = vadd.f32 0.0, %v2430
      %2432 = vdwg.mxu0
      %v2433 = vadd.f32 %v2283, %v2394
      %v2434 = vadd.f32 %v2284, %v2396
      %v2435 = vadd.f32 %v2285, %v2399
      %v2436 = vadd.f32 %v2286, %v2401
      %v2437 = vadd.f32 %v2287, %v2404
      %v2438 = vadd.f32 %v2288, %v2406
      %v2439 = vadd.f32 %v2289, %v2409
      %v2440 = vadd.f32 %v2290, %v2411
      %v2441 = vadd.f32 %v2291, %v2414
      %v2442 = vadd.f32 %v2292, %v2416
      %v2443 = vadd.f32 %v2293, %v2419
      %v2444 = vadd.f32 %v2294, %v2421
      %v2445 = vadd.f32 %v2295, %v2424
      %v2446 = vadd.f32 %v2296, %v2426
      %v2447 = vadd.f32 %v2297, %v2429
      %v2448 = vadd.f32 %v2298, %v2431
      %vm2449 = vcmp.le.s32.totalorder %v1193, 14
      %vm2450 = vcmp.le.s32.totalorder %v1194, 14
      %v2451 = vrot.slane %v1226, 1
      %v2452 = vor.u32 %v1223, %v2451
      %v2454 = vpack.c.b16 %v1220, %v1220
      %v2456 = vshll.u32 %v2454, 16
      %v2458 = vrot.slane %v2456, 1
      %vm2460 = vcmask 1047552
      %vm2461 = vsmask.f32 7424
      %vm2462 = vmand %vm2460, %vm2461
      %v2463 = vsel %vm2462, %v2452, %v2458
      %v2464 = vsel %vm2449, 1, 0
      %v2465 = vsel %vm2450, 1, 0
      %vm2466 = vcmp.eq.s32.totalorder %v2464, 1
      %vm2467 = vcmp.eq.s32.totalorder %v2465, 1
      %vm2468 = vmpackc.low %vm2466, %vm2466
      %vm2469 = vmpackc.low %vm2467, %vm2467
      %v2470 = vsel %vm2468, 65537, 0
      %v2471 = vsel %vm2469, 65537, 0
      %v2472 = vunpack.c.l.b16 %v2470
      %v2473 = vunpack.c.l.b16 %v2471
      %v2474 = vpack.c.b16 %v2473, %v2472
      %v2475 = vunpack.c.l.b16 %v2474
      %v2476 = vunpack.c.h.b16 %v2474
      %v2477 = vunpack.c.l.b16 0
      %v2478 = vunpack.c.h.b16 0
      %vm2479 = vcmp.ne.s32.totalorder %v2475, %v2477
      %vm2480 = vcmp.ne.s32.totalorder %v2476, %v2478
      %vm2481 = vmpackc.low %vm2480, %vm2479
      %v2482 = vsel %vm2481, %v2463, 0
      %v2484 = vunpack.c.l.b16 %v2482
      %v2485 = vunpack.c.h.b16 %v2482
      %v2486 = vpack.c.b16 %v2484, %v2484
      %v2487 = vpack.c.b16 %v2485, %v2485
      %2490 = vst.msk [vmem:[#allocation2] sm:$0xf] %vm847, %v2486
      %2491 = vst.msk [vmem:[#allocation2 + $0x4] sm:$0xf] %vm847, %v2487
      %vm2492 = vcmp.le.s32.totalorder %v1195, 14
      %vm2493 = vcmp.le.s32.totalorder %v1196, 14
      %vm2494 = vcmp.le.s32.totalorder %v1197, 14
      %vm2495 = vcmp.le.s32.totalorder %v1198, 14
      %vm2496 = vcmp.le.s32.totalorder %v1199, 14
      %vm2497 = vcmp.le.s32.totalorder %v1200, 14
      %vm2498 = vcmp.le.s32.totalorder %v1201, 14
      %vm2499 = vcmp.le.s32.totalorder %v1202, 14
      %vm2500 = vcmp.le.s32.totalorder %v1203, 14
      %vm2501 = vcmp.le.s32.totalorder %v1204, 14
      %vm2502 = vcmp.le.s32.totalorder %v1205, 14
      %vm2503 = vcmp.le.s32.totalorder %v1206, 14
      %vm2504 = vcmp.le.s32.totalorder %v1207, 14
      %vm2505 = vcmp.le.s32.totalorder %v1208, 14
      %v2506 = vrot.slane %v1326, 1
      %v2507 = vor.u32 %v1323, %v2506
      %v2508 = vrot.slane %v1333, 1
      %v2509 = vsel %vm2461, %v2507, %v2508
      %v2510 = vor.u32 %v1330, %v2508
      %v2511 = vrot.slane %v1341, 1
      %v2512 = vsel %vm2461, %v2510, %v2511
      %v2513 = vor.u32 %v1338, %v2511
      %v2514 = vrot.slane %v1349, 1
      %v2515 = vsel %vm2461, %v2513, %v2514
      %v2516 = vor.u32 %v1346, %v2514
      %v2517 = vrot.slane %v1357, 1
      %v2518 = vsel %vm2461, %v2516, %v2517
      %v2519 = vor.u32 %v1354, %v2517
      %v2520 = vrot.slane %v1365, 1
      %v2521 = vsel %vm2461, %v2519, %v2520
      %v2522 = vor.u32 %v1362, %v2520
      %v2523 = vrot.slane %v1373, 1
      %v2524 = vsel %vm2461, %v2522, %v2523
      %v2525 = vor.u32 %v1370, %v2523
      %v2526 = vrot.slane %v1381, 1
      %v2527 = vsel %vm2461, %v2525, %v2526
      %v2528 = vor.u32 %v1378, %v2526
      %v2537 = vpack.c.b16 %v1299, %v1299
      %v2539 = vshll.u32 %v2537, 16
      %v2541 = vrot.slane %v2539, 1
      %v2543 = vsel %vm2462, %v2528, %v2541
      %v2544 = vsel %vm2492, 1, 0
      %v2545 = vsel %vm2493, 1, 0
      %v2546 = vsel %vm2494, 1, 0
      %v2547 = vsel %vm2495, 1, 0
      %v2548 = vsel %vm2496, 1, 0
      %v2549 = vsel %vm2497, 1, 0
      %v2550 = vsel %vm2498, 1, 0
      %v2551 = vsel %vm2499, 1, 0
      %v2552 = vsel %vm2500, 1, 0
      %v2553 = vsel %vm2501, 1, 0
      %v2554 = vsel %vm2502, 1, 0
      %v2555 = vsel %vm2503, 1, 0
      %v2556 = vsel %vm2504, 1, 0
      %v2557 = vsel %vm2505, 1, 0
      %vm2558 = vcmp.eq.s32.totalorder %v2544, 1
      %vm2559 = vcmp.eq.s32.totalorder %v2545, 1
      %vm2560 = vcmp.eq.s32.totalorder %v2546, 1
      %vm2561 = vcmp.eq.s32.totalorder %v2547, 1
      %vm2562 = vcmp.eq.s32.totalorder %v2548, 1
      %vm2563 = vcmp.eq.s32.totalorder %v2549, 1
      %vm2564 = vcmp.eq.s32.totalorder %v2550, 1
      %vm2565 = vcmp.eq.s32.totalorder %v2551, 1
      %vm2566 = vcmp.eq.s32.totalorder %v2552, 1
      %vm2567 = vcmp.eq.s32.totalorder %v2553, 1
      %vm2568 = vcmp.eq.s32.totalorder %v2554, 1
      %vm2569 = vcmp.eq.s32.totalorder %v2555, 1
      %vm2570 = vcmp.eq.s32.totalorder %v2556, 1
      %vm2571 = vcmp.eq.s32.totalorder %v2557, 1
      %vm2572 = vmpackc.low %vm2558, %vm2558
      %vm2573 = vmpackc.low %vm2559, %vm2559
      %vm2574 = vmpackc.low %vm2560, %vm2560
      %vm2575 = vmpackc.low %vm2561, %vm2561
      %vm2576 = vmpackc.low %vm2562, %vm2562
      %vm2577 = vmpackc.low %vm2563, %vm2563
      %vm2578 = vmpackc.low %vm2564, %vm2564
      %vm2579 = vmpackc.low %vm2565, %vm2565
      %vm2580 = vmpackc.low %vm2566, %vm2566
      %vm2581 = vmpackc.low %vm2567, %vm2567
      %vm2582 = vmpackc.low %vm2568, %vm2568
      %vm2583 = vmpackc.low %vm2569, %vm2569
      %vm2584 = vmpackc.low %vm2570, %vm2570
      %vm2585 = vmpackc.low %vm2571, %vm2571
      %v2586 = vsel %vm2572, 65537, 0
      %v2587 = vsel %vm2573, 65537, 0
      %v2588 = vsel %vm2574, 65537, 0
      %v2589 = vsel %vm2575, 65537, 0
      %v2590 = vsel %vm2576, 65537, 0
      %v2591 = vsel %vm2577, 65537, 0
      %v2592 = vsel %vm2578, 65537, 0
      %v2593 = vsel %vm2579, 65537, 0
      %v2594 = vsel %vm2580, 65537, 0
      %v2595 = vsel %vm2581, 65537, 0
      %v2596 = vsel %vm2582, 65537, 0
      %v2597 = vsel %vm2583, 65537, 0
      %v2598 = vsel %vm2584, 65537, 0
      %v2599 = vsel %vm2585, 65537, 0
      %v2600 = vunpack.c.l.b16 %v2586
      %v2601 = vunpack.c.l.b16 %v2587
      %v2602 = vunpack.c.l.b16 %v2588
      %v2603 = vunpack.c.l.b16 %v2589
      %v2604 = vunpack.c.l.b16 %v2590
      %v2605 = vunpack.c.l.b16 %v2591
      %v2606 = vunpack.c.l.b16 %v2592
      %v2607 = vunpack.c.l.b16 %v2593
      %v2608 = vunpack.c.l.b16 %v2594
      %v2609 = vunpack.c.l.b16 %v2595
      %v2610 = vunpack.c.l.b16 %v2596
      %v2611 = vunpack.c.l.b16 %v2597
      %v2612 = vunpack.c.l.b16 %v2598
      %v2613 = vunpack.c.l.b16 %v2599
      %v2614 = vpack.c.b16 %v2601, %v2600
      %v2615 = vpack.c.b16 %v2603, %v2602
      %v2616 = vpack.c.b16 %v2605, %v2604
      %v2617 = vpack.c.b16 %v2607, %v2606
      %v2618 = vpack.c.b16 %v2609, %v2608
      %v2619 = vpack.c.b16 %v2611, %v2610
      %v2620 = vpack.c.b16 %v2613, %v2612
      %v2621 = vunpack.c.l.b16 %v2614
      %v2622 = vunpack.c.h.b16 %v2614
      %v2623 = vunpack.c.l.b16 0
      %v2624 = vunpack.c.h.b16 0
      %vm2625 = vcmp.ne.s32.totalorder %v2621, %v2623
      %vm2626 = vcmp.ne.s32.totalorder %v2622, %v2624
      %vm2627 = vmpackc.low %vm2626, %vm2625
      %v2628 = vunpack.c.l.b16 %v2615
      %v2629 = vunpack.c.h.b16 %v2615
      %v2630 = vunpack.c.l.b16 0
      %v2631 = vunpack.c.h.b16 0
      %vm2632 = vcmp.ne.s32.totalorder %v2628, %v2630
      %vm2633 = vcmp.ne.s32.totalorder %v2629, %v2631
      %vm2634 = vmpackc.low %vm2633, %vm2632
      %v2635 = vunpack.c.l.b16 %v2616
      %v2636 = vunpack.c.h.b16 %v2616
      %v2637 = vunpack.c.l.b16 0
      %v2638 = vunpack.c.h.b16 0
      %vm2639 = vcmp.ne.s32.totalorder %v2635, %v2637
      %vm2640 = vcmp.ne.s32.totalorder %v2636, %v2638
      %vm2641 = vmpackc.low %vm2640, %vm2639
      %v2642 = vunpack.c.l.b16 %v2617
      %v2643 = vunpack.c.h.b16 %v2617
      %v2644 = vunpack.c.l.b16 0
      %v2645 = vunpack.c.h.b16 0
      %vm2646 = vcmp.ne.s32.totalorder %v2642, %v2644
      %vm2647 = vcmp.ne.s32.totalorder %v2643, %v2645
      %vm2648 = vmpackc.low %vm2647, %vm2646
      %v2649 = vunpack.c.l.b16 %v2618
      %v2650 = vunpack.c.h.b16 %v2618
      %v2651 = vunpack.c.l.b16 0
      %v2652 = vunpack.c.h.b16 0
      %vm2653 = vcmp.ne.s32.totalorder %v2649, %v2651
      %vm2654 = vcmp.ne.s32.totalorder %v2650, %v2652
      %vm2655 = vmpackc.low %vm2654, %vm2653
      %v2656 = vunpack.c.l.b16 %v2619
      %v2657 = vunpack.c.h.b16 %v2619
      %v2658 = vunpack.c.l.b16 0
      %v2659 = vunpack.c.h.b16 0
      %vm2660 = vcmp.ne.s32.totalorder %v2656, %v2658
      %vm2661 = vcmp.ne.s32.totalorder %v2657, %v2659
      %vm2662 = vmpackc.low %vm2661, %vm2660
      %v2663 = vunpack.c.l.b16 %v2620
      %v2664 = vunpack.c.h.b16 %v2620
      %v2665 = vunpack.c.l.b16 0
      %v2666 = vunpack.c.h.b16 0
      %vm2667 = vcmp.ne.s32.totalorder %v2663, %v2665
      %vm2668 = vcmp.ne.s32.totalorder %v2664, %v2666
      %vm2669 = vmpackc.low %vm2668, %vm2667
      %v2670 = vsel %vm2481, %v2509, 0
      %v2671 = vsel %vm2627, %v2512, 0
      %v2672 = vsel %vm2634, %v2515, 0
      %v2673 = vsel %vm2641, %v2518, 0
      %v2674 = vsel %vm2648, %v2521, 0
      %v2675 = vsel %vm2655, %v2524, 0
      %v2676 = vsel %vm2662, %v2527, 0
      %v2677 = vsel %vm2669, %v2543, 0
      %v2686 = vunpack.c.l.b16 %v2670
      %v2687 = vunpack.c.h.b16 %v2670
      %v2688 = vunpack.c.l.b16 %v2671
      %v2689 = vunpack.c.h.b16 %v2671
      %v2690 = vunpack.c.l.b16 %v2672
      %v2691 = vunpack.c.h.b16 %v2672
      %v2692 = vunpack.c.l.b16 %v2673
      %v2693 = vunpack.c.h.b16 %v2673
      %v2694 = vunpack.c.l.b16 %v2674
      %v2695 = vunpack.c.h.b16 %v2674
      %v2696 = vunpack.c.l.b16 %v2675
      %v2697 = vunpack.c.h.b16 %v2675
      %v2698 = vunpack.c.l.b16 %v2676
      %v2699 = vunpack.c.h.b16 %v2676
      %v2700 = vunpack.c.l.b16 %v2677
      %v2701 = vunpack.c.h.b16 %v2677
      %v2702 = vpack.c.b16 %v2686, %v2686
      %v2703 = vpack.c.b16 %v2687, %v2687
      %v2704 = vpack.c.b16 %v2688, %v2688
      %v2705 = vpack.c.b16 %v2689, %v2689
      %v2706 = vpack.c.b16 %v2690, %v2690
      %v2707 = vpack.c.b16 %v2691, %v2691
      %v2708 = vpack.c.b16 %v2692, %v2692
      %v2709 = vpack.c.b16 %v2693, %v2693
      %v2710 = vpack.c.b16 %v2694, %v2694
      %v2711 = vpack.c.b16 %v2695, %v2695
      %v2712 = vpack.c.b16 %v2696, %v2696
      %v2713 = vpack.c.b16 %v2697, %v2697
      %v2714 = vpack.c.b16 %v2698, %v2698
      %v2715 = vpack.c.b16 %v2699, %v2699
      %v2716 = vpack.c.b16 %v2700, %v2700
      %v2717 = vpack.c.b16 %v2701, %v2701
      %2734 = vst.msk [vmem:[#allocation2 + $0x8] sm:$0xf] %vm847, %v2702
      %2735 = vst.msk [vmem:[#allocation2 + $0xc] sm:$0xf] %vm847, %v2703
      %2736 = vst.msk [vmem:[#allocation2 + $0x10] sm:$0xf] %vm847, %v2704
      %2737 = vst.msk [vmem:[#allocation2 + $0x14] sm:$0xf] %vm847, %v2705
      %2738 = vst.msk [vmem:[#allocation2 + $0x18] sm:$0xf] %vm847, %v2706
      %2739 = vst.msk [vmem:[#allocation2 + $0x1c] sm:$0xf] %vm847, %v2707
      %2740 = vst.msk [vmem:[#allocation2 + $0x20] sm:$0xf] %vm847, %v2708
      %2741 = vst.msk [vmem:[#allocation2 + $0x24] sm:$0xf] %vm847, %v2709
      %2742 = vst.msk [vmem:[#allocation2 + $0x28] sm:$0xf] %vm847, %v2710
      %2743 = vst.msk [vmem:[#allocation2 + $0x2c] sm:$0xf] %vm847, %v2711
      %2744 = vst.msk [vmem:[#allocation2 + $0x30] sm:$0xf] %vm847, %v2712
      %2745 = vst.msk [vmem:[#allocation2 + $0x34] sm:$0xf] %vm847, %v2713
      %2746 = vst.msk [vmem:[#allocation2 + $0x38] sm:$0xf] %vm847, %v2714
      %2747 = vst.msk [vmem:[#allocation2 + $0x3c] sm:$0xf] %vm847, %v2715
      %2748 = vst.msk [vmem:[#allocation2 + $0x40] sm:$0xf] %vm847, %v2716
      %2749 = vst.msk [vmem:[#allocation2 + $0x44] sm:$0xf] %vm847, %v2717
      %v2750 = vrot.slane %v1615, 1
      %v2751 = vor.u32 %v1612, %v2750
      %v2753 = vpack.c.b16 %v1609, %v1609
      %v2755 = vshll.u32 %v2753, 16
      %v2757 = vrot.slane %v2755, 1
      %v2759 = vsel %vm2462, %v2751, %v2757
      %v2760 = vsel %vm2481, %v2759, 0
      %v2762 = vunpack.c.l.b16 %v2760
      %v2763 = vunpack.c.h.b16 %v2760
      %v2764 = vpack.c.b16 %v2762, %v2762
      %v2765 = vpack.c.b16 %v2763, %v2763
      %2768 = vst.msk [vmem:[#allocation2 + $0x48] sm:$0xf] %vm847, %v2764
      %2769 = vst.msk [vmem:[#allocation2 + $0x4c] sm:$0xf] %vm847, %v2765
      %v2770 = vld [vmem:[#allocation2] sm:$0xf]
      %v2771 = vld [vmem:[#allocation2 + $0x4] sm:$0xf]
      %v2772 = vld [vmem:[#allocation2 + $0x8] sm:$0xf]
      %v2773 = vld [vmem:[#allocation2 + $0xc] sm:$0xf]
      %v2774 = vld [vmem:[#allocation2 + $0x10] sm:$0xf]
      %v2775 = vld [vmem:[#allocation2 + $0x14] sm:$0xf]
      %v2776 = vld [vmem:[#allocation2 + $0x18] sm:$0xf]
      %v2777 = vld [vmem:[#allocation2 + $0x1c] sm:$0xf]
      %v2778 = vld [vmem:[#allocation2 + $0x20] sm:$0xf]
      %v2779 = vld [vmem:[#allocation2 + $0x24] sm:$0xf]
      %v2780 = vld [vmem:[#allocation2 + $0x28] sm:$0xf]
      %v2781 = vld [vmem:[#allocation2 + $0x2c] sm:$0xf]
      %v2782 = vld [vmem:[#allocation2 + $0x30] sm:$0xf]
      %v2783 = vld [vmem:[#allocation2 + $0x34] sm:$0xf]
      %v2784 = vld [vmem:[#allocation2 + $0x38] sm:$0xf]
      %v2785 = vld [vmem:[#allocation2 + $0x3c] sm:$0xf]
      %s2786 = scalar_lea.vmem %s4, 4
      %v2787 = vld [vmem:[%s2786] sm:$0x3]
      %v2804 = vunpack.c.l.b16 %v2770
      %v2805 = vunpack.c.l.b16 %v2771
      %v2806 = vunpack.c.l.b16 %v2772
      %v2807 = vunpack.c.l.b16 %v2773
      %v2808 = vunpack.c.l.b16 %v2774
      %v2809 = vunpack.c.l.b16 %v2775
      %v2810 = vunpack.c.l.b16 %v2776
      %v2811 = vunpack.c.l.b16 %v2777
      %v2812 = vunpack.c.l.b16 %v2778
      %v2813 = vunpack.c.l.b16 %v2779
      %v2814 = vunpack.c.l.b16 %v2780
      %v2815 = vunpack.c.l.b16 %v2781
      %v2816 = vunpack.c.l.b16 %v2782
      %v2817 = vunpack.c.l.b16 %v2783
      %v2818 = vunpack.c.l.b16 %v2784
      %v2819 = vunpack.c.l.b16 %v2785
      %v2820 = vpack.c.b16 %v2805, %v2804
      %v2821 = vpack.c.b16 %v2807, %v2806
      %v2822 = vpack.c.b16 %v2809, %v2808
      %v2823 = vpack.c.b16 %v2811, %v2810
      %v2824 = vpack.c.b16 %v2813, %v2812
      %v2825 = vpack.c.b16 %v2815, %v2814
      %v2826 = vpack.c.b16 %v2817, %v2816
      %v2827 = vpack.c.b16 %v2819, %v2818
      %v2829 = vsel %vm749, %v2820, 0
      %v2832 = vsel %vm749, %v2821, 0
      %v2835 = vsel %vm749, %v2822, 0
      %v2838 = vsel %vm749, %v2823, 0
      %v2841 = vsel %vm749, %v2824, 0
      %v2844 = vsel %vm749, %v2825, 0
      %v2847 = vsel %vm749, %v2826, 0
      %v2850 = vsel %vm749, %v2827, 0
      %v2853 = vsel %vm1715, %v2787, 0
      %2855 = vmatpush.bf16.msra.mxu0 0
      %2856 = vmatpush.bf16.msra.mxu0 0
      %2857 = vmatpush.bf16.msra.mxu0 0
      %2858 = vmatpush.bf16.msra.mxu0 0
      %2859 = vmatpush.bf16.msra.mxu0 0
      %2860 = vmatpush.bf16.msra.mxu0 0
      %2861 = vmatpush.bf16.msra.mxu0 0
      %2862 = vmatpush.bf16.msra.mxu0 %v2853
      %2863 = vmatmul.bf16.gmra.mxu0 %v2829
      %v2864 = vpop.f32.mrf.mxu0
      %v2865 = vadd.f32 0.0, %v2864
      %v2866 = vpop.f32.mrf.mxu0
      %v2867 = vadd.f32 0.0, %v2866
      %2868 = vmatmul.bf16.gmra.mxu0 %v2832
      %v2869 = vpop.f32.mrf.mxu0
      %v2870 = vadd.f32 0.0, %v2869
      %v2871 = vpop.f32.mrf.mxu0
      %v2872 = vadd.f32 0.0, %v2871
      %2873 = vmatmul.bf16.gmra.mxu0 %v2835
      %v2874 = vpop.f32.mrf.mxu0
      %v2875 = vadd.f32 0.0, %v2874
      %v2876 = vpop.f32.mrf.mxu0
      %v2877 = vadd.f32 0.0, %v2876
      %2878 = vmatmul.bf16.gmra.mxu0 %v2838
      %v2879 = vpop.f32.mrf.mxu0
      %v2880 = vadd.f32 0.0, %v2879
      %v2881 = vpop.f32.mrf.mxu0
      %v2882 = vadd.f32 0.0, %v2881
      %2883 = vmatmul.bf16.gmra.mxu0 %v2841
      %v2884 = vpop.f32.mrf.mxu0
      %v2885 = vadd.f32 0.0, %v2884
      %v2886 = vpop.f32.mrf.mxu0
      %v2887 = vadd.f32 0.0, %v2886
      %2888 = vmatmul.bf16.gmra.mxu0 %v2844
      %v2889 = vpop.f32.mrf.mxu0
      %v2890 = vadd.f32 0.0, %v2889
      %v2891 = vpop.f32.mrf.mxu0
      %v2892 = vadd.f32 0.0, %v2891
      %2893 = vmatmul.bf16.gmra.mxu0 %v2847
      %v2894 = vpop.f32.mrf.mxu0
      %v2895 = vadd.f32 0.0, %v2894
      %v2896 = vpop.f32.mrf.mxu0
      %v2897 = vadd.f32 0.0, %v2896
      %2898 = vmatmul.bf16.gmra.mxu0 %v2850
      %v2899 = vpop.f32.mrf.mxu0
      %v2900 = vadd.f32 0.0, %v2899
      %v2901 = vpop.f32.mrf.mxu0
      %v2902 = vadd.f32 0.0, %v2901
      %2903 = vdwg.mxu0
      %v2904 = vadd.f32 %v2433, %v2865
      %v2905 = vadd.f32 %v2434, %v2867
      %v2906 = vadd.f32 %v2435, %v2870
      %v2907 = vadd.f32 %v2436, %v2872
      %v2908 = vadd.f32 %v2437, %v2875
      %v2909 = vadd.f32 %v2438, %v2877
      %v2910 = vadd.f32 %v2439, %v2880
      %v2911 = vadd.f32 %v2440, %v2882
      %v2912 = vadd.f32 %v2441, %v2885
      %v2913 = vadd.f32 %v2442, %v2887
      %v2914 = vadd.f32 %v2443, %v2890
      %v2915 = vadd.f32 %v2444, %v2892
      %v2916 = vadd.f32 %v2445, %v2895
      %v2917 = vadd.f32 %v2446, %v2897
      %v2918 = vadd.f32 %v2447, %v2900
      %v2919 = vadd.f32 %v2448, %v2902
      %v2920 = vld [vmem:[#allocation2 + $0x8] sm:$0xf]
      %v2921 = vld [vmem:[#allocation2 + $0xc] sm:$0xf]
      %v2922 = vld [vmem:[#allocation2 + $0x10] sm:$0xf]
      %v2923 = vld [vmem:[#allocation2 + $0x14] sm:$0xf]
      %v2924 = vld [vmem:[#allocation2 + $0x18] sm:$0xf]
      %v2925 = vld [vmem:[#allocation2 + $0x1c] sm:$0xf]
      %v2926 = vld [vmem:[#allocation2 + $0x20] sm:$0xf]
      %v2927 = vld [vmem:[#allocation2 + $0x24] sm:$0xf]
      %v2928 = vld [vmem:[#allocation2 + $0x28] sm:$0xf]
      %v2929 = vld [vmem:[#allocation2 + $0x2c] sm:$0xf]
      %v2930 = vld [vmem:[#allocation2 + $0x30] sm:$0xf]
      %v2931 = vld [vmem:[#allocation2 + $0x34] sm:$0xf]
      %v2932 = vld [vmem:[#allocation2 + $0x38] sm:$0xf]
      %v2933 = vld [vmem:[#allocation2 + $0x3c] sm:$0xf]
      %v2934 = vld [vmem:[#allocation2 + $0x40] sm:$0xf]
      %v2935 = vld [vmem:[#allocation2 + $0x44] sm:$0xf]
      %s2936 = scalar_lea.vmem %s4, 10
      %v2937 = vld [vmem:[%s2936] sm:$0x3]
      %v2954 = vunpack.c.l.b16 %v2920
      %v2955 = vunpack.c.l.b16 %v2921
      %v2956 = vunpack.c.l.b16 %v2922
      %v2957 = vunpack.c.l.b16 %v2923
      %v2958 = vunpack.c.l.b16 %v2924
      %v2959 = vunpack.c.l.b16 %v2925
      %v2960 = vunpack.c.l.b16 %v2926
      %v2961 = vunpack.c.l.b16 %v2927
      %v2962 = vunpack.c.l.b16 %v2928
      %v2963 = vunpack.c.l.b16 %v2929
      %v2964 = vunpack.c.l.b16 %v2930
      %v2965 = vunpack.c.l.b16 %v2931
      %v2966 = vunpack.c.l.b16 %v2932
      %v2967 = vunpack.c.l.b16 %v2933
      %v2968 = vunpack.c.l.b16 %v2934
      %v2969 = vunpack.c.l.b16 %v2935
      %v2970 = vpack.c.b16 %v2955, %v2954
      %v2971 = vpack.c.b16 %v2957, %v2956
      %v2972 = vpack.c.b16 %v2959, %v2958
      %v2973 = vpack.c.b16 %v2961, %v2960
      %v2974 = vpack.c.b16 %v2963, %v2962
      %v2975 = vpack.c.b16 %v2965, %v2964
      %v2976 = vpack.c.b16 %v2967, %v2966
      %v2977 = vpack.c.b16 %v2969, %v2968
      %v2979 = vsel %vm749, %v2970, 0
      %v2982 = vsel %vm749, %v2971, 0
      %v2985 = vsel %vm749, %v2972, 0
      %v2988 = vsel %vm749, %v2973, 0
      %v2991 = vsel %vm749, %v2974, 0
      %v2994 = vsel %vm749, %v2975, 0
      %v2997 = vsel %vm749, %v2976, 0
      %v3000 = vsel %vm749, %v2977, 0
      %v3003 = vsel %vm1715, %v2937, 0
      %3005 = vmatpush.bf16.msra.mxu0 0
      %3006 = vmatpush.bf16.msra.mxu0 0
      %3007 = vmatpush.bf16.msra.mxu0 0
      %3008 = vmatpush.bf16.msra.mxu0 0
      %3009 = vmatpush.bf16.msra.mxu0 0
      %3010 = vmatpush.bf16.msra.mxu0 0
      %3011 = vmatpush.bf16.msra.mxu0 0
      %3012 = vmatpush.bf16.msra.mxu0 %v3003
      %3013 = vmatmul.bf16.gmra.mxu0 %v2979
      %v3014 = vpop.f32.mrf.mxu0
      %v3015 = vadd.f32 0.0, %v3014
      %v3016 = vpop.f32.mrf.mxu0
      %v3017 = vadd.f32 0.0, %v3016
      %3018 = vmatmul.bf16.gmra.mxu0 %v2982
      %v3019 = vpop.f32.mrf.mxu0
      %v3020 = vadd.f32 0.0, %v3019
      %v3021 = vpop.f32.mrf.mxu0
      %v3022 = vadd.f32 0.0, %v3021
      %3023 = vmatmul.bf16.gmra.mxu0 %v2985
      %v3024 = vpop.f32.mrf.mxu0
      %v3025 = vadd.f32 0.0, %v3024
      %v3026 = vpop.f32.mrf.mxu0
      %v3027 = vadd.f32 0.0, %v3026
      %3028 = vmatmul.bf16.gmra.mxu0 %v2988
      %v3029 = vpop.f32.mrf.mxu0
      %v3030 = vadd.f32 0.0, %v3029
      %v3031 = vpop.f32.mrf.mxu0
      %v3032 = vadd.f32 0.0, %v3031
      %3033 = vmatmul.bf16.gmra.mxu0 %v2991
      %v3034 = vpop.f32.mrf.mxu0
      %v3035 = vadd.f32 0.0, %v3034
      %v3036 = vpop.f32.mrf.mxu0
      %v3037 = vadd.f32 0.0, %v3036
      %3038 = vmatmul.bf16.gmra.mxu0 %v2994
      %v3039 = vpop.f32.mrf.mxu0
      %v3040 = vadd.f32 0.0, %v3039
      %v3041 = vpop.f32.mrf.mxu0
      %v3042 = vadd.f32 0.0, %v3041
      %3043 = vmatmul.bf16.gmra.mxu0 %v2997
      %v3044 = vpop.f32.mrf.mxu0
      %v3045 = vadd.f32 0.0, %v3044
      %v3046 = vpop.f32.mrf.mxu0
      %v3047 = vadd.f32 0.0, %v3046
      %3048 = vmatmul.bf16.gmra.mxu0 %v3000
      %v3049 = vpop.f32.mrf.mxu0
      %v3050 = vadd.f32 0.0, %v3049
      %v3051 = vpop.f32.mrf.mxu0
      %v3052 = vadd.f32 0.0, %v3051
      %3053 = vdwg.mxu0
      %v3054 = vadd.f32 %v2904, %v3015
      %v3055 = vadd.f32 %v2905, %v3017
      %v3056 = vadd.f32 %v2906, %v3020
      %v3057 = vadd.f32 %v2907, %v3022
      %v3058 = vadd.f32 %v2908, %v3025
      %v3059 = vadd.f32 %v2909, %v3027
      %v3060 = vadd.f32 %v2910, %v3030
      %v3061 = vadd.f32 %v2911, %v3032
      %v3062 = vadd.f32 %v2912, %v3035
      %v3063 = vadd.f32 %v2913, %v3037
      %v3064 = vadd.f32 %v2914, %v3040
      %v3065 = vadd.f32 %v2915, %v3042
      %v3066 = vadd.f32 %v2916, %v3045
      %v3067 = vadd.f32 %v2917, %v3047
      %v3068 = vadd.f32 %v2918, %v3050
      %v3069 = vadd.f32 %v2919, %v3052
      %v3070 = vld [vmem:[#allocation2 + $0x10] sm:$0xf]
      %v3071 = vld [vmem:[#allocation2 + $0x14] sm:$0xf]
      %v3072 = vld [vmem:[#allocation2 + $0x18] sm:$0xf]
      %v3073 = vld [vmem:[#allocation2 + $0x1c] sm:$0xf]
      %v3074 = vld [vmem:[#allocation2 + $0x20] sm:$0xf]
      %v3075 = vld [vmem:[#allocation2 + $0x24] sm:$0xf]
      %v3076 = vld [vmem:[#allocation2 + $0x28] sm:$0xf]
      %v3077 = vld [vmem:[#allocation2 + $0x2c] sm:$0xf]
      %v3078 = vld [vmem:[#allocation2 + $0x30] sm:$0xf]
      %v3079 = vld [vmem:[#allocation2 + $0x34] sm:$0xf]
      %v3080 = vld [vmem:[#allocation2 + $0x38] sm:$0xf]
      %v3081 = vld [vmem:[#allocation2 + $0x3c] sm:$0xf]
      %v3082 = vld [vmem:[#allocation2 + $0x40] sm:$0xf]
      %v3083 = vld [vmem:[#allocation2 + $0x44] sm:$0xf]
      %v3084 = vld [vmem:[#allocation2 + $0x48] sm:$0xf]
      %v3085 = vld [vmem:[#allocation2 + $0x4c] sm:$0xf]
      %s3086 = scalar_lea.vmem %s4, 16
      %v3087 = vld [vmem:[%s3086] sm:$0x3]
      %v3104 = vunpack.c.l.b16 %v3070
      %v3105 = vunpack.c.l.b16 %v3071
      %v3106 = vunpack.c.l.b16 %v3072
      %v3107 = vunpack.c.l.b16 %v3073
      %v3108 = vunpack.c.l.b16 %v3074
      %v3109 = vunpack.c.l.b16 %v3075
      %v3110 = vunpack.c.l.b16 %v3076
      %v3111 = vunpack.c.l.b16 %v3077
      %v3112 = vunpack.c.l.b16 %v3078
      %v3113 = vunpack.c.l.b16 %v3079
      %v3114 = vunpack.c.l.b16 %v3080
      %v3115 = vunpack.c.l.b16 %v3081
      %v3116 = vunpack.c.l.b16 %v3082
      %v3117 = vunpack.c.l.b16 %v3083
      %v3118 = vunpack.c.l.b16 %v3084
      %v3119 = vunpack.c.l.b16 %v3085
      %v3120 = vpack.c.b16 %v3105, %v3104
      %v3121 = vpack.c.b16 %v3107, %v3106
      %v3122 = vpack.c.b16 %v3109, %v3108
      %v3123 = vpack.c.b16 %v3111, %v3110
      %v3124 = vpack.c.b16 %v3113, %v3112
      %v3125 = vpack.c.b16 %v3115, %v3114
      %v3126 = vpack.c.b16 %v3117, %v3116
      %v3127 = vpack.c.b16 %v3119, %v3118
      %v3129 = vsel %vm749, %v3120, 0
      %v3132 = vsel %vm749, %v3121, 0
      %v3135 = vsel %vm749, %v3122, 0
      %v3138 = vsel %vm749, %v3123, 0
      %v3141 = vsel %vm749, %v3124, 0
      %v3144 = vsel %vm749, %v3125, 0
      %v3147 = vsel %vm749, %v3126, 0
      %v3150 = vsel %vm749, %v3127, 0
      %v3153 = vsel %vm1715, %v3087, 0
      %3155 = vmatpush.bf16.msra.mxu0 0
      %3156 = vmatpush.bf16.msra.mxu0 0
      %3157 = vmatpush.bf16.msra.mxu0 0
      %3158 = vmatpush.bf16.msra.mxu0 0
      %3159 = vmatpush.bf16.msra.mxu0 0
      %3160 = vmatpush.bf16.msra.mxu0 0
      %3161 = vmatpush.bf16.msra.mxu0 0
      %3162 = vmatpush.bf16.msra.mxu0 %v3153
      %3163 = vmatmul.bf16.gmra.mxu0 %v3129
      %v3164 = vpop.f32.mrf.mxu0
      %v3165 = vadd.f32 0.0, %v3164
      %v3166 = vpop.f32.mrf.mxu0
      %v3167 = vadd.f32 0.0, %v3166
      %3168 = vmatmul.bf16.gmra.mxu0 %v3132
      %v3169 = vpop.f32.mrf.mxu0
      %v3170 = vadd.f32 0.0, %v3169
      %v3171 = vpop.f32.mrf.mxu0
      %v3172 = vadd.f32 0.0, %v3171
      %3173 = vmatmul.bf16.gmra.mxu0 %v3135
      %v3174 = vpop.f32.mrf.mxu0
      %v3175 = vadd.f32 0.0, %v3174
      %v3176 = vpop.f32.mrf.mxu0
      %v3177 = vadd.f32 0.0, %v3176
      %3178 = vmatmul.bf16.gmra.mxu0 %v3138
      %v3179 = vpop.f32.mrf.mxu0
      %v3180 = vadd.f32 0.0, %v3179
      %v3181 = vpop.f32.mrf.mxu0
      %v3182 = vadd.f32 0.0, %v3181
      %3183 = vmatmul.bf16.gmra.mxu0 %v3141
      %v3184 = vpop.f32.mrf.mxu0
      %v3185 = vadd.f32 0.0, %v3184
      %v3186 = vpop.f32.mrf.mxu0
      %v3187 = vadd.f32 0.0, %v3186
      %3188 = vmatmul.bf16.gmra.mxu0 %v3144
      %v3189 = vpop.f32.mrf.mxu0
      %v3190 = vadd.f32 0.0, %v3189
      %v3191 = vpop.f32.mrf.mxu0
      %v3192 = vadd.f32 0.0, %v3191
      %3193 = vmatmul.bf16.gmra.mxu0 %v3147
      %v3194 = vpop.f32.mrf.mxu0
      %v3195 = vadd.f32 0.0, %v3194
      %v3196 = vpop.f32.mrf.mxu0
      %v3197 = vadd.f32 0.0, %v3196
      %3198 = vmatmul.bf16.gmra.mxu0 %v3150
      %v3199 = vpop.f32.mrf.mxu0
      %v3200 = vadd.f32 0.0, %v3199
      %v3201 = vpop.f32.mrf.mxu0
      %v3202 = vadd.f32 0.0, %v3201
      %3203 = vdwg.mxu0
      %v3204 = vadd.f32 %v3054, %v3165
      %v3205 = vadd.f32 %v3055, %v3167
      %v3206 = vadd.f32 %v3056, %v3170
      %v3207 = vadd.f32 %v3057, %v3172
      %v3208 = vadd.f32 %v3058, %v3175
      %v3209 = vadd.f32 %v3059, %v3177
      %v3210 = vadd.f32 %v3060, %v3180
      %v3211 = vadd.f32 %v3061, %v3182
      %v3212 = vadd.f32 %v3062, %v3185
      %v3213 = vadd.f32 %v3063, %v3187
      %v3214 = vadd.f32 %v3064, %v3190
      %v3215 = vadd.f32 %v3065, %v3192
      %v3216 = vadd.f32 %v3066, %v3195
      %v3217 = vadd.f32 %v3067, %v3197
      %v3218 = vadd.f32 %v3068, %v3200
      %v3219 = vadd.f32 %v3069, %v3202
      %v3220 = vld [vmem:[%s5] sm:$0x1]
      %v3222 = vperm.slane %v3220, 0
      %v3224 = vmul.f32 %v3204, %v3222
      %v3225 = vmul.f32 %v3205, %v3222
      %v3226 = vmul.f32 %v3206, %v3222
      %v3227 = vmul.f32 %v3207, %v3222
      %v3228 = vmul.f32 %v3208, %v3222
      %v3229 = vmul.f32 %v3209, %v3222
      %v3230 = vmul.f32 %v3210, %v3222
      %v3231 = vmul.f32 %v3211, %v3222
      %v3232 = vmul.f32 %v3212, %v3222
      %v3233 = vmul.f32 %v3213, %v3222
      %v3234 = vmul.f32 %v3214, %v3222
      %v3235 = vmul.f32 %v3215, %v3222
      %v3236 = vmul.f32 %v3216, %v3222
      %v3237 = vmul.f32 %v3217, %v3222
      %v3238 = vmul.f32 %v3218, %v3222
      %v3239 = vmul.f32 %v3219, %v3222
      %v3240 = vld [vmem:[%s6] sm:$0x1]
      %v3242 = vperm.slane %v3240, 0
      %v3244 = vadd.f32 %v3224, %v3242
      %v3245 = vadd.f32 %v3225, %v3242
      %v3246 = vadd.f32 %v3226, %v3242
      %v3247 = vadd.f32 %v3227, %v3242
      %v3248 = vadd.f32 %v3228, %v3242
      %v3249 = vadd.f32 %v3229, %v3242
      %v3250 = vadd.f32 %v3230, %v3242
      %v3251 = vadd.f32 %v3231, %v3242
      %v3252 = vadd.f32 %v3232, %v3242
      %v3253 = vadd.f32 %v3233, %v3242
      %v3254 = vadd.f32 %v3234, %v3242
      %v3255 = vadd.f32 %v3235, %v3242
      %v3256 = vadd.f32 %v3236, %v3242
      %v3257 = vadd.f32 %v3237, %v3242
      %v3258 = vadd.f32 %v3238, %v3242
      %v3259 = vadd.f32 %v3239, %v3242
      %vm3260 = vcmp.ge.f32.partialorder %v3244, 1.0
      %vm3261 = vcmp.ge.f32.partialorder %v3245, 1.0
      %vm3262 = vcmp.ge.f32.partialorder %v3246, 1.0
      %vm3263 = vcmp.ge.f32.partialorder %v3247, 1.0
      %vm3264 = vcmp.ge.f32.partialorder %v3248, 1.0
      %vm3265 = vcmp.ge.f32.partialorder %v3249, 1.0
      %vm3266 = vcmp.ge.f32.partialorder %v3250, 1.0
      %vm3267 = vcmp.ge.f32.partialorder %v3251, 1.0
      %vm3268 = vcmp.ge.f32.partialorder %v3252, 1.0
      %vm3269 = vcmp.ge.f32.partialorder %v3253, 1.0
      %vm3270 = vcmp.ge.f32.partialorder %v3254, 1.0
      %vm3271 = vcmp.ge.f32.partialorder %v3255, 1.0
      %vm3272 = vcmp.ge.f32.partialorder %v3256, 1.0
      %vm3273 = vcmp.ge.f32.partialorder %v3257, 1.0
      %vm3274 = vcmp.ge.f32.partialorder %v3258, 1.0
      %vm3275 = vcmp.ge.f32.partialorder %v3259, 1.0
      %v3276 = vsel %vm3260, 1, 0
      %v3277 = vsel %vm3261, 1, 0
      %v3278 = vsel %vm3262, 1, 0
      %v3279 = vsel %vm3263, 1, 0
      %v3280 = vsel %vm3264, 1, 0
      %v3281 = vsel %vm3265, 1, 0
      %v3282 = vsel %vm3266, 1, 0
      %v3283 = vsel %vm3267, 1, 0
      %v3284 = vsel %vm3268, 1, 0
      %v3285 = vsel %vm3269, 1, 0
      %v3286 = vsel %vm3270, 1, 0
      %v3287 = vsel %vm3271, 1, 0
      %v3288 = vsel %vm3272, 1, 0
      %v3289 = vsel %vm3273, 1, 0
      %v3290 = vsel %vm3274, 1, 0
      %v3291 = vsel %vm3275, 1, 0
      %v3292 = vcvt.s32.f32 %v3276
      %v3293 = vcvt.s32.f32 %v3277
      %v3294 = vcvt.s32.f32 %v3278
      %v3295 = vcvt.s32.f32 %v3279
      %v3296 = vcvt.s32.f32 %v3280
      %v3297 = vcvt.s32.f32 %v3281
      %v3298 = vcvt.s32.f32 %v3282
      %v3299 = vcvt.s32.f32 %v3283
      %v3300 = vcvt.s32.f32 %v3284
      %v3301 = vcvt.s32.f32 %v3285
      %v3302 = vcvt.s32.f32 %v3286
      %v3303 = vcvt.s32.f32 %v3287
      %v3304 = vcvt.s32.f32 %v3288
      %v3305 = vcvt.s32.f32 %v3289
      %v3306 = vcvt.s32.f32 %v3290
      %v3307 = vcvt.s32.f32 %v3291
      %v3308 = vpack.c.bf16 %v3292, %v3292
      %v3309 = vpack.c.bf16 %v3293, %v3293
      %v3310 = vpack.c.bf16 %v3294, %v3294
      %v3311 = vpack.c.bf16 %v3295, %v3295
      %v3312 = vpack.c.bf16 %v3296, %v3296
      %v3313 = vpack.c.bf16 %v3297, %v3297
      %v3314 = vpack.c.bf16 %v3298, %v3298
      %v3315 = vpack.c.bf16 %v3299, %v3299
      %v3316 = vpack.c.bf16 %v3300, %v3300
      %v3317 = vpack.c.bf16 %v3301, %v3301
      %v3318 = vpack.c.bf16 %v3302, %v3302
      %v3319 = vpack.c.bf16 %v3303, %v3303
      %v3320 = vpack.c.bf16 %v3304, %v3304
      %v3321 = vpack.c.bf16 %v3305, %v3305
      %v3322 = vpack.c.bf16 %v3306, %v3306
      %v3323 = vpack.c.bf16 %v3307, %v3307
      %3340 = vrot.lane.b32.xlu0 %v3204, 8
      %v3341 = vpop.permute.xlu0 %3340
      %3342 = vrot.lane.b32.xlu0 %v3205, 8
      %v3343 = vpop.permute.xlu0 %3342
      %3344 = vrot.lane.b32.xlu0 %v3206, 8
      %v3345 = vpop.permute.xlu0 %3344
      %3346 = vrot.lane.b32.xlu0 %v3207, 8
      %v3347 = vpop.permute.xlu0 %3346
      %3348 = vrot.lane.b32.xlu0 %v3208, 8
      %v3349 = vpop.permute.xlu0 %3348
      %3350 = vrot.lane.b32.xlu0 %v3209, 8
      %v3351 = vpop.permute.xlu0 %3350
      %3352 = vrot.lane.b32.xlu0 %v3210, 8
      %v3353 = vpop.permute.xlu0 %3352
      %3354 = vrot.lane.b32.xlu0 %v3211, 8
      %v3355 = vpop.permute.xlu0 %3354
      %3356 = vrot.lane.b32.xlu0 %v3212, 8
      %v3357 = vpop.permute.xlu0 %3356
      %3358 = vrot.lane.b32.xlu0 %v3213, 8
      %v3359 = vpop.permute.xlu0 %3358
      %3360 = vrot.lane.b32.xlu0 %v3214, 8
      %v3361 = vpop.permute.xlu0 %3360
      %3362 = vrot.lane.b32.xlu0 %v3215, 8
      %v3363 = vpop.permute.xlu0 %3362
      %3364 = vrot.lane.b32.xlu0 %v3216, 8
      %v3365 = vpop.permute.xlu0 %3364
      %3366 = vrot.lane.b32.xlu0 %v3217, 8
      %v3367 = vpop.permute.xlu0 %3366
      %3368 = vrot.lane.b32.xlu0 %v3218, 8
      %v3369 = vpop.permute.xlu0 %3368
      %3370 = vrot.lane.b32.xlu0 %v3219, 8
      %v3371 = vpop.permute.xlu0 %3370
      %vm3388 = vcmask 97344
      %3389 = vst.msk [vmem:[%s502] sm:$0xff] %vm3388, %v3341
      %3390 = vst.msk [vmem:[%s502 + $0x8] sm:$0xff] %vm3388, %v3343
      %3391 = vst.msk [vmem:[%s502 + $0x10] sm:$0xff] %vm3388, %v3345
      %3392 = vst.msk [vmem:[%s502 + $0x18] sm:$0xff] %vm3388, %v3347
      %3393 = vst.msk [vmem:[%s502 + $0x20] sm:$0xff] %vm3388, %v3349
      %3394 = vst.msk [vmem:[%s502 + $0x28] sm:$0xff] %vm3388, %v3351
      %3395 = vst.msk [vmem:[%s502 + $0x30] sm:$0xff] %vm3388, %v3353
      %3396 = vst.msk [vmem:[%s502 + $0x38] sm:$0xff] %vm3388, %v3355
      %3397 = vst.msk [vmem:[%s502 + $0x40] sm:$0xff] %vm3388, %v3357
      %3398 = vst.msk [vmem:[%s502 + $0x48] sm:$0xff] %vm3388, %v3359
      %3399 = vst.msk [vmem:[%s502 + $0x50] sm:$0xff] %vm3388, %v3361
      %3400 = vst.msk [vmem:[%s502 + $0x58] sm:$0xff] %vm3388, %v3363
      %3401 = vst.msk [vmem:[%s502 + $0x60] sm:$0xff] %vm3388, %v3365
      %3402 = vst.msk [vmem:[%s502 + $0x68] sm:$0xff] %vm3388, %v3367
      %3403 = vst.msk [vmem:[%s502 + $0x70] sm:$0xff] %vm3388, %v3369
      %3404 = vst.msk [vmem:[%s502 + $0x78] sm:$0xff] %vm3388, %v3371
      %3421 = vrot.lane.b32.xlu0 %v3244, 12
      %v3422 = vpop.permute.xlu0 %3421
      %3423 = vrot.lane.b32.xlu0 %v3245, 12
      %v3424 = vpop.permute.xlu0 %3423
      %3425 = vrot.lane.b32.xlu0 %v3246, 12
      %v3426 = vpop.permute.xlu0 %3425
      %3427 = vrot.lane.b32.xlu0 %v3247, 12
      %v3428 = vpop.permute.xlu0 %3427
      %3429 = vrot.lane.b32.xlu0 %v3248, 12
      %v3430 = vpop.permute.xlu0 %3429
      %3431 = vrot.lane.b32.xlu0 %v3249, 12
      %v3432 = vpop.permute.xlu0 %3431
      %3433 = vrot.lane.b32.xlu0 %v3250, 12
      %v3434 = vpop.permute.xlu0 %3433
      %3435 = vrot.lane.b32.xlu0 %v3251, 12
      %v3436 = vpop.permute.xlu0 %3435
      %3437 = vrot.lane.b32.xlu0 %v3252, 12
      %v3438 = vpop.permute.xlu0 %3437
      %3439 = vrot.lane.b32.xlu0 %v3253, 12
      %v3440 = vpop.permute.xlu0 %3439
      %3441 = vrot.lane.b32.xlu0 %v3254, 12
      %v3442 = vpop.permute.xlu0 %3441
      %3443 = vrot.lane.b32.xlu0 %v3255, 12
      %v3444 = vpop.permute.xlu0 %3443
      %3445 = vrot.lane.b32.xlu0 %v3256, 12
      %v3446 = vpop.permute.xlu0 %3445
      %3447 = vrot.lane.b32.xlu0 %v3257, 12
      %v3448 = vpop.permute.xlu0 %3447
      %3449 = vrot.lane.b32.xlu0 %v3258, 12
      %v3450 = vpop.permute.xlu0 %3449
      %3451 = vrot.lane.b32.xlu0 %v3259, 12
      %v3452 = vpop.permute.xlu0 %3451
      %vm3469 = vcmask 130144
      %3470 = vst.msk [vmem:[%s502] sm:$0xff] %vm3469, %v3422
      %3471 = vst.msk [vmem:[%s502 + $0x8] sm:$0xff] %vm3469, %v3424
      %3472 = vst.msk [vmem:[%s502 + $0x10] sm:$0xff] %vm3469, %v3426
      %3473 = vst.msk [vmem:[%s502 + $0x18] sm:$0xff] %vm3469, %v3428
      %3474 = vst.msk [vmem:[%s502 + $0x20] sm:$0xff] %vm3469, %v3430
      %3475 = vst.msk [vmem:[%s502 + $0x28] sm:$0xff] %vm3469, %v3432
      %3476 = vst.msk [vmem:[%s502 + $0x30] sm:$0xff] %vm3469, %v3434
      %3477 = vst.msk [vmem:[%s502 + $0x38] sm:$0xff] %vm3469, %v3436
      %3478 = vst.msk [vmem:[%s502 + $0x40] sm:$0xff] %vm3469, %v3438
      %3479 = vst.msk [vmem:[%s502 + $0x48] sm:$0xff] %vm3469, %v3440
      %3480 = vst.msk [vmem:[%s502 + $0x50] sm:$0xff] %vm3469, %v3442
      %3481 = vst.msk [vmem:[%s502 + $0x58] sm:$0xff] %vm3469, %v3444
      %3482 = vst.msk [vmem:[%s502 + $0x60] sm:$0xff] %vm3469, %v3446
      %3483 = vst.msk [vmem:[%s502 + $0x68] sm:$0xff] %vm3469, %v3448
      %3484 = vst.msk [vmem:[%s502 + $0x70] sm:$0xff] %vm3469, %v3450
      %3485 = vst.msk [vmem:[%s502 + $0x78] sm:$0xff] %vm3469, %v3452
      %3502 = vrot.lane.b32.xlu0 %v3308, 4
      %v3503 = vpop.permute.xlu0 %3502
      %3504 = vrot.lane.b32.xlu0 %v3309, 4
      %v3505 = vpop.permute.xlu0 %3504
      %3506 = vrot.lane.b32.xlu0 %v3310, 4
      %v3507 = vpop.permute.xlu0 %3506
      %3508 = vrot.lane.b32.xlu0 %v3311, 4
      %v3509 = vpop.permute.xlu0 %3508
      %3510 = vrot.lane.b32.xlu0 %v3312, 4
      %v3511 = vpop.permute.xlu0 %3510
      %3512 = vrot.lane.b32.xlu0 %v3313, 4
      %v3513 = vpop.permute.xlu0 %3512
      %3514 = vrot.lane.b32.xlu0 %v3314, 4
      %v3515 = vpop.permute.xlu0 %3514
      %3516 = vrot.lane.b32.xlu0 %v3315, 4
      %v3517 = vpop.permute.xlu0 %3516
      %3518 = vrot.lane.b32.xlu0 %v3316, 4
      %v3519 = vpop.permute.xlu0 %3518
      %3520 = vrot.lane.b32.xlu0 %v3317, 4
      %v3521 = vpop.permute.xlu0 %3520
      %3522 = vrot.lane.b32.xlu0 %v3318, 4
      %v3523 = vpop.permute.xlu0 %3522
      %3524 = vrot.lane.b32.xlu0 %v3319, 4
      %v3525 = vpop.permute.xlu0 %3524
      %3526 = vrot.lane.b32.xlu0 %v3320, 4
      %v3527 = vpop.permute.xlu0 %3526
      %3528 = vrot.lane.b32.xlu0 %v3321, 4
      %v3529 = vpop.permute.xlu0 %3528
      %3530 = vrot.lane.b32.xlu0 %v3322, 4
      %v3531 = vpop.permute.xlu0 %3530
      %3532 = vrot.lane.b32.xlu0 %v3323, 4
      %v3533 = vpop.permute.xlu0 %3532
      %vm3550 = vcmask 60448
      %3551 = vst.msk [vmem:[%s512] sm:$0xf] %vm3550, %v3503
      %3552 = vst.msk [vmem:[%s512 + $0x4] sm:$0xf] %vm3550, %v3505
      %3553 = vst.msk [vmem:[%s512 + $0x8] sm:$0xf] %vm3550, %v3507
      %3554 = vst.msk [vmem:[%s512 + $0xc] sm:$0xf] %vm3550, %v3509
      %3555 = vst.msk [vmem:[%s512 + $0x10] sm:$0xf] %vm3550, %v3511
      %3556 = vst.msk [vmem:[%s512 + $0x14] sm:$0xf] %vm3550, %v3513
      %3557 = vst.msk [vmem:[%s512 + $0x18] sm:$0xf] %vm3550, %v3515
      %3558 = vst.msk [vmem:[%s512 + $0x1c] sm:$0xf] %vm3550, %v3517
      %3559 = vst.msk [vmem:[%s512 + $0x20] sm:$0xf] %vm3550, %v3519
      %3560 = vst.msk [vmem:[%s512 + $0x24] sm:$0xf] %vm3550, %v3521
      %3561 = vst.msk [vmem:[%s512 + $0x28] sm:$0xf] %vm3550, %v3523
      %3562 = vst.msk [vmem:[%s512 + $0x2c] sm:$0xf] %vm3550, %v3525
      %3563 = vst.msk [vmem:[%s512 + $0x30] sm:$0xf] %vm3550, %v3527
      %3564 = vst.msk [vmem:[%s512 + $0x34] sm:$0xf] %vm3550, %v3529
      %3565 = vst.msk [vmem:[%s512 + $0x38] sm:$0xf] %vm3550, %v3531
      %3566 = vst.msk [vmem:[%s512 + $0x3c] sm:$0xf] %vm3550, %v3533
      %v3567 = vld [vmem:[%s7] sm:$0x3]
      %v3568 = vunpack.c.l.b16 %v3308
      %v3569 = vunpack.c.l.b16 %v3309
      %v3570 = vunpack.c.l.b16 %v3310
      %v3571 = vunpack.c.l.b16 %v3311
      %v3572 = vunpack.c.l.b16 %v3312
      %v3573 = vunpack.c.l.b16 %v3313
      %v3574 = vunpack.c.l.b16 %v3314
      %v3575 = vunpack.c.l.b16 %v3315
      %v3576 = vunpack.c.l.b16 %v3316
      %v3577 = vunpack.c.l.b16 %v3317
      %v3578 = vunpack.c.l.b16 %v3318
      %v3579 = vunpack.c.l.b16 %v3319
      %v3580 = vunpack.c.l.b16 %v3320
      %v3581 = vunpack.c.l.b16 %v3321
      %v3582 = vunpack.c.l.b16 %v3322
      %v3583 = vunpack.c.l.b16 %v3323
      %v3584 = vpack.c.b16 %v3569, %v3568
      %v3585 = vpack.c.b16 %v3571, %v3570
      %v3586 = vpack.c.b16 %v3573, %v3572
      %v3587 = vpack.c.b16 %v3575, %v3574
      %v3588 = vpack.c.b16 %v3577, %v3576
      %v3589 = vpack.c.b16 %v3579, %v3578
      %v3590 = vpack.c.b16 %v3581, %v3580
      %v3591 = vpack.c.b16 %v3583, %v3582
      %v3593 = vsel %vm749, %v3584, 0
      %v3596 = vsel %vm749, %v3585, 0
      %v3599 = vsel %vm749, %v3586, 0
      %v3602 = vsel %vm749, %v3587, 0
      %v3605 = vsel %vm749, %v3588, 0
      %v3608 = vsel %vm749, %v3589, 0
      %v3611 = vsel %vm749, %v3590, 0
      %v3614 = vsel %vm749, %v3591, 0
      %v3617 = vsel %vm1715, %v3567, 0
      %3619 = vmatpush.bf16.msra.mxu0 0
      %3620 = vmatpush.bf16.msra.mxu0 0
      %3621 = vmatpush.bf16.msra.mxu0 0
      %3622 = vmatpush.bf16.msra.mxu0 0
      %3623 = vmatpush.bf16.msra.mxu0 0
      %3624 = vmatpush.bf16.msra.mxu0 0
      %3625 = vmatpush.bf16.msra.mxu0 0
      %3626 = vmatpush.bf16.msra.mxu0 %v3617
      %3627 = vmatmul.bf16.gmra.mxu0 %v3593
      %v3628 = vpop.f32.mrf.mxu0
      %v3629 = vadd.f32 0.0, %v3628
      %v3630 = vpop.f32.mrf.mxu0
      %v3631 = vadd.f32 0.0, %v3630
      %3632 = vmatmul.bf16.gmra.mxu0 %v3596
      %v3633 = vpop.f32.mrf.mxu0
      %v3634 = vadd.f32 0.0, %v3633
      %v3635 = vpop.f32.mrf.mxu0
      %v3636 = vadd.f32 0.0, %v3635
      %3637 = vmatmul.bf16.gmra.mxu0 %v3599
      %v3638 = vpop.f32.mrf.mxu0
      %v3639 = vadd.f32 0.0, %v3638
      %v3640 = vpop.f32.mrf.mxu0
      %v3641 = vadd.f32 0.0, %v3640
      %3642 = vmatmul.bf16.gmra.mxu0 %v3602
      %v3643 = vpop.f32.mrf.mxu0
      %v3644 = vadd.f32 0.0, %v3643
      %v3645 = vpop.f32.mrf.mxu0
      %v3646 = vadd.f32 0.0, %v3645
      %3647 = vmatmul.bf16.gmra.mxu0 %v3605
      %v3648 = vpop.f32.mrf.mxu0
      %v3649 = vadd.f32 0.0, %v3648
      %v3650 = vpop.f32.mrf.mxu0
      %v3651 = vadd.f32 0.0, %v3650
      %3652 = vmatmul.bf16.gmra.mxu0 %v3608
      %v3653 = vpop.f32.mrf.mxu0
      %v3654 = vadd.f32 0.0, %v3653
      %v3655 = vpop.f32.mrf.mxu0
      %v3656 = vadd.f32 0.0, %v3655
      %3657 = vmatmul.bf16.gmra.mxu0 %v3611
      %v3658 = vpop.f32.mrf.mxu0
      %v3659 = vadd.f32 0.0, %v3658
      %v3660 = vpop.f32.mrf.mxu0
      %v3661 = vadd.f32 0.0, %v3660
      %3662 = vmatmul.bf16.gmra.mxu0 %v3614
      %v3663 = vpop.f32.mrf.mxu0
      %v3664 = vadd.f32 0.0, %v3663
      %v3665 = vpop.f32.mrf.mxu0
      %v3666 = vadd.f32 0.0, %v3665
      %3667 = vdwg.mxu0
      %v3668 = vld [vmem:[%s8] sm:$0x1]
      %v3670 = vperm.slane %v3668, 0
      %v3672 = vmul.f32 %v3629, %v3670
      %v3673 = vmul.f32 %v3631, %v3670
      %v3674 = vmul.f32 %v3634, %v3670
      %v3675 = vmul.f32 %v3636, %v3670
      %v3676 = vmul.f32 %v3639, %v3670
      %v3677 = vmul.f32 %v3641, %v3670
      %v3678 = vmul.f32 %v3644, %v3670
      %v3679 = vmul.f32 %v3646, %v3670
      %v3680 = vmul.f32 %v3649, %v3670
      %v3681 = vmul.f32 %v3651, %v3670
      %v3682 = vmul.f32 %v3654, %v3670
      %v3683 = vmul.f32 %v3656, %v3670
      %v3684 = vmul.f32 %v3659, %v3670
      %v3685 = vmul.f32 %v3661, %v3670
      %v3686 = vmul.f32 %v3664, %v3670
      %v3687 = vmul.f32 %v3666, %v3670
      %v3688 = vld [vmem:[%s9] sm:$0x1]
      %v3690 = vperm.slane %v3688, 0
      %v3692 = vadd.f32 %v3672, %v3690
      %v3693 = vadd.f32 %v3673, %v3690
      %v3694 = vadd.f32 %v3674, %v3690
      %v3695 = vadd.f32 %v3675, %v3690
      %v3696 = vadd.f32 %v3676, %v3690
      %v3697 = vadd.f32 %v3677, %v3690
      %v3698 = vadd.f32 %v3678, %v3690
      %v3699 = vadd.f32 %v3679, %v3690
      %v3700 = vadd.f32 %v3680, %v3690
      %v3701 = vadd.f32 %v3681, %v3690
      %v3702 = vadd.f32 %v3682, %v3690
      %v3703 = vadd.f32 %v3683, %v3690
      %v3704 = vadd.f32 %v3684, %v3690
      %v3705 = vadd.f32 %v3685, %v3690
      %v3706 = vadd.f32 %v3686, %v3690
      %v3707 = vadd.f32 %v3687, %v3690
      %v3708 = vadd.f32 %v539, %v3692
      %v3709 = vadd.f32 %v540, %v3693
      %v3710 = vadd.f32 %v541, %v3694
      %v3711 = vadd.f32 %v542, %v3695
      %v3712 = vadd.f32 %v543, %v3696
      %v3713 = vadd.f32 %v544, %v3697
      %v3714 = vadd.f32 %v545, %v3698
      %v3715 = vadd.f32 %v546, %v3699
      %v3716 = vadd.f32 %v547, %v3700
      %v3717 = vadd.f32 %v548, %v3701
      %v3718 = vadd.f32 %v549, %v3702
      %v3719 = vadd.f32 %v550, %v3703
      %v3720 = vadd.f32 %v551, %v3704
      %v3721 = vadd.f32 %v552, %v3705
      %v3722 = vadd.f32 %v553, %v3706
      %v3723 = vadd.f32 %v554, %v3707
      %vm3724 = vcmp.ge.f32.partialorder %v3708, 1.0
      %vm3725 = vcmp.ge.f32.partialorder %v3709, 1.0
      %vm3726 = vcmp.ge.f32.partialorder %v3710, 1.0
      %vm3727 = vcmp.ge.f32.partialorder %v3711, 1.0
      %vm3728 = vcmp.ge.f32.partialorder %v3712, 1.0
      %vm3729 = vcmp.ge.f32.partialorder %v3713, 1.0
      %vm3730 = vcmp.ge.f32.partialorder %v3714, 1.0
      %vm3731 = vcmp.ge.f32.partialorder %v3715, 1.0
      %vm3732 = vcmp.ge.f32.partialorder %v3716, 1.0
      %vm3733 = vcmp.ge.f32.partialorder %v3717, 1.0
      %vm3734 = vcmp.ge.f32.partialorder %v3718, 1.0
      %vm3735 = vcmp.ge.f32.partialorder %v3719, 1.0
      %vm3736 = vcmp.ge.f32.partialorder %v3720, 1.0
      %vm3737 = vcmp.ge.f32.partialorder %v3721, 1.0
      %vm3738 = vcmp.ge.f32.partialorder %v3722, 1.0
      %vm3739 = vcmp.ge.f32.partialorder %v3723, 1.0
      %v3740 = vsel %vm3724, 1, 0
      %v3741 = vsel %vm3725, 1, 0
      %v3742 = vsel %vm3726, 1, 0
      %v3743 = vsel %vm3727, 1, 0
      %v3744 = vsel %vm3728, 1, 0
      %v3745 = vsel %vm3729, 1, 0
      %v3746 = vsel %vm3730, 1, 0
      %v3747 = vsel %vm3731, 1, 0
      %v3748 = vsel %vm3732, 1, 0
      %v3749 = vsel %vm3733, 1, 0
      %v3750 = vsel %vm3734, 1, 0
      %v3751 = vsel %vm3735, 1, 0
      %v3752 = vsel %vm3736, 1, 0
      %v3753 = vsel %vm3737, 1, 0
      %v3754 = vsel %vm3738, 1, 0
      %v3755 = vsel %vm3739, 1, 0
      %v3756 = vcvt.s32.f32 %v3740
      %v3757 = vcvt.s32.f32 %v3741
      %v3758 = vcvt.s32.f32 %v3742
      %v3759 = vcvt.s32.f32 %v3743
      %v3760 = vcvt.s32.f32 %v3744
      %v3761 = vcvt.s32.f32 %v3745
      %v3762 = vcvt.s32.f32 %v3746
      %v3763 = vcvt.s32.f32 %v3747
      %v3764 = vcvt.s32.f32 %v3748
      %v3765 = vcvt.s32.f32 %v3749
      %v3766 = vcvt.s32.f32 %v3750
      %v3767 = vcvt.s32.f32 %v3751
      %v3768 = vcvt.s32.f32 %v3752
      %v3769 = vcvt.s32.f32 %v3753
      %v3770 = vcvt.s32.f32 %v3754
      %v3771 = vcvt.s32.f32 %v3755
      %v3772 = vpack.c.bf16 %v3756, %v3756
      %v3773 = vpack.c.bf16 %v3757, %v3757
      %v3774 = vpack.c.bf16 %v3758, %v3758
      %v3775 = vpack.c.bf16 %v3759, %v3759
      %v3776 = vpack.c.bf16 %v3760, %v3760
      %v3777 = vpack.c.bf16 %v3761, %v3761
      %v3778 = vpack.c.bf16 %v3762, %v3762
      %v3779 = vpack.c.bf16 %v3763, %v3763
      %v3780 = vpack.c.bf16 %v3764, %v3764
      %v3781 = vpack.c.bf16 %v3765, %v3765
      %v3782 = vpack.c.bf16 %v3766, %v3766
      %v3783 = vpack.c.bf16 %v3767, %v3767
      %v3784 = vpack.c.bf16 %v3768, %v3768
      %v3785 = vpack.c.bf16 %v3769, %v3769
      %v3786 = vpack.c.bf16 %v3770, %v3770
      %v3787 = vpack.c.bf16 %v3771, %v3771
      %3788 = vst.msk [vmem:[%s522] sm:$0xff] %vm571, %v3629
      %3789 = vst.msk [vmem:[%s522 + $0x8] sm:$0xff] %vm571, %v3631
      %3790 = vst.msk [vmem:[%s522 + $0x10] sm:$0xff] %vm571, %v3634
      %3791 = vst.msk [vmem:[%s522 + $0x18] sm:$0xff] %vm571, %v3636
      %3792 = vst.msk [vmem:[%s522 + $0x20] sm:$0xff] %vm571, %v3639
      %3793 = vst.msk [vmem:[%s522 + $0x28] sm:$0xff] %vm571, %v3641
      %3794 = vst.msk [vmem:[%s522 + $0x30] sm:$0xff] %vm571, %v3644
      %3795 = vst.msk [vmem:[%s522 + $0x38] sm:$0xff] %vm571, %v3646
      %3796 = vst.msk [vmem:[%s522 + $0x40] sm:$0xff] %vm571, %v3649
      %3797 = vst.msk [vmem:[%s522 + $0x48] sm:$0xff] %vm571, %v3651
      %3798 = vst.msk [vmem:[%s522 + $0x50] sm:$0xff] %vm571, %v3654
      %3799 = vst.msk [vmem:[%s522 + $0x58] sm:$0xff] %vm571, %v3656
      %3800 = vst.msk [vmem:[%s522 + $0x60] sm:$0xff] %vm571, %v3659
      %3801 = vst.msk [vmem:[%s522 + $0x68] sm:$0xff] %vm571, %v3661
      %3802 = vst.msk [vmem:[%s522 + $0x70] sm:$0xff] %vm571, %v3664
      %3803 = vst.msk [vmem:[%s522 + $0x78] sm:$0xff] %vm571, %v3666
      %3820 = vrot.lane.b32.xlu0 %v3692, 16
      %v3821 = vpop.permute.xlu0 %3820
      %3822 = vrot.lane.b32.xlu0 %v3693, 16
      %v3823 = vpop.permute.xlu0 %3822
      %3824 = vrot.lane.b32.xlu0 %v3694, 16
      %v3825 = vpop.permute.xlu0 %3824
      %3826 = vrot.lane.b32.xlu0 %v3695, 16
      %v3827 = vpop.permute.xlu0 %3826
      %3828 = vrot.lane.b32.xlu0 %v3696, 16
      %v3829 = vpop.permute.xlu0 %3828
      %3830 = vrot.lane.b32.xlu0 %v3697, 16
      %v3831 = vpop.permute.xlu0 %3830
      %3832 = vrot.lane.b32.xlu0 %v3698, 16
      %v3833 = vpop.permute.xlu0 %3832
      %3834 = vrot.lane.b32.xlu0 %v3699, 16
      %v3835 = vpop.permute.xlu0 %3834
      %3836 = vrot.lane.b32.xlu0 %v3700, 16
      %v3837 = vpop.permute.xlu0 %3836
      %3838 = vrot.lane.b32.xlu0 %v3701, 16
      %v3839 = vpop.permute.xlu0 %3838
      %3840 = vrot.lane.b32.xlu0 %v3702, 16
      %v3841 = vpop.permute.xlu0 %3840
      %3842 = vrot.lane.b32.xlu0 %v3703, 16
      %v3843 = vpop.permute.xlu0 %3842
      %3844 = vrot.lane.b32.xlu0 %v3704, 16
      %v3845 = vpop.permute.xlu0 %3844
      %3846 = vrot.lane.b32.xlu0 %v3705, 16
      %v3847 = vpop.permute.xlu0 %3846
      %3848 = vrot.lane.b32.xlu0 %v3706, 16
      %v3849 = vpop.permute.xlu0 %3848
      %3850 = vrot.lane.b32.xlu0 %v3707, 16
      %v3851 = vpop.permute.xlu0 %3850
      %vm3868 = vcmask 261248
      %3869 = vst.msk [vmem:[%s522] sm:$0xff] %vm3868, %v3821
      %3870 = vst.msk [vmem:[%s522 + $0x8] sm:$0xff] %vm3868, %v3823
      %3871 = vst.msk [vmem:[%s522 + $0x10] sm:$0xff] %vm3868, %v3825
      %3872 = vst.msk [vmem:[%s522 + $0x18] sm:$0xff] %vm3868, %v3827
      %3873 = vst.msk [vmem:[%s522 + $0x20] sm:$0xff] %vm3868, %v3829
      %3874 = vst.msk [vmem:[%s522 + $0x28] sm:$0xff] %vm3868, %v3831
      %3875 = vst.msk [vmem:[%s522 + $0x30] sm:$0xff] %vm3868, %v3833
      %3876 = vst.msk [vmem:[%s522 + $0x38] sm:$0xff] %vm3868, %v3835
      %3877 = vst.msk [vmem:[%s522 + $0x40] sm:$0xff] %vm3868, %v3837
      %3878 = vst.msk [vmem:[%s522 + $0x48] sm:$0xff] %vm3868, %v3839
      %3879 = vst.msk [vmem:[%s522 + $0x50] sm:$0xff] %vm3868, %v3841
      %3880 = vst.msk [vmem:[%s522 + $0x58] sm:$0xff] %vm3868, %v3843
      %3881 = vst.msk [vmem:[%s522 + $0x60] sm:$0xff] %vm3868, %v3845
      %3882 = vst.msk [vmem:[%s522 + $0x68] sm:$0xff] %vm3868, %v3847
      %3883 = vst.msk [vmem:[%s522 + $0x70] sm:$0xff] %vm3868, %v3849
      %3884 = vst.msk [vmem:[%s522 + $0x78] sm:$0xff] %vm3868, %v3851
      %3901 = vrot.lane.b32.xlu0 %v3708, 32
      %v3902 = vpop.permute.xlu0 %3901
      %3903 = vrot.lane.b32.xlu0 %v3709, 32
      %v3904 = vpop.permute.xlu0 %3903
      %3905 = vrot.lane.b32.xlu0 %v3710, 32
      %v3906 = vpop.permute.xlu0 %3905
      %3907 = vrot.lane.b32.xlu0 %v3711, 32
      %v3908 = vpop.permute.xlu0 %3907
      %3909 = vrot.lane.b32.xlu0 %v3712, 32
      %v3910 = vpop.permute.xlu0 %3909
      %3911 = vrot.lane.b32.xlu0 %v3713, 32
      %v3912 = vpop.permute.xlu0 %3911
      %3913 = vrot.lane.b32.xlu0 %v3714, 32
      %v3914 = vpop.permute.xlu0 %3913
      %3915 = vrot.lane.b32.xlu0 %v3715, 32
      %v3916 = vpop.permute.xlu0 %3915
      %3917 = vrot.lane.b32.xlu0 %v3716, 32
      %v3918 = vpop.permute.xlu0 %3917
      %3919 = vrot.lane.b32.xlu0 %v3717, 32
      %v3920 = vpop.permute.xlu0 %3919
      %3921 = vrot.lane.b32.xlu0 %v3718, 32
      %v3922 = vpop.permute.xlu0 %3921
      %3923 = vrot.lane.b32.xlu0 %v3719, 32
      %v3924 = vpop.permute.xlu0 %3923
      %3925 = vrot.lane.b32.xlu0 %v3720, 32
      %v3926 = vpop.permute.xlu0 %3925
      %3927 = vrot.lane.b32.xlu0 %v3721, 32
      %v3928 = vpop.permute.xlu0 %3927
      %3929 = vrot.lane.b32.xlu0 %v3722, 32
      %v3930 = vpop.permute.xlu0 %3929
      %3931 = vrot.lane.b32.xlu0 %v3723, 32
      %v3932 = vpop.permute.xlu0 %3931
      %vm3949 = vcmask 392448
      %3950 = vst.msk [vmem:[%s522] sm:$0xff] %vm3949, %v3902
      %3951 = vst.msk [vmem:[%s522 + $0x8] sm:$0xff] %vm3949, %v3904
      %3952 = vst.msk [vmem:[%s522 + $0x10] sm:$0xff] %vm3949, %v3906
      %3953 = vst.msk [vmem:[%s522 + $0x18] sm:$0xff] %vm3949, %v3908
      %3954 = vst.msk [vmem:[%s522 + $0x20] sm:$0xff] %vm3949, %v3910
      %3955 = vst.msk [vmem:[%s522 + $0x28] sm:$0xff] %vm3949, %v3912
      %3956 = vst.msk [vmem:[%s522 + $0x30] sm:$0xff] %vm3949, %v3914
      %3957 = vst.msk [vmem:[%s522 + $0x38] sm:$0xff] %vm3949, %v3916
      %3958 = vst.msk [vmem:[%s522 + $0x40] sm:$0xff] %vm3949, %v3918
      %3959 = vst.msk [vmem:[%s522 + $0x48] sm:$0xff] %vm3949, %v3920
      %3960 = vst.msk [vmem:[%s522 + $0x50] sm:$0xff] %vm3949, %v3922
      %3961 = vst.msk [vmem:[%s522 + $0x58] sm:$0xff] %vm3949, %v3924
      %3962 = vst.msk [vmem:[%s522 + $0x60] sm:$0xff] %vm3949, %v3926
      %3963 = vst.msk [vmem:[%s522 + $0x68] sm:$0xff] %vm3949, %v3928
      %3964 = vst.msk [vmem:[%s522 + $0x70] sm:$0xff] %vm3949, %v3930
      %3965 = vst.msk [vmem:[%s522 + $0x78] sm:$0xff] %vm3949, %v3932
      %vm3966 = vcmask 125952
      %3967 = vst.msk [vmem:[%s532] sm:$0xf] %vm3966, %v3772
      %3968 = vst.msk [vmem:[%s532 + $0x4] sm:$0xf] %vm3966, %v3773
      %3969 = vst.msk [vmem:[%s532 + $0x8] sm:$0xf] %vm3966, %v3774
      %3970 = vst.msk [vmem:[%s532 + $0xc] sm:$0xf] %vm3966, %v3775
      %3971 = vst.msk [vmem:[%s532 + $0x10] sm:$0xf] %vm3966, %v3776
      %3972 = vst.msk [vmem:[%s532 + $0x14] sm:$0xf] %vm3966, %v3777
      %3973 = vst.msk [vmem:[%s532 + $0x18] sm:$0xf] %vm3966, %v3778
      %3974 = vst.msk [vmem:[%s532 + $0x1c] sm:$0xf] %vm3966, %v3779
      %3975 = vst.msk [vmem:[%s532 + $0x20] sm:$0xf] %vm3966, %v3780
      %3976 = vst.msk [vmem:[%s532 + $0x24] sm:$0xf] %vm3966, %v3781
      %3977 = vst.msk [vmem:[%s532 + $0x28] sm:$0xf] %vm3966, %v3782
      %3978 = vst.msk [vmem:[%s532 + $0x2c] sm:$0xf] %vm3966, %v3783
      %3979 = vst.msk [vmem:[%s532 + $0x30] sm:$0xf] %vm3966, %v3784
      %3980 = vst.msk [vmem:[%s532 + $0x34] sm:$0xf] %vm3966, %v3785
      %3981 = vst.msk [vmem:[%s532 + $0x38] sm:$0xf] %vm3966, %v3786
      %3982 = vst.msk [vmem:[%s532 + $0x3c] sm:$0xf] %vm3966, %v3787
      %s3983 = smul.u32 16, %s30
      %p3984 = scmp.lt.s32.totalorder %s29, 1
      %s3985 = scalar_select %p3984, %s29, 1
      %p3986 = scmp.lt.s32.totalorder %s3983, 31
      %s3987 = scalar_select %p3986, %s3983, 31
      %s3988 = smul.addr %s3985, 32
      %s3989 = sadd.s32 %s3987, %s3988
      %s3990 = smul.addr %s3989, 8
      %s3991 = scalar_lea.vmem %s10, %s3990
      %s3992 = smul.u32 16, %s30
      %p3993 = scmp.lt.s32.totalorder %s29, 1
      %s3994 = scalar_select %p3993, %s29, 1
      %p3995 = scmp.lt.s32.totalorder %s3992, 31
      %s3996 = scalar_select %p3995, %s3992, 31
      %s3997 = smul.addr %s3994, 32
      %s3998 = sadd.s32 %s3996, %s3997
      %s3999 = smul.addr %s3998, 4
      %s4000 = scalar_lea.vmem %s11, %s3999
      %s4001 = smul.u32 16, %s30
      %p4002 = scmp.lt.s32.totalorder %s29, 1
      %s4003 = scalar_select %p4002, %s29, 1
      %p4004 = scmp.lt.s32.totalorder %s4001, 31
      %s4005 = scalar_select %p4004, %s4001, 31
      %s4006 = smul.addr %s4003, 32
      %s4007 = sadd.s32 %s4005, %s4006
      %s4008 = smul.addr %s4007, 8
      %s4009 = scalar_lea.vmem %s12, %s4008
      %s4010 = smul.u32 16, %s30
      %p4011 = scmp.lt.s32.totalorder %s29, 1
      %s4012 = scalar_select %p4011, %s29, 1
      %p4013 = scmp.lt.s32.totalorder %s4010, 31
      %s4014 = scalar_select %p4013, %s4010, 31
      %s4015 = smul.addr %s4012, 32
      %s4016 = sadd.s32 %s4014, %s4015
      %s4017 = smul.addr %s4016, 4
      %s4018 = scalar_lea.vmem %s13, %s4017
      // Predicated region
      $region61: #{tpu_custom_call.1} parent=59 // pred_check
        %p4019 = pneg %p272
      $region62: #{tpu_custom_call.1} parent=59 // pred_check_branch
        %4021 = sbr.rel (%p4019) target = $region64
      $region63: #{tpu_custom_call.1} parent=59 // pred_region
        %s4022 = smul.u32 16, %s30
      $region64: #{tpu_custom_call.1} parent=59 // pred_fallthru
        _
      // Predicated region
      $region65: #{tpu_custom_call.1} parent=59 // pred_check
        %p4023 = pneg %p300
      $region66: #{tpu_custom_call.1} parent=59 // pred_check_branch
        %4025 = sbr.rel (%p4023) target = $region68
      $region67: #{tpu_custom_call.1} parent=59 // pred_region
        %s4026 = smul.u32 16, %s30
      $region68: #{tpu_custom_call.1} parent=59 // pred_fallthru
        _
      // Predicated region
      $region69: #{tpu_custom_call.1} parent=59 // pred_check
        %p4027 = pneg %p328
      $region70: #{tpu_custom_call.1} parent=59 // pred_check_branch
        %4029 = sbr.rel (%p4027) target = $region72
      $region71: #{tpu_custom_call.1} parent=59 // pred_region
        %s4030 = smul.u32 16, %s30
      $region72: #{tpu_custom_call.1} parent=59 // pred_fallthru
        _
      // Predicated region
      $region73: #{tpu_custom_call.1} parent=59 // pred_check
        %p4031 = pneg %p356
      $region74: #{tpu_custom_call.1} parent=59 // pred_check_branch
        %4033 = sbr.rel (%p4031) target = $region76
      $region75: #{tpu_custom_call.1} parent=59 // pred_region
        %s4034 = smul.u32 16, %s30
      $region76: #{tpu_custom_call.1} parent=59 // pred_fallthru
        _
    $region60: #{tpu_custom_call.1} parent=5 // pred_fallthru
      _
    %p4035 = scmp.le.s32.totalorder 2, %s20
    // Predicated region
    $region77: #{tpu_custom_call.1} parent=5 // pred_check
      %p4036 = pneg %p4035
    $region78: #{tpu_custom_call.1} parent=5 // pred_check_branch
      %4038 = sbr.rel (%p4036) target = $region80
    $region79: #{tpu_custom_call.1} parent=5 // pred_region
      %s4039 = ssub.s32 %s20, 2
      // Predicated region
      $region81: #{tpu_custom_call.1} parent=79 // pred_check
        %p4040 = pneg %p278
      $region82: #{tpu_custom_call.1} parent=79 // pred_check_branch
        %4042 = sbr.rel (%p4040) target = $region84
      $region83: #{tpu_custom_call.1} parent=79 // pred_region
        %s4043 = smul.u32 16, %s32
        %p4044 = scmp.lt.s32.totalorder %s31, 1
        %s4045 = scalar_select %p4044, %s31, 1
        %p4046 = scmp.lt.s32.totalorder %s4043, 31
        %s4047 = scalar_select %p4046, %s4043, 31
        %s4048 = smul.addr %s4045, 32
        %s4049 = sadd.s32 %s4047, %s4048
        %s4050 = smul.addr %s4049, 8
        %s4051 = scalar_lea.vmem %s10, %s4050
      $region84: #{tpu_custom_call.1} parent=79 // pred_fallthru
        _
      // Predicated region
      $region85: #{tpu_custom_call.1} parent=79 // pred_check
        %p4052 = pneg %p306
      $region86: #{tpu_custom_call.1} parent=79 // pred_check_branch
        %4054 = sbr.rel (%p4052) target = $region88
      $region87: #{tpu_custom_call.1} parent=79 // pred_region
        %s4055 = smul.u32 16, %s32
        %p4056 = scmp.lt.s32.totalorder %s31, 1
        %s4057 = scalar_select %p4056, %s31, 1
        %p4058 = scmp.lt.s32.totalorder %s4055, 31
        %s4059 = scalar_select %p4058, %s4055, 31
        %s4060 = smul.addr %s4057, 32
        %s4061 = sadd.s32 %s4059, %s4060
        %s4062 = smul.addr %s4061, 4
        %s4063 = scalar_lea.vmem %s11, %s4062
      $region88: #{tpu_custom_call.1} parent=79 // pred_fallthru
        _
      // Predicated region
      $region89: #{tpu_custom_call.1} parent=79 // pred_check
        %p4064 = pneg %p334
      $region90: #{tpu_custom_call.1} parent=79 // pred_check_branch
        %4066 = sbr.rel (%p4064) target = $region92
      $region91: #{tpu_custom_call.1} parent=79 // pred_region
        %s4067 = smul.u32 16, %s32
        %p4068 = scmp.lt.s32.totalorder %s31, 1
        %s4069 = scalar_select %p4068, %s31, 1
        %p4070 = scmp.lt.s32.totalorder %s4067, 31
        %s4071 = scalar_select %p4070, %s4067, 31
        %s4072 = smul.addr %s4069, 32
        %s4073 = sadd.s32 %s4071, %s4072
        %s4074 = smul.addr %s4073, 8
        %s4075 = scalar_lea.vmem %s12, %s4074
      $region92: #{tpu_custom_call.1} parent=79 // pred_fallthru
        _
      // Predicated region
      $region93: #{tpu_custom_call.1} parent=79 // pred_check
        %p4076 = pneg %p362
      $region94: #{tpu_custom_call.1} parent=79 // pred_check_branch
        %4078 = sbr.rel (%p4076) target = $region96
      $region95: #{tpu_custom_call.1} parent=79 // pred_region
        %s4079 = smul.u32 16, %s32
        %p4080 = scmp.lt.s32.totalorder %s31, 1
        %s4081 = scalar_select %p4080, %s31, 1
        %p4082 = scmp.lt.s32.totalorder %s4079, 31
        %s4083 = scalar_select %p4082, %s4079, 31
        %s4084 = smul.addr %s4081, 32
        %s4085 = sadd.s32 %s4083, %s4084
        %s4086 = smul.addr %s4085, 4
        %s4087 = scalar_lea.vmem %s13, %s4086
      $region96: #{tpu_custom_call.1} parent=79 // pred_fallthru
        _
    $region80: #{tpu_custom_call.1} parent=5 // pred_fallthru
      _
  $region6: #{tpu_custom_call.1} parent=0 // loop_footer
    %s24 = sadd.s32 1, %s20
  $region7: #{tpu_custom_call.1} parent=0 // loop_footer_branch
    %19 = sbr.rel target = $region3
  $region8: #{tpu_custom_call.1} parent=0 // loop_exit
    _

</llo_original>
